<compile_context>
chip_gen: v5e
topology: v5e:2x2
jax: 0.10.0
libtpu: 0.0.40
codegen_flags: <defaults>
</compile_context>

<pallas_src>
import jax
import jax.numpy as jnp
from jax.experimental import pallas as pl
from jax.experimental.pallas import tpu as pltpu

LANES = 128  # lane width: pad Cout / num_classes up to this for dense stores


# ----------------------------- Pallas kernel --------------------------------

def fused_backbone_kernel(x_ref, wconv_ref, bconv_ref, wfc_ref, bfc_ref,
                          scores_ref, pooled_ref):
    """Fused conv3x3 + ReLU -> global-avg-pool -> linear classifier.

    One grid step = one batch element.

    x_ref:      [1, H+2, W+2, Cin]   bf16 spatially pre-padded NHWC input
    wconv_ref:  [3, 3, Cin, LANES]   bf16 conv weight (Cout zero-padded)
    bconv_ref:  [1, LANES]           f32  conv bias (zero-padded)
    wfc_ref:    [LANES, LANES]       bf16 fc weight (zero-padded both dims)
    bfc_ref:    [1, LANES]           f32  fc bias (zero-padded)
    scores_ref: [1, 1, LANES]        f32  first num_classes lanes valid
    pooled_ref: [1, 1, LANES]        f32  first Cmid lanes valid
    """
    _, Hp, Wp, Cin = x_ref.shape
    H, W = Hp - 2, Wp - 2
    HW = H * W

    # ---- conv3x3 as 9 accumulated MXU matmuls on shifted windows ------------
    # (bf16 operands, f32 accumulation; no im2col scratch, no masked stores)
    feat = jnp.zeros((HW, LANES), jnp.float32)
    for kh in range(3):
        for kw in range(3):
            lhs = x_ref[0, kh:kh + H, kw:kw + W, :].reshape(HW, Cin)
            feat = feat + jnp.dot(lhs, wconv_ref[kh, kw],
                                  preferred_element_type=jnp.float32)
    feat = jnp.maximum(feat + bconv_ref[...], 0.0)            # bias + ReLU

    # ---- global average pool: cross-sublane reduce (XLU slot is idle here) --
    pooled = feat.sum(axis=0, keepdims=True) * (1.0 / HW)     # [1, LANES] f32
    pooled_ref[0] = pooled

    # ---- classifier (bf16 operands, f32 accumulate) --------------------------
    scores = jnp.dot(pooled.astype(jnp.bfloat16), wfc_ref[...],
                     preferred_element_type=jnp.float32) + bfc_ref[...]
    scores_ref[0] = scores


# ------------------------------ JAX wrappers ---------------------------------

def _backbone_forward_impl(x_nchw, params):
    """Synthetic backbone: returns (scores, embedding, features)."""
    B, Cin, H, W = x_nchw.shape
    Cmid = params["conv_w"].shape[-1]
    num_classes = params["fc_w"].shape[-1]

    # NCHW -> NHWC, pre-pad the 1-pixel halo, cast once to bf16 (fused by XLA).
    x_nhwc = jnp.transpose(x_nchw, (0, 2, 3, 1))
    x_pad = jnp.pad(x_nhwc, ((0, 0), (1, 1), (1, 1), (0, 0))).astype(jnp.bfloat16)

    # Weight prep (tiny, fused under jit): channel / class dims zero-padded to
    # 128 lanes, matmul operands pre-cast to bf16 (f32 accumulation in-kernel).
    wconv = jnp.pad(params["conv_w"],
                    ((0, 0), (0, 0), (0, 0), (0, LANES - Cmid))
                    ).astype(jnp.bfloat16)                      # [3,3,Cin,128]
    bconv = jnp.pad(params["conv_b"], ((0, 0), (0, LANES - Cmid)))
    wfc = jnp.pad(params["fc_w"],
                  ((0, LANES - Cmid), (0, LANES - num_classes))
                  ).astype(jnp.bfloat16)                        # [128,128]
    bfc = jnp.pad(params["fc_b"], ((0, 0), (0, LANES - num_classes)))

    scores128, pooled128 = pl.pallas_call(
        fused_backbone_kernel,
        out_shape=(
            jax.ShapeDtypeStruct((B, 1, LANES), jnp.float32),
            jax.ShapeDtypeStruct((B, 1, LANES), jnp.float32),
        ),
        grid_spec=pltpu.PrefetchScalarGridSpec(
            num_scalar_prefetch=0,
            grid=(B,),
            in_specs=[
                pl.BlockSpec((1, H + 2, W + 2, Cin), lambda b: (b, 0, 0, 0)),
                pl.BlockSpec((3, 3, Cin, LANES), lambda b: (0, 0, 0, 0)),
                pl.BlockSpec((1, LANES), lambda b: (0, 0)),
                pl.BlockSpec((LANES, LANES), lambda b: (0, 0)),
                pl.BlockSpec((1, LANES), lambda b: (0, 0)),
            ],
            out_specs=(
                pl.BlockSpec((1, 1, LANES), lambda b: (b, 0, 0)),
                pl.BlockSpec((1, 1, LANES), lambda b: (b, 0, 0)),
            ),
        ),
        compiler_params=pltpu.CompilerParams(
            dimension_semantics=("parallel",)),   # megacore-shard the batch
    )(x_pad, wconv, bconv, wfc, bfc)

    scores = scores128[:, 0, :num_classes]
    pooled = pooled128[:, 0, :Cmid]
    # (scores, embedding, features) — middle element unused by ModelWrapper
    return scores, pooled, pooled


backbone_forward = jax.jit(_backbone_forward_impl)


def model_wrapper_forward(x_nchw, params, method):
    """Exact semantics of ModelWrapper.forward."""
    scores, _, features = backbone_forward(x_nchw, params)
    if method == "lloss":
        return scores, features
    else:
        return scores


# ---------------------------------- main -------------------------------------

if __name__ == "__main__":
    B, Cin, H, W = 2, 4, 16, 16
    Cmid, num_classes = 8, 10

    key = jax.random.PRNGKey(0)
    kx, kw1, kb1, kw2, kb2 = jax.random.split(key, 5)

    x = jax.random.normal(kx, (B, Cin, H, W), dtype=jnp.float32)   # NCHW input
    params = {
        "conv_w": 0.1 * jax.random.normal(kw1, (3, 3, Cin, Cmid), jnp.float32),
        "conv_b": 0.1 * jax.random.normal(kb1, (1, Cmid), jnp.float32),
        "fc_w": 0.1 * jax.random.normal(kw2, (Cmid, num_classes), jnp.float32),
        "fc_b": 0.1 * jax.random.normal(kb2, (1, num_classes), jnp.float32),
    }

    scores, features = model_wrapper_forward(x, params, method="lloss")
    jax.block_until_ready((scores, features))

    assert scores.shape == (B, num_classes)
    assert features.shape == (B, Cmid)

    # correctness check against plain-JAX reference (matmuls use bf16 operands
    # with f32 accumulation, hence the relaxed tolerance)
    x_nhwc = jnp.transpose(x, (0, 2, 3, 1))
    ref_feat = jax.lax.conv_general_dilated(
        x_nhwc, params["conv_w"], (1, 1), "SAME",
        dimension_numbers=("NHWC", "HWIO", "NHWC"))
    ref_feat = jnp.maximum(ref_feat + params["conv_b"][0], 0.0)
    ref_pool = ref_feat.mean(axis=(1, 2))
    ref_scores = ref_pool @ params["fc_w"] + params["fc_b"][0]
    assert jnp.allclose(scores, ref_scores, atol=1e-2), \
        float(jnp.max(jnp.abs(scores - ref_scores)))
    assert jnp.allclose(features, ref_pool, atol=1e-2), \
        float(jnp.max(jnp.abs(features - ref_pool)))

    print("KERNEL_OK")
</pallas_src>

<mosaic_0001>
module attributes {stable_mosaic.version = 11 : i64} {
  func.func @fused_backbone_kernel(%arg0: i32, %arg1: memref<1x18x18x4xbf16, #tpu.memory_space<vmem>>, %arg2: memref<3x3x4x128xbf16, #tpu.memory_space<vmem>>, %arg3: memref<1x128xf32, #tpu.memory_space<vmem>>, %arg4: memref<128x128xbf16, #tpu.memory_space<vmem>>, %arg5: memref<1x128xf32, #tpu.memory_space<vmem>>, %arg6: memref<1x1x128xf32, #tpu.memory_space<vmem>>, %arg7: memref<1x1x128xf32, #tpu.memory_space<vmem>>) attributes {dimension_semantics = [#tpu.dimension_semantics<parallel>], iteration_bounds = array<i64: 2>, scalar_prefetch = 0 : i64, scratch_operands = 0 : i64, tpu.core_type = #tpu.core_type<tc>, window_params = [{transform_indices = @transform_0, window_bounds = array<i64: 1, 18, 18, 4>}, {pipeline_mode = #tpu.pipeline_mode<synchronous>, transform_indices = @transform_1, window_bounds = array<i64: 3, 3, 4, 128>}, {pipeline_mode = #tpu.pipeline_mode<synchronous>, transform_indices = @transform_2, window_bounds = array<i64: 1, 128>}, {pipeline_mode = #tpu.pipeline_mode<synchronous>, transform_indices = @transform_3, window_bounds = array<i64: 128, 128>}, {pipeline_mode = #tpu.pipeline_mode<synchronous>, transform_indices = @transform_4, window_bounds = array<i64: 1, 128>}, {transform_indices = @transform_5, window_bounds = array<i64: 1, 1, 128>}, {transform_indices = @transform_6, window_bounds = array<i64: 1, 1, 128>}]} {
    %cst = arith.constant 0.000000e+00 : f32
    %0 = vector.broadcast %cst : f32 to vector<256x128xf32>
    %c0 = arith.constant 0 : index
    %c0_0 = arith.constant 0 : index
    %c0_1 = arith.constant 0 : index
    %c0_2 = arith.constant 0 : index
    %1 = vector.load %arg1[%c0, %c0_0, %c0_1, %c0_2] : memref<1x18x18x4xbf16, #tpu.memory_space<vmem>>, vector<1x16x16x4xbf16>
    %2 = vector.shape_cast %1 : vector<1x16x16x4xbf16> to vector<16x16x4xbf16>
    %3 = vector.shape_cast %2 : vector<16x16x4xbf16> to vector<256x4xbf16>
    %c0_3 = arith.constant 0 : index
    %c0_4 = arith.constant 0 : index
    %c0_5 = arith.constant 0 : index
    %c0_6 = arith.constant 0 : index
    %4 = vector.load %arg2[%c0_3, %c0_4, %c0_5, %c0_6] : memref<3x3x4x128xbf16, #tpu.memory_space<vmem>>, vector<1x1x4x128xbf16>
    %5 = vector.shape_cast %4 : vector<1x1x4x128xbf16> to vector<4x128xbf16>
    %cst_7 = arith.constant dense<0.000000e+00> : vector<256x128xf32>
    %6 = tpu.matmul %3, %5, %cst_7 {dimension_numbers = #tpu.dot_dimension_numbers<[1], [0], [0], [1], [0, 0, 1, 1], [], []>} : vector<256x4xbf16>, vector<4x128xbf16>, vector<256x128xf32> -> vector<256x128xf32>
    %7 = arith.addf %0, %6 : vector<256x128xf32>
    %c0_8 = arith.constant 0 : index
    %c0_9 = arith.constant 0 : index
    %c1 = arith.constant 1 : index
    %c0_10 = arith.constant 0 : index
    %8 = vector.load %arg1[%c0_8, %c0_9, %c1, %c0_10] : memref<1x18x18x4xbf16, #tpu.memory_space<vmem>>, vector<1x16x16x4xbf16>
    %9 = vector.shape_cast %8 : vector<1x16x16x4xbf16> to vector<16x16x4xbf16>
    %10 = vector.shape_cast %9 : vector<16x16x4xbf16> to vector<256x4xbf16>
    %c0_11 = arith.constant 0 : index
    %c1_12 = arith.constant 1 : index
    %c0_13 = arith.constant 0 : index
    %c0_14 = arith.constant 0 : index
    %11 = vector.load %arg2[%c0_11, %c1_12, %c0_13, %c0_14] : memref<3x3x4x128xbf16, #tpu.memory_space<vmem>>, vector<1x1x4x128xbf16>
    %12 = vector.shape_cast %11 : vector<1x1x4x128xbf16> to vector<4x128xbf16>
    %cst_15 = arith.constant dense<0.000000e+00> : vector<256x128xf32>
    %13 = tpu.matmul %10, %12, %cst_15 {dimension_numbers = #tpu.dot_dimension_numbers<[1], [0], [0], [1], [0, 0, 1, 1], [], []>} : vector<256x4xbf16>, vector<4x128xbf16>, vector<256x128xf32> -> vector<256x128xf32>
    %14 = arith.addf %7, %13 : vector<256x128xf32>
    %c0_16 = arith.constant 0 : index
    %c0_17 = arith.constant 0 : index
    %c2 = arith.constant 2 : index
    %c0_18 = arith.constant 0 : index
    %15 = vector.load %arg1[%c0_16, %c0_17, %c2, %c0_18] : memref<1x18x18x4xbf16, #tpu.memory_space<vmem>>, vector<1x16x16x4xbf16>
    %16 = vector.shape_cast %15 : vector<1x16x16x4xbf16> to vector<16x16x4xbf16>
    %17 = vector.shape_cast %16 : vector<16x16x4xbf16> to vector<256x4xbf16>
    %c0_19 = arith.constant 0 : index
    %c2_20 = arith.constant 2 : index
    %c0_21 = arith.constant 0 : index
    %c0_22 = arith.constant 0 : index
    %18 = vector.load %arg2[%c0_19, %c2_20, %c0_21, %c0_22] : memref<3x3x4x128xbf16, #tpu.memory_space<vmem>>, vector<1x1x4x128xbf16>
    %19 = vector.shape_cast %18 : vector<1x1x4x128xbf16> to vector<4x128xbf16>
    %cst_23 = arith.constant dense<0.000000e+00> : vector<256x128xf32>
    %20 = tpu.matmul %17, %19, %cst_23 {dimension_numbers = #tpu.dot_dimension_numbers<[1], [0], [0], [1], [0, 0, 1, 1], [], []>} : vector<256x4xbf16>, vector<4x128xbf16>, vector<256x128xf32> -> vector<256x128xf32>
    %21 = arith.addf %14, %20 : vector<256x128xf32>
    %c0_24 = arith.constant 0 : index
    %c1_25 = arith.constant 1 : index
    %c0_26 = arith.constant 0 : index
    %c0_27 = arith.constant 0 : index
    %22 = vector.load %arg1[%c0_24, %c1_25, %c0_26, %c0_27] : memref<1x18x18x4xbf16, #tpu.memory_space<vmem>>, vector<1x16x16x4xbf16>
    %23 = vector.shape_cast %22 : vector<1x16x16x4xbf16> to vector<16x16x4xbf16>
    %24 = vector.shape_cast %23 : vector<16x16x4xbf16> to vector<256x4xbf16>
    %c1_28 = arith.constant 1 : index
    %c0_29 = arith.constant 0 : index
    %c0_30 = arith.constant 0 : index
    %c0_31 = arith.constant 0 : index
    %25 = vector.load %arg2[%c1_28, %c0_29, %c0_30, %c0_31] : memref<3x3x4x128xbf16, #tpu.memory_space<vmem>>, vector<1x1x4x128xbf16>
    %26 = vector.shape_cast %25 : vector<1x1x4x128xbf16> to vector<4x128xbf16>
    %cst_32 = arith.constant dense<0.000000e+00> : vector<256x128xf32>
    %27 = tpu.matmul %24, %26, %cst_32 {dimension_numbers = #tpu.dot_dimension_numbers<[1], [0], [0], [1], [0, 0, 1, 1], [], []>} : vector<256x4xbf16>, vector<4x128xbf16>, vector<256x128xf32> -> vector<256x128xf32>
    %28 = arith.addf %21, %27 : vector<256x128xf32>
    %c0_33 = arith.constant 0 : index
    %c1_34 = arith.constant 1 : index
    %c1_35 = arith.constant 1 : index
    %c0_36 = arith.constant 0 : index
    %29 = vector.load %arg1[%c0_33, %c1_34, %c1_35, %c0_36] : memref<1x18x18x4xbf16, #tpu.memory_space<vmem>>, vector<1x16x16x4xbf16>
    %30 = vector.shape_cast %29 : vector<1x16x16x4xbf16> to vector<16x16x4xbf16>
    %31 = vector.shape_cast %30 : vector<16x16x4xbf16> to vector<256x4xbf16>
    %c1_37 = arith.constant 1 : index
    %c1_38 = arith.constant 1 : index
    %c0_39 = arith.constant 0 : index
    %c0_40 = arith.constant 0 : index
    %32 = vector.load %arg2[%c1_37, %c1_38, %c0_39, %c0_40] : memref<3x3x4x128xbf16, #tpu.memory_space<vmem>>, vector<1x1x4x128xbf16>
    %33 = vector.shape_cast %32 : vector<1x1x4x128xbf16> to vector<4x128xbf16>
    %cst_41 = arith.constant dense<0.000000e+00> : vector<256x128xf32>
    %34 = tpu.matmul %31, %33, %cst_41 {dimension_numbers = #tpu.dot_dimension_numbers<[1], [0], [0], [1], [0, 0, 1, 1], [], []>} : vector<256x4xbf16>, vector<4x128xbf16>, vector<256x128xf32> -> vector<256x128xf32>
    %35 = arith.addf %28, %34 : vector<256x128xf32>
    %c0_42 = arith.constant 0 : index
    %c1_43 = arith.constant 1 : index
    %c2_44 = arith.constant 2 : index
    %c0_45 = arith.constant 0 : index
    %36 = vector.load %arg1[%c0_42, %c1_43, %c2_44, %c0_45] : memref<1x18x18x4xbf16, #tpu.memory_space<vmem>>, vector<1x16x16x4xbf16>
    %37 = vector.shape_cast %36 : vector<1x16x16x4xbf16> to vector<16x16x4xbf16>
    %38 = vector.shape_cast %37 : vector<16x16x4xbf16> to vector<256x4xbf16>
    %c1_46 = arith.constant 1 : index
    %c2_47 = arith.constant 2 : index
    %c0_48 = arith.constant 0 : index
    %c0_49 = arith.constant 0 : index
    %39 = vector.load %arg2[%c1_46, %c2_47, %c0_48, %c0_49] : memref<3x3x4x128xbf16, #tpu.memory_space<vmem>>, vector<1x1x4x128xbf16>
    %40 = vector.shape_cast %39 : vector<1x1x4x128xbf16> to vector<4x128xbf16>
    %cst_50 = arith.constant dense<0.000000e+00> : vector<256x128xf32>
    %41 = tpu.matmul %38, %40, %cst_50 {dimension_numbers = #tpu.dot_dimension_numbers<[1], [0], [0], [1], [0, 0, 1, 1], [], []>} : vector<256x4xbf16>, vector<4x128xbf16>, vector<256x128xf32> -> vector<256x128xf32>
    %42 = arith.addf %35, %41 : vector<256x128xf32>
    %c0_51 = arith.constant 0 : index
    %c2_52 = arith.constant 2 : index
    %c0_53 = arith.constant 0 : index
    %c0_54 = arith.constant 0 : index
    %43 = vector.load %arg1[%c0_51, %c2_52, %c0_53, %c0_54] : memref<1x18x18x4xbf16, #tpu.memory_space<vmem>>, vector<1x16x16x4xbf16>
    %44 = vector.shape_cast %43 : vector<1x16x16x4xbf16> to vector<16x16x4xbf16>
    %45 = vector.shape_cast %44 : vector<16x16x4xbf16> to vector<256x4xbf16>
    %c2_55 = arith.constant 2 : index
    %c0_56 = arith.constant 0 : index
    %c0_57 = arith.constant 0 : index
    %c0_58 = arith.constant 0 : index
    %46 = vector.load %arg2[%c2_55, %c0_56, %c0_57, %c0_58] : memref<3x3x4x128xbf16, #tpu.memory_space<vmem>>, vector<1x1x4x128xbf16>
    %47 = vector.shape_cast %46 : vector<1x1x4x128xbf16> to vector<4x128xbf16>
    %cst_59 = arith.constant dense<0.000000e+00> : vector<256x128xf32>
    %48 = tpu.matmul %45, %47, %cst_59 {dimension_numbers = #tpu.dot_dimension_numbers<[1], [0], [0], [1], [0, 0, 1, 1], [], []>} : vector<256x4xbf16>, vector<4x128xbf16>, vector<256x128xf32> -> vector<256x128xf32>
    %49 = arith.addf %42, %48 : vector<256x128xf32>
    %c0_60 = arith.constant 0 : index
    %c2_61 = arith.constant 2 : index
    %c1_62 = arith.constant 1 : index
    %c0_63 = arith.constant 0 : index
    %50 = vector.load %arg1[%c0_60, %c2_61, %c1_62, %c0_63] : memref<1x18x18x4xbf16, #tpu.memory_space<vmem>>, vector<1x16x16x4xbf16>
    %51 = vector.shape_cast %50 : vector<1x16x16x4xbf16> to vector<16x16x4xbf16>
    %52 = vector.shape_cast %51 : vector<16x16x4xbf16> to vector<256x4xbf16>
    %c2_64 = arith.constant 2 : index
    %c1_65 = arith.constant 1 : index
    %c0_66 = arith.constant 0 : index
    %c0_67 = arith.constant 0 : index
    %53 = vector.load %arg2[%c2_64, %c1_65, %c0_66, %c0_67] : memref<3x3x4x128xbf16, #tpu.memory_space<vmem>>, vector<1x1x4x128xbf16>
    %54 = vector.shape_cast %53 : vector<1x1x4x128xbf16> to vector<4x128xbf16>
    %cst_68 = arith.constant dense<0.000000e+00> : vector<256x128xf32>
    %55 = tpu.matmul %52, %54, %cst_68 {dimension_numbers = #tpu.dot_dimension_numbers<[1], [0], [0], [1], [0, 0, 1, 1], [], []>} : vector<256x4xbf16>, vector<4x128xbf16>, vector<256x128xf32> -> vector<256x128xf32>
    %56 = arith.addf %49, %55 : vector<256x128xf32>
    %c0_69 = arith.constant 0 : index
    %c2_70 = arith.constant 2 : index
    %c2_71 = arith.constant 2 : index
    %c0_72 = arith.constant 0 : index
    %57 = vector.load %arg1[%c0_69, %c2_70, %c2_71, %c0_72] : memref<1x18x18x4xbf16, #tpu.memory_space<vmem>>, vector<1x16x16x4xbf16>
    %58 = vector.shape_cast %57 : vector<1x16x16x4xbf16> to vector<16x16x4xbf16>
    %59 = vector.shape_cast %58 : vector<16x16x4xbf16> to vector<256x4xbf16>
    %c2_73 = arith.constant 2 : index
    %c2_74 = arith.constant 2 : index
    %c0_75 = arith.constant 0 : index
    %c0_76 = arith.constant 0 : index
    %60 = vector.load %arg2[%c2_73, %c2_74, %c0_75, %c0_76] : memref<3x3x4x128xbf16, #tpu.memory_space<vmem>>, vector<1x1x4x128xbf16>
    %61 = vector.shape_cast %60 : vector<1x1x4x128xbf16> to vector<4x128xbf16>
    %cst_77 = arith.constant dense<0.000000e+00> : vector<256x128xf32>
    %62 = tpu.matmul %59, %61, %cst_77 {dimension_numbers = #tpu.dot_dimension_numbers<[1], [0], [0], [1], [0, 0, 1, 1], [], []>} : vector<256x4xbf16>, vector<4x128xbf16>, vector<256x128xf32> -> vector<256x128xf32>
    %63 = arith.addf %56, %62 : vector<256x128xf32>
    %c0_78 = arith.constant 0 : index
    %c0_79 = arith.constant 0 : index
    %64 = vector.load %arg3[%c0_78, %c0_79] : memref<1x128xf32, #tpu.memory_space<vmem>>, vector<1x128xf32>
    %65 = vector.broadcast %64 : vector<1x128xf32> to vector<256x128xf32>
    %66 = arith.addf %63, %65 : vector<256x128xf32>
    %cst_80 = arith.constant 0.000000e+00 : f32
    %67 = vector.broadcast %cst_80 : f32 to vector<256x128xf32>
    %68 = arith.maximumf %66, %67 : vector<256x128xf32>
    %cst_81 = arith.constant dense<0.000000e+00> : vector<128xf32>
    %69 = vector.multi_reduction <add>, %68, %cst_81 [0] : vector<256x128xf32> to vector<128xf32>
    %70 = vector.shape_cast %69 : vector<128xf32> to vector<1x128xf32>
    %cst_82 = arith.constant 3.906250e-03 : f32
    %71 = vector.broadcast %cst_82 : f32 to vector<1x128xf32>
    %72 = arith.mulf %70, %71 : vector<1x128xf32>
    %c0_83 = arith.constant 0 : index
    %c0_84 = arith.constant 0 : index
    %c0_85 = arith.constant 0 : index
    %73 = vector.load %arg7[%c0_83, %c0_84, %c0_85] : memref<1x1x128xf32, #tpu.memory_space<vmem>>, vector<1x1x128xf32>
    %74 = vector.shape_cast %73 : vector<1x1x128xf32> to vector<1x128xf32>
    %75 = vector.shape_cast %72 : vector<1x128xf32> to vector<1x1x128xf32>
    tpu.vector_store %arg7[%c0_83, %c0_84, %c0_85], %75 {strides = array<i32>} : memref<1x1x128xf32, #tpu.memory_space<vmem>>, vector<1x1x128xf32>,
    %76 = arith.truncf %72 : vector<1x128xf32> to vector<1x128xbf16>
    %c0_86 = arith.constant 0 : index
    %c0_87 = arith.constant 0 : index
    %77 = vector.load %arg4[%c0_86, %c0_87] : memref<128x128xbf16, #tpu.memory_space<vmem>>, vector<128x128xbf16>
    %cst_88 = arith.constant dense<0.000000e+00> : vector<1x128xf32>
    %78 = tpu.matmul %76, %77, %cst_88 {dimension_numbers = #tpu.dot_dimension_numbers<[1], [0], [0], [1], [0, 0, 1, 1], [], []>} : vector<1x128xbf16>, vector<128x128xbf16>, vector<1x128xf32> -> vector<1x128xf32>
    %c0_89 = arith.constant 0 : index
    %c0_90 = arith.constant 0 : index
    %79 = vector.load %arg5[%c0_89, %c0_90] : memref<1x128xf32, #tpu.memory_space<vmem>>, vector<1x128xf32>
    %80 = arith.addf %78, %79 : vector<1x128xf32>
    %c0_91 = arith.constant 0 : index
    %c0_92 = arith.constant 0 : index
    %c0_93 = arith.constant 0 : index
    %81 = vector.load %arg6[%c0_91, %c0_92, %c0_93] : memref<1x1x128xf32, #tpu.memory_space<vmem>>, vector<1x1x128xf32>
    %82 = vector.shape_cast %81 : vector<1x1x128xf32> to vector<1x128xf32>
    %83 = vector.shape_cast %80 : vector<1x128xf32> to vector<1x1x128xf32>
    tpu.vector_store %arg6[%c0_91, %c0_92, %c0_93], %83 {strides = array<i32>} : memref<1x1x128xf32, #tpu.memory_space<vmem>>, vector<1x1x128xf32>,
    return
  }
  func.func @transform_0(%arg0: i32) -> (i32, i32, i32, i32) {
    %c0_i32 = arith.constant 0 : i32
    %c0_i32_0 = arith.constant 0 : i32
    %c0_i32_1 = arith.constant 0 : i32
    %c0_i32_2 = arith.constant 0 : i32
    return %arg0, %c0_i32, %c0_i32_0, %c0_i32_1 : i32, i32, i32, i32
  }
  func.func @transform_1(%arg0: i32) -> (i32, i32, i32, i32) {
    %c0_i32 = arith.constant 0 : i32
    %c0_i32_0 = arith.constant 0 : i32
    %c0_i32_1 = arith.constant 0 : i32
    %c0_i32_2 = arith.constant 0 : i32
    %c0_i32_3 = arith.constant 0 : i32
    return %c0_i32, %c0_i32_0, %c0_i32_1, %c0_i32_2 : i32, i32, i32, i32
  }
  func.func @transform_2(%arg0: i32) -> (i32, i32) {
    %c0_i32 = arith.constant 0 : i32
    %c0_i32_0 = arith.constant 0 : i32
    %c0_i32_1 = arith.constant 0 : i32
    return %c0_i32, %c0_i32_0 : i32, i32
  }
  func.func @transform_3(%arg0: i32) -> (i32, i32) {
    %c0_i32 = arith.constant 0 : i32
    %c0_i32_0 = arith.constant 0 : i32
    %c0_i32_1 = arith.constant 0 : i32
    return %c0_i32, %c0_i32_0 : i32, i32
  }
  func.func @transform_4(%arg0: i32) -> (i32, i32) {
    %c0_i32 = arith.constant 0 : i32
    %c0_i32_0 = arith.constant 0 : i32
    %c0_i32_1 = arith.constant 0 : i32
    return %c0_i32, %c0_i32_0 : i32, i32
  }
  func.func @transform_5(%arg0: i32) -> (i32, i32, i32) {
    %c0_i32 = arith.constant 0 : i32
    %c0_i32_0 = arith.constant 0 : i32
    %c0_i32_1 = arith.constant 0 : i32
    return %arg0, %c0_i32, %c0_i32_0 : i32, i32, i32
  }
  func.func @transform_6(%arg0: i32) -> (i32, i32, i32) {
    %c0_i32 = arith.constant 0 : i32
    %c0_i32_0 = arith.constant 0 : i32
    %c0_i32_1 = arith.constant 0 : i32
    return %arg0, %c0_i32, %c0_i32_0 : i32, i32, i32
  }
}

</mosaic_0001>

<llo_original>
// kernel: _backbone_forward_impl.1
$region0: #{_backbone_forward_impl.1}
  #allocation0 [shape = 'u32[]', space=smem, size = 0x4, offset = 0x4, fixed_abs, tag = 'smem constant byte address 0x4 - core index']
  #allocation1 [shape = 'u32[72,128]{1,0:T(1,128)}', space=vmem, size = 0x9000, scoped, tag = 'internal scratch']
  %s0 = inlined_call_operand.vmem [shape: bf16[2,18,18,4], index: 0, kind: input, shape index: {}]
  %s1 = inlined_call_operand.vmem [shape: bf16[3,3,4,128], index: 1, kind: input, shape index: {}]
  %s2 = inlined_call_operand.vmem [shape: f32[1,128], index: 2, kind: input, shape index: {}]
  %s3 = inlined_call_operand.vmem [shape: bf16[128,128], index: 3, kind: input, shape index: {}]
  %s4 = inlined_call_operand.vmem [shape: f32[1,128], index: 4, kind: input, shape index: {}]
  %s5 = inlined_call_operand.hbm [shape: f32[2,1,128], index: 5, kind: output, shape index: {0}]
  %s6 = inlined_call_operand.vmem [shape: f32[2,1,128], index: 6, kind: output, shape index: {1}]
  %7 = xla_tuple %s5, %s6
  %s8 = sld [smem:[#allocation0]]
  $region61: #{_backbone_forward_impl.1} parent=0
    _
  %s10 = ssub.s32 1, %s8
  %s11 = scalar_select 0, %s10, %s8
  $region1: #{_backbone_forward_impl.1} parent=0
    #allocation2 [shape = 'u8[1024]{0}', space=vmem, size = 0x400, scoped, tag = 'output window, operand 0']
    #allocation3 [shape = 's32[2]{0}', space=sflag, size = 0x8, scoped, tag = 'scoped memory for _backbone_forward_impl.1']
    %12 = vsyncpa [#allocation3], 0
    %s13 = scalar_lea.sflag [#allocation3], 1
    %14 = vsyncpa %s13, 0
    loop: start=0, step=1, limit=4
    $region2: #{_backbone_forward_impl.1} parent=1 // loop_pre_header
      _
    $region3: #{_backbone_forward_impl.1} parent=1 // loop_header
      %s16 = sphi 0, %s20
      %p17 = scmp.ge.s32.totalorder %s16, 4
      %s26 = sphi 0, %s28
      %s29 = sphi 0, %s26
      %s30 = sphi 0, %s29
      %s46 = sphi 0, %s30
      %s50 = sphi 0, %s50
      %s52 = sphi 0, %s50
      %s53 = sphi 0, %s52
      %s67 = sphi 0, %s53
      %s71 = sphi 0, %s71
      %s73 = sphi 0, %s71
      %s74 = sphi 0, %s73
      %s88 = sphi 0, %s74
      %s92 = sphi 0, %s92
      %s94 = sphi 0, %s92
      %s95 = sphi 0, %s94
      %s109 = sphi 0, %s95
      %s113 = sphi 0, %s113
      %s115 = sphi 0, %s113
      %s116 = sphi 0, %s115
      %s130 = sphi 0, %s116
      %s136 = sphi 0, %s138
      %s139 = sphi 0, %s136
      %s140 = sphi 0, %s139
      %s156 = sphi 0, %s140
      %s162 = sphi 0, %s164
      %s165 = sphi 0, %s162
      %s166 = sphi 0, %s165
      %s182 = sphi 0, %s166
    $region4: #{_backbone_forward_impl.1} parent=1 // loop_header_branch
      %19 = sbr.rel (%p17) target = $region8
    $region5: #{_backbone_forward_impl.1} parent=1 // loop_body
      %s21 = ssub.s32 %s16, 1
      %s22 = ssub.s32 %s16, 2
      %s23 = sadd.s32 %s16, 1
      %s24 = ssub.s32 %s16, %s23
      %p25 = scmp.eq.s32.totalorder %s24, 0
      %s27 = sadd.s32 %s26, 1
      %s28 = scalar_select %p25, %s26, %s27
      %p31 = pneg %p25
      %p32 = scmp.eq.s32.totalorder %s16, 1
      %p33 = por %p31, %p32
      %p34 = scmp.ne.s32.totalorder %s26, %s29
      %p35 = scmp.eq.s32.totalorder %s16, 0
      %p36 = por %p34, %p35
      %p37 = scmp.ne.s32.totalorder %s26, %s29
      %p38 = scmp.eq.s32.totalorder %s21, 1
      %p39 = por %p37, %p38
      %p40 = scmp.ne.s32.totalorder %s29, %s30
      %p41 = scmp.eq.s32.totalorder %s21, 0
      %p42 = por %p40, %p41
      %p43 = scmp.ne.s32.totalorder %s29, %s30
      %p44 = scmp.eq.s32.totalorder %s22, 1
      %p45 = por %p43, %p44
      %p47 = scmp.ne.s32.totalorder %s30, %s46
      %p48 = scmp.eq.s32.totalorder %s22, 0
      %p49 = por %p47, %p48
      %s51 = sadd.s32 %s50, 1
      %p54 = scmp.eq.s32.totalorder %s16, 1
      %p55 = scmp.ne.s32.totalorder %s50, %s52
      %p56 = scmp.eq.s32.totalorder %s16, 0
      %p57 = por %p55, %p56
      %p58 = scmp.ne.s32.totalorder %s50, %s52
      %p59 = scmp.eq.s32.totalorder %s21, 1
      %p60 = por %p58, %p59
      %p61 = scmp.ne.s32.totalorder %s52, %s53
      %p62 = scmp.eq.s32.totalorder %s21, 0
      %p63 = por %p61, %p62
      %p64 = scmp.ne.s32.totalorder %s52, %s53
      %p65 = scmp.eq.s32.totalorder %s22, 1
      %p66 = por %p64, %p65
      %p68 = scmp.ne.s32.totalorder %s53, %s67
      %p69 = scmp.eq.s32.totalorder %s22, 0
      %p70 = por %p68, %p69
      %s72 = sadd.s32 %s71, 1
      %p75 = scmp.eq.s32.totalorder %s16, 1
      %p76 = scmp.ne.s32.totalorder %s71, %s73
      %p77 = scmp.eq.s32.totalorder %s16, 0
      %p78 = por %p76, %p77
      %p79 = scmp.ne.s32.totalorder %s71, %s73
      %p80 = scmp.eq.s32.totalorder %s21, 1
      %p81 = por %p79, %p80
      %p82 = scmp.ne.s32.totalorder %s73, %s74
      %p83 = scmp.eq.s32.totalorder %s21, 0
      %p84 = por %p82, %p83
      %p85 = scmp.ne.s32.totalorder %s73, %s74
      %p86 = scmp.eq.s32.totalorder %s22, 1
      %p87 = por %p85, %p86
      %p89 = scmp.ne.s32.totalorder %s74, %s88
      %p90 = scmp.eq.s32.totalorder %s22, 0
      %p91 = por %p89, %p90
      %s93 = sadd.s32 %s92, 1
      %p96 = scmp.eq.s32.totalorder %s16, 1
      %p97 = scmp.ne.s32.totalorder %s92, %s94
      %p98 = scmp.eq.s32.totalorder %s16, 0
      %p99 = por %p97, %p98
      %p100 = scmp.ne.s32.totalorder %s92, %s94
      %p101 = scmp.eq.s32.totalorder %s21, 1
      %p102 = por %p100, %p101
      %p103 = scmp.ne.s32.totalorder %s94, %s95
      %p104 = scmp.eq.s32.totalorder %s21, 0
      %p105 = por %p103, %p104
      %p106 = scmp.ne.s32.totalorder %s94, %s95
      %p107 = scmp.eq.s32.totalorder %s22, 1
      %p108 = por %p106, %p107
      %p110 = scmp.ne.s32.totalorder %s95, %s109
      %p111 = scmp.eq.s32.totalorder %s22, 0
      %p112 = por %p110, %p111
      %s114 = sadd.s32 %s113, 1
      %p117 = scmp.eq.s32.totalorder %s16, 1
      %p118 = scmp.ne.s32.totalorder %s113, %s115
      %p119 = scmp.eq.s32.totalorder %s16, 0
      %p120 = por %p118, %p119
      %p121 = scmp.ne.s32.totalorder %s113, %s115
      %p122 = scmp.eq.s32.totalorder %s21, 1
      %p123 = por %p121, %p122
      %p124 = scmp.ne.s32.totalorder %s115, %s116
      %p125 = scmp.eq.s32.totalorder %s21, 0
      %p126 = por %p124, %p125
      %p127 = scmp.ne.s32.totalorder %s115, %s116
      %p128 = scmp.eq.s32.totalorder %s22, 1
      %p129 = por %p127, %p128
      %p131 = scmp.ne.s32.totalorder %s116, %s130
      %p132 = scmp.eq.s32.totalorder %s22, 0
      %p133 = por %p131, %p132
      %s134 = ssub.s32 %s16, %s23
      %p135 = scmp.eq.s32.totalorder %s134, 0
      %s137 = sadd.s32 %s136, 1
      %s138 = scalar_select %p135, %s136, %s137
      %p141 = pneg %p135
      %p142 = scmp.eq.s32.totalorder %s16, 1
      %p143 = por %p141, %p142
      %p144 = scmp.ne.s32.totalorder %s136, %s139
      %p145 = scmp.eq.s32.totalorder %s16, 0
      %p146 = por %p144, %p145
      %p147 = scmp.ne.s32.totalorder %s136, %s139
      %p148 = scmp.eq.s32.totalorder %s21, 1
      %p149 = por %p147, %p148
      %p150 = scmp.ne.s32.totalorder %s139, %s140
      %p151 = scmp.eq.s32.totalorder %s21, 0
      %p152 = por %p150, %p151
      %p153 = scmp.ne.s32.totalorder %s139, %s140
      %p154 = scmp.eq.s32.totalorder %s22, 1
      %p155 = por %p153, %p154
      %p157 = scmp.ne.s32.totalorder %s140, %s156
      %p158 = scmp.eq.s32.totalorder %s22, 0
      %p159 = por %p157, %p158
      %s160 = ssub.s32 %s16, %s23
      %p161 = scmp.eq.s32.totalorder %s160, 0
      %s163 = sadd.s32 %s162, 1
      %s164 = scalar_select %p161, %s162, %s163
      %p167 = pneg %p161
      %p168 = scmp.eq.s32.totalorder %s16, 1
      %p169 = por %p167, %p168
      %p170 = scmp.ne.s32.totalorder %s162, %s165
      %p171 = scmp.eq.s32.totalorder %s16, 0
      %p172 = por %p170, %p171
      %p173 = scmp.ne.s32.totalorder %s162, %s165
      %p174 = scmp.eq.s32.totalorder %s21, 1
      %p175 = por %p173, %p174
      %p176 = scmp.ne.s32.totalorder %s165, %s166
      %p177 = scmp.eq.s32.totalorder %s21, 0
      %p178 = por %p176, %p177
      %p179 = scmp.ne.s32.totalorder %s165, %s166
      %p180 = scmp.eq.s32.totalorder %s22, 1
      %p181 = por %p179, %p180
      %p183 = scmp.ne.s32.totalorder %s166, %s182
      %p184 = scmp.eq.s32.totalorder %s22, 0
      %p185 = por %p183, %p184
      %p186 = scmp.le.s32.totalorder 1, %s16
      %p187 = scmp.lt.s32.totalorder %s16, 3
      %p188 = pnand %p186, %p187
      %p189 = pneg %p188
      // Predicated region
      $region9: #{_backbone_forward_impl.1} parent=5 // pred_check
        _
      $region10: #{_backbone_forward_impl.1} parent=5 // pred_check_branch
        %191 = sbr.rel (%p188) target = $region12
      $region11: #{_backbone_forward_impl.1} parent=5 // pred_region
        %s192 = ssub.s32 %s16, 1
        // Predicated region
        $region13: #{_backbone_forward_impl.1} parent=11 // pred_check
          %p193 = pneg %p63
        $region14: #{_backbone_forward_impl.1} parent=11 // pred_check_branch
          %195 = sbr.rel (%p193) target = $region16
        $region15: #{_backbone_forward_impl.1} parent=11 // pred_region
          _
        $region16: #{_backbone_forward_impl.1} parent=11 // pred_fallthru
          _
        // Predicated region
        $region17: #{_backbone_forward_impl.1} parent=11 // pred_check
          %p196 = pneg %p84
        $region18: #{_backbone_forward_impl.1} parent=11 // pred_check_branch
          %198 = sbr.rel (%p196) target = $region20
        $region19: #{_backbone_forward_impl.1} parent=11 // pred_region
          _
        $region20: #{_backbone_forward_impl.1} parent=11 // pred_fallthru
          _
        // Predicated region
        $region21: #{_backbone_forward_impl.1} parent=11 // pred_check
          %p199 = pneg %p105
        $region22: #{_backbone_forward_impl.1} parent=11 // pred_check_branch
          %201 = sbr.rel (%p199) target = $region24
        $region23: #{_backbone_forward_impl.1} parent=11 // pred_region
          _
        $region24: #{_backbone_forward_impl.1} parent=11 // pred_fallthru
          _
        // Predicated region
        $region25: #{_backbone_forward_impl.1} parent=11 // pred_check
          %p202 = pneg %p126
        $region26: #{_backbone_forward_impl.1} parent=11 // pred_check_branch
          %204 = sbr.rel (%p202) target = $region28
        $region27: #{_backbone_forward_impl.1} parent=11 // pred_region
          _
        $region28: #{_backbone_forward_impl.1} parent=11 // pred_fallthru
          _
      $region12: #{_backbone_forward_impl.1} parent=5 // pred_fallthru
        _
      %p205 = scmp.lt.s32.totalorder %s16, 2
      // Predicated region
      $region29: #{_backbone_forward_impl.1} parent=5 // pred_check
        %p206 = pneg %p205
      $region30: #{_backbone_forward_impl.1} parent=5 // pred_check_branch
        %208 = sbr.rel (%p206) target = $region32
      $region31: #{_backbone_forward_impl.1} parent=5 // pred_region
        // Predicated region
        $region33: #{_backbone_forward_impl.1} parent=31 // pred_check
          %p209 = pneg %p36
        $region34: #{_backbone_forward_impl.1} parent=31 // pred_check_branch
          %211 = sbr.rel (%p209) target = $region36
        $region35: #{_backbone_forward_impl.1} parent=31 // pred_region
          %p212 = scmp.lt.s32.totalorder %s16, 1
          %s213 = scalar_select %p212, %s16, 1
          %s214 = smul.addr %s213, 54
          %s215 = smul.addr %s214, 4
          %s216 = scalar_lea.vmem %s0, %s215
        $region36: #{_backbone_forward_impl.1} parent=31 // pred_fallthru
          _
      $region32: #{_backbone_forward_impl.1} parent=5 // pred_fallthru
        _
      %p217 = scmp.le.s32.totalorder 1, %s16
      %p218 = scmp.lt.s32.totalorder %s16, 3
      %p219 = pnand %p217, %p218
      %p220 = pneg %p219
      // Predicated region
      $region37: #{_backbone_forward_impl.1} parent=5 // pred_check
        _
      $region38: #{_backbone_forward_impl.1} parent=5 // pred_check_branch
        %222 = sbr.rel (%p219) target = $region40
      $region39: #{_backbone_forward_impl.1} parent=5 // pred_region
        %s223 = ssub.s32 %s16, 1
        %p224 = scmp.lt.s32.totalorder %s21, 1
        %s225 = scalar_select %p224, %s21, 1
        %s226 = smul.addr %s225, 54
        %s227 = smul.addr %s226, 4
        %s228 = scalar_lea.vmem %s0, %s227
        %p229 = pneg %p42
        %p230 = pneg %p39
        %p231 = pneg %p63
        %p232 = pneg %p60
        %p233 = pneg %p84
        %p234 = pneg %p81
        %p235 = pneg %p105
        %p236 = pneg %p102
        %p237 = pneg %p126
        %p238 = pneg %p123
        %p239 = pneg %p152
        %p240 = pneg %p149
        %s241 = sand.u32 %s139, 1
        %s242 = scalar_lea.sflag [#allocation3], %s241
        %s243 = sand.u32 %s139, 1
        %s244 = scalar_lea.vmem [#allocation2], %s243
        %p245 = pneg %p178
        %p246 = pneg %p175
        %p247 = scmp.lt.s32.totalorder %s21, 1
        %s248 = scalar_select %p247, %s21, 1
        %s249 = scalar_lea.vmem %s6, %s248
        %p250 = scmp.lt.s32.totalorder %s21, 1
        %s251 = scalar_select %p250, %s21, 1
        %s252 = smul.addr %s251, 54
        %s253 = smul.addr %s252, 4
        %s254 = scalar_lea.vmem %s0, %s253
        %p255 = scmp.lt.s32.totalorder %s21, 1
        %s256 = scalar_select %p255, %s21, 1
        %s257 = scalar_lea.vmem %s6, %s256
        %v259 = vld [vmem:[%s254] sm:$0xf]
        %v260 = vld [vmem:[%s254 + $0x4] sm:$0xf]
        %v261 = vld [vmem:[%s254 + $0xc] sm:$0xf]
        %v262 = vld [vmem:[%s254 + $0x10] sm:$0xf]
        %v263 = vld [vmem:[%s254 + $0x18] sm:$0xf]
        %v264 = vld [vmem:[%s254 + $0x1c] sm:$0xf]
        %v265 = vld [vmem:[%s254 + $0x24] sm:$0xf]
        %v266 = vld [vmem:[%s254 + $0x28] sm:$0xf]
        %v267 = vld [vmem:[%s254 + $0x30] sm:$0xf]
        %v268 = vld [vmem:[%s254 + $0x34] sm:$0xf]
        %v269 = vld [vmem:[%s254 + $0x3c] sm:$0xf]
        %v270 = vld [vmem:[%s254 + $0x40] sm:$0xf]
        %v271 = vld [vmem:[%s254 + $0x48] sm:$0xf]
        %v272 = vld [vmem:[%s254 + $0x4c] sm:$0xf]
        %v273 = vld [vmem:[%s254 + $0x54] sm:$0xf]
        %v274 = vld [vmem:[%s254 + $0x58] sm:$0xf]
        %v275 = vld [vmem:[%s254 + $0x60] sm:$0xf]
        %v276 = vld [vmem:[%s254 + $0x64] sm:$0xf]
        %v277 = vld [vmem:[%s254 + $0x6c] sm:$0xf]
        %v278 = vld [vmem:[%s254 + $0x70] sm:$0xf]
        %v279 = vld [vmem:[%s254 + $0x78] sm:$0xf]
        %v280 = vld [vmem:[%s254 + $0x7c] sm:$0xf]
        %v281 = vld [vmem:[%s254 + $0x84] sm:$0xf]
        %v282 = vld [vmem:[%s254 + $0x88] sm:$0xf]
        %v283 = vld [vmem:[%s254 + $0x90] sm:$0xf]
        %v284 = vld [vmem:[%s254 + $0x94] sm:$0xf]
        %v285 = vld [vmem:[%s254 + $0x9c] sm:$0xf]
        %v286 = vld [vmem:[%s254 + $0xa0] sm:$0xf]
        %v287 = vld [vmem:[%s254 + $0xa8] sm:$0xf]
        %v288 = vld [vmem:[%s254 + $0xac] sm:$0xf]
        %v289 = vld [vmem:[%s254 + $0xb4] sm:$0xf]
        %v290 = vld [vmem:[%s254 + $0xb8] sm:$0xf]
        %v291 = vld [vmem:[%s1] sm:$0x3]
        %v292 = vld [vmem:[%s254 + $0x8] sm:$0x1]
        %v293 = vld [vmem:[%s254 + $0x14] sm:$0x1]
        %v294 = vld [vmem:[%s254 + $0x20] sm:$0x1]
        %v295 = vld [vmem:[%s254 + $0x2c] sm:$0x1]
        %v296 = vld [vmem:[%s254 + $0x38] sm:$0x1]
        %v297 = vld [vmem:[%s254 + $0x44] sm:$0x1]
        %v298 = vld [vmem:[%s254 + $0x50] sm:$0x1]
        %v299 = vld [vmem:[%s254 + $0x5c] sm:$0x1]
        %v300 = vld [vmem:[%s254 + $0x68] sm:$0x1]
        %v301 = vld [vmem:[%s254 + $0x74] sm:$0x1]
        %v302 = vld [vmem:[%s254 + $0x80] sm:$0x1]
        %v303 = vld [vmem:[%s254 + $0x8c] sm:$0x1]
        %v304 = vld [vmem:[%s254 + $0x98] sm:$0x1]
        %v305 = vld [vmem:[%s254 + $0xa4] sm:$0x1]
        %v306 = vld [vmem:[%s254 + $0xb0] sm:$0x1]
        %v307 = vld [vmem:[%s254 + $0xbc] sm:$0x1]
        %vm308 = vsmask.f32 3328
        %vm309 = vsmask.f32 7440
        %vm310 = vmor %vm308, %vm309
        %v312 = vshrl.u32 %v259, 16
        %v314 = vrot.slane %v312, 4
        %v315 = vshll.u32 %v259, 16
        %v317 = vrot.slane %v315, 5
        %v318 = vor.u32 %v314, %v317
        %v319 = vrot.slane %v318, 4
        %v321 = vshll.u32 %v260, 16
        %v323 = vrot.slane %v321, 5
        %v324 = vsel %vm310, %v319, %v323
        %v325 = vshrl.u32 %v260, 16
        %v327 = vrot.slane %v325, 4
        %v328 = vor.u32 %v327, %v323
        %v329 = vrot.slane %v328, 4
        %v331 = vshll.u32 %v292, 16
        %v333 = vrot.slane %v331, 5
        %v334 = vsel %vm310, %v329, %v333
        %v336 = vshrl.u32 %v261, 16
        %v338 = vrot.slane %v336, 4
        %v339 = vshll.u32 %v261, 16
        %v341 = vrot.slane %v339, 5
        %v342 = vor.u32 %v338, %v341
        %v343 = vrot.slane %v342, 4
        %v345 = vshll.u32 %v262, 16
        %v347 = vrot.slane %v345, 5
        %v348 = vsel %vm310, %v343, %v347
        %v349 = vshrl.u32 %v262, 16
        %v351 = vrot.slane %v349, 4
        %v352 = vor.u32 %v351, %v347
        %v353 = vrot.slane %v352, 4
        %v355 = vshll.u32 %v293, 16
        %v357 = vrot.slane %v355, 5
        %v358 = vsel %vm310, %v353, %v357
        %v360 = vshrl.u32 %v263, 16
        %v362 = vrot.slane %v360, 4
        %v363 = vshll.u32 %v263, 16
        %v365 = vrot.slane %v363, 5
        %v366 = vor.u32 %v362, %v365
        %v367 = vrot.slane %v366, 4
        %v369 = vshll.u32 %v264, 16
        %v371 = vrot.slane %v369, 5
        %v372 = vsel %vm310, %v367, %v371
        %v373 = vshrl.u32 %v264, 16
        %v375 = vrot.slane %v373, 4
        %v376 = vor.u32 %v375, %v371
        %v377 = vrot.slane %v376, 4
        %v379 = vshll.u32 %v294, 16
        %v381 = vrot.slane %v379, 5
        %v382 = vsel %vm310, %v377, %v381
        %v384 = vshrl.u32 %v265, 16
        %v386 = vrot.slane %v384, 4
        %v387 = vshll.u32 %v265, 16
        %v389 = vrot.slane %v387, 5
        %v390 = vor.u32 %v386, %v389
        %v391 = vrot.slane %v390, 4
        %v393 = vshll.u32 %v266, 16
        %v395 = vrot.slane %v393, 5
        %v396 = vsel %vm310, %v391, %v395
        %v397 = vshrl.u32 %v266, 16
        %v399 = vrot.slane %v397, 4
        %v400 = vor.u32 %v399, %v395
        %v401 = vrot.slane %v400, 4
        %v403 = vshll.u32 %v295, 16
        %v405 = vrot.slane %v403, 5
        %v406 = vsel %vm310, %v401, %v405
        %v408 = vshrl.u32 %v267, 16
        %v410 = vrot.slane %v408, 4
        %v411 = vshll.u32 %v267, 16
        %v413 = vrot.slane %v411, 5
        %v414 = vor.u32 %v410, %v413
        %v415 = vrot.slane %v414, 4
        %v417 = vshll.u32 %v268, 16
        %v419 = vrot.slane %v417, 5
        %v420 = vsel %vm310, %v415, %v419
        %v421 = vshrl.u32 %v268, 16
        %v423 = vrot.slane %v421, 4
        %v424 = vor.u32 %v423, %v419
        %v425 = vrot.slane %v424, 4
        %v427 = vshll.u32 %v296, 16
        %v429 = vrot.slane %v427, 5
        %v430 = vsel %vm310, %v425, %v429
        %v432 = vshrl.u32 %v269, 16
        %v434 = vrot.slane %v432, 4
        %v435 = vshll.u32 %v269, 16
        %v437 = vrot.slane %v435, 5
        %v438 = vor.u32 %v434, %v437
        %v439 = vrot.slane %v438, 4
        %v441 = vshll.u32 %v270, 16
        %v443 = vrot.slane %v441, 5
        %v444 = vsel %vm310, %v439, %v443
        %v445 = vshrl.u32 %v270, 16
        %v447 = vrot.slane %v445, 4
        %v448 = vor.u32 %v447, %v443
        %v449 = vrot.slane %v448, 4
        %v451 = vshll.u32 %v297, 16
        %v453 = vrot.slane %v451, 5
        %v454 = vsel %vm310, %v449, %v453
        %v456 = vshrl.u32 %v271, 16
        %v458 = vrot.slane %v456, 4
        %v459 = vshll.u32 %v271, 16
        %v461 = vrot.slane %v459, 5
        %v462 = vor.u32 %v458, %v461
        %v463 = vrot.slane %v462, 4
        %v465 = vshll.u32 %v272, 16
        %v467 = vrot.slane %v465, 5
        %v468 = vsel %vm310, %v463, %v467
        %v469 = vshrl.u32 %v272, 16
        %v471 = vrot.slane %v469, 4
        %v472 = vor.u32 %v471, %v467
        %v473 = vrot.slane %v472, 4
        %v475 = vshll.u32 %v298, 16
        %v477 = vrot.slane %v475, 5
        %v478 = vsel %vm310, %v473, %v477
        %v480 = vshrl.u32 %v273, 16
        %v482 = vrot.slane %v480, 4
        %v483 = vshll.u32 %v273, 16
        %v485 = vrot.slane %v483, 5
        %v486 = vor.u32 %v482, %v485
        %v487 = vrot.slane %v486, 4
        %v489 = vshll.u32 %v274, 16
        %v491 = vrot.slane %v489, 5
        %v492 = vsel %vm310, %v487, %v491
        %v493 = vshrl.u32 %v274, 16
        %v495 = vrot.slane %v493, 4
        %v496 = vor.u32 %v495, %v491
        %v497 = vrot.slane %v496, 4
        %v499 = vshll.u32 %v299, 16
        %v501 = vrot.slane %v499, 5
        %v502 = vsel %vm310, %v497, %v501
        %v504 = vshrl.u32 %v275, 16
        %v506 = vrot.slane %v504, 4
        %v507 = vshll.u32 %v275, 16
        %v509 = vrot.slane %v507, 5
        %v510 = vor.u32 %v506, %v509
        %v511 = vrot.slane %v510, 4
        %v513 = vshll.u32 %v276, 16
        %v515 = vrot.slane %v513, 5
        %v516 = vsel %vm310, %v511, %v515
        %v517 = vshrl.u32 %v276, 16
        %v519 = vrot.slane %v517, 4
        %v520 = vor.u32 %v519, %v515
        %v521 = vrot.slane %v520, 4
        %v523 = vshll.u32 %v300, 16
        %v525 = vrot.slane %v523, 5
        %v526 = vsel %vm310, %v521, %v525
        %v528 = vshrl.u32 %v277, 16
        %v530 = vrot.slane %v528, 4
        %v531 = vshll.u32 %v277, 16
        %v533 = vrot.slane %v531, 5
        %v534 = vor.u32 %v530, %v533
        %v535 = vrot.slane %v534, 4
        %v537 = vshll.u32 %v278, 16
        %v539 = vrot.slane %v537, 5
        %v540 = vsel %vm310, %v535, %v539
        %v541 = vshrl.u32 %v278, 16
        %v543 = vrot.slane %v541, 4
        %v544 = vor.u32 %v543, %v539
        %v545 = vrot.slane %v544, 4
        %v547 = vshll.u32 %v301, 16
        %v549 = vrot.slane %v547, 5
        %v550 = vsel %vm310, %v545, %v549
        %v552 = vshrl.u32 %v279, 16
        %v554 = vrot.slane %v552, 4
        %v555 = vshll.u32 %v279, 16
        %v557 = vrot.slane %v555, 5
        %v558 = vor.u32 %v554, %v557
        %v559 = vrot.slane %v558, 4
        %v561 = vshll.u32 %v280, 16
        %v563 = vrot.slane %v561, 5
        %v564 = vsel %vm310, %v559, %v563
        %v565 = vshrl.u32 %v280, 16
        %v567 = vrot.slane %v565, 4
        %v568 = vor.u32 %v567, %v563
        %v569 = vrot.slane %v568, 4
        %v571 = vshll.u32 %v302, 16
        %v573 = vrot.slane %v571, 5
        %v574 = vsel %vm310, %v569, %v573
        %v576 = vshrl.u32 %v281, 16
        %v578 = vrot.slane %v576, 4
        %v579 = vshll.u32 %v281, 16
        %v581 = vrot.slane %v579, 5
        %v582 = vor.u32 %v578, %v581
        %v583 = vrot.slane %v582, 4
        %v585 = vshll.u32 %v282, 16
        %v587 = vrot.slane %v585, 5
        %v588 = vsel %vm310, %v583, %v587
        %v589 = vshrl.u32 %v282, 16
        %v591 = vrot.slane %v589, 4
        %v592 = vor.u32 %v591, %v587
        %v593 = vrot.slane %v592, 4
        %v595 = vshll.u32 %v303, 16
        %v597 = vrot.slane %v595, 5
        %v598 = vsel %vm310, %v593, %v597
        %v600 = vshrl.u32 %v283, 16
        %v602 = vrot.slane %v600, 4
        %v603 = vshll.u32 %v283, 16
        %v605 = vrot.slane %v603, 5
        %v606 = vor.u32 %v602, %v605
        %v607 = vrot.slane %v606, 4
        %v609 = vshll.u32 %v284, 16
        %v611 = vrot.slane %v609, 5
        %v612 = vsel %vm310, %v607, %v611
        %v613 = vshrl.u32 %v284, 16
        %v615 = vrot.slane %v613, 4
        %v616 = vor.u32 %v615, %v611
        %v617 = vrot.slane %v616, 4
        %v619 = vshll.u32 %v304, 16
        %v621 = vrot.slane %v619, 5
        %v622 = vsel %vm310, %v617, %v621
        %v624 = vshrl.u32 %v285, 16
        %v626 = vrot.slane %v624, 4
        %v627 = vshll.u32 %v285, 16
        %v629 = vrot.slane %v627, 5
        %v630 = vor.u32 %v626, %v629
        %v631 = vrot.slane %v630, 4
        %v633 = vshll.u32 %v286, 16
        %v635 = vrot.slane %v633, 5
        %v636 = vsel %vm310, %v631, %v635
        %v637 = vshrl.u32 %v286, 16
        %v639 = vrot.slane %v637, 4
        %v640 = vor.u32 %v639, %v635
        %v641 = vrot.slane %v640, 4
        %v643 = vshll.u32 %v305, 16
        %v645 = vrot.slane %v643, 5
        %v646 = vsel %vm310, %v641, %v645
        %v648 = vshrl.u32 %v287, 16
        %v650 = vrot.slane %v648, 4
        %v651 = vshll.u32 %v287, 16
        %v653 = vrot.slane %v651, 5
        %v654 = vor.u32 %v650, %v653
        %v655 = vrot.slane %v654, 4
        %v657 = vshll.u32 %v288, 16
        %v659 = vrot.slane %v657, 5
        %v660 = vsel %vm310, %v655, %v659
        %v661 = vshrl.u32 %v288, 16
        %v663 = vrot.slane %v661, 4
        %v664 = vor.u32 %v663, %v659
        %v665 = vrot.slane %v664, 4
        %v667 = vshll.u32 %v306, 16
        %v669 = vrot.slane %v667, 5
        %v670 = vsel %vm310, %v665, %v669
        %v672 = vshrl.u32 %v289, 16
        %v674 = vrot.slane %v672, 4
        %v675 = vshll.u32 %v289, 16
        %v677 = vrot.slane %v675, 5
        %v678 = vor.u32 %v674, %v677
        %v679 = vrot.slane %v678, 4
        %v681 = vshll.u32 %v290, 16
        %v683 = vrot.slane %v681, 5
        %v684 = vsel %vm310, %v679, %v683
        %v685 = vshrl.u32 %v290, 16
        %v687 = vrot.slane %v685, 4
        %v688 = vor.u32 %v687, %v683
        %v689 = vrot.slane %v688, 4
        %v691 = vshll.u32 %v307, 16
        %v693 = vrot.slane %v691, 5
        %v694 = vsel %vm310, %v689, %v693
        %s695 = scalar_lea.vmem %s1, 2
        %v696 = vld [vmem:[%s695] sm:$0x3]
        %v697 = vunpack.c.l.b16 %v324
        %v698 = vunpack.c.l.b16 %v334
        %v699 = vunpack.c.l.b16 %v348
        %v700 = vunpack.c.l.b16 %v358
        %v701 = vunpack.c.l.b16 %v372
        %v702 = vunpack.c.l.b16 %v382
        %v703 = vunpack.c.l.b16 %v396
        %v704 = vunpack.c.l.b16 %v406
        %v705 = vunpack.c.l.b16 %v420
        %v706 = vunpack.c.l.b16 %v430
        %v707 = vunpack.c.l.b16 %v444
        %v708 = vunpack.c.l.b16 %v454
        %v709 = vunpack.c.l.b16 %v468
        %v710 = vunpack.c.l.b16 %v478
        %v711 = vunpack.c.l.b16 %v492
        %v712 = vunpack.c.l.b16 %v502
        %v713 = vunpack.c.l.b16 %v516
        %v714 = vunpack.c.l.b16 %v526
        %v715 = vunpack.c.l.b16 %v540
        %v716 = vunpack.c.l.b16 %v550
        %v717 = vunpack.c.l.b16 %v564
        %v718 = vunpack.c.l.b16 %v574
        %v719 = vunpack.c.l.b16 %v588
        %v720 = vunpack.c.l.b16 %v598
        %v721 = vunpack.c.l.b16 %v612
        %v722 = vunpack.c.l.b16 %v622
        %v723 = vunpack.c.l.b16 %v636
        %v724 = vunpack.c.l.b16 %v646
        %v725 = vunpack.c.l.b16 %v660
        %v726 = vunpack.c.l.b16 %v670
        %v727 = vunpack.c.l.b16 %v684
        %v728 = vunpack.c.l.b16 %v694
        %v729 = vpack.c.b16 %v698, %v697
        %v730 = vpack.c.b16 %v700, %v699
        %v731 = vpack.c.b16 %v702, %v701
        %v732 = vpack.c.b16 %v704, %v703
        %v733 = vpack.c.b16 %v706, %v705
        %v734 = vpack.c.b16 %v708, %v707
        %v735 = vpack.c.b16 %v710, %v709
        %v736 = vpack.c.b16 %v712, %v711
        %v737 = vpack.c.b16 %v714, %v713
        %v738 = vpack.c.b16 %v716, %v715
        %v739 = vpack.c.b16 %v718, %v717
        %v740 = vpack.c.b16 %v720, %v719
        %v741 = vpack.c.b16 %v722, %v721
        %v742 = vpack.c.b16 %v724, %v723
        %v743 = vpack.c.b16 %v726, %v725
        %v744 = vpack.c.b16 %v728, %v727
        %vm745 = vcmask 31744
        %v747 = vsel %vm745, %v729, 0
        %v750 = vsel %vm745, %v730, 0
        %v753 = vsel %vm745, %v731, 0
        %v756 = vsel %vm745, %v732, 0
        %v759 = vsel %vm745, %v733, 0
        %v762 = vsel %vm745, %v734, 0
        %v765 = vsel %vm745, %v735, 0
        %v768 = vsel %vm745, %v736, 0
        %v771 = vsel %vm745, %v737, 0
        %v774 = vsel %vm745, %v738, 0
        %v777 = vsel %vm745, %v739, 0
        %v780 = vsel %vm745, %v740, 0
        %v783 = vsel %vm745, %v741, 0
        %v786 = vsel %vm745, %v742, 0
        %v789 = vsel %vm745, %v743, 0
        %v792 = vsel %vm745, %v744, 0
        %vm794 = vcmask 1041408
        %v796 = vsel %vm794, %v696, 0
        %798 = vmatpush.bf16.msra.mxu0 0
        %799 = vmatpush.bf16.msra.mxu0 0
        %800 = vmatpush.bf16.msra.mxu0 0
        %801 = vmatpush.bf16.msra.mxu0 0
        %802 = vmatpush.bf16.msra.mxu0 0
        %803 = vmatpush.bf16.msra.mxu0 0
        %804 = vmatpush.bf16.msra.mxu0 0
        %805 = vmatpush.bf16.msra.mxu0 %v796
        %806 = vmatmul.bf16.gmra.mxu0 %v747
        %v807 = vpop.f32.mrf.mxu0
        %v808 = vadd.f32 0.0, %v807
        %v809 = vpop.f32.mrf.mxu0
        %v810 = vadd.f32 0.0, %v809
        %811 = vmatmul.bf16.gmra.mxu0 %v750
        %v812 = vpop.f32.mrf.mxu0
        %v813 = vadd.f32 0.0, %v812
        %v814 = vpop.f32.mrf.mxu0
        %v815 = vadd.f32 0.0, %v814
        %816 = vmatmul.bf16.gmra.mxu0 %v753
        %v817 = vpop.f32.mrf.mxu0
        %v818 = vadd.f32 0.0, %v817
        %v819 = vpop.f32.mrf.mxu0
        %v820 = vadd.f32 0.0, %v819
        %821 = vmatmul.bf16.gmra.mxu0 %v756
        %v822 = vpop.f32.mrf.mxu0
        %v823 = vadd.f32 0.0, %v822
        %v824 = vpop.f32.mrf.mxu0
        %v825 = vadd.f32 0.0, %v824
        %826 = vmatmul.bf16.gmra.mxu0 %v759
        %v827 = vpop.f32.mrf.mxu0
        %v828 = vadd.f32 0.0, %v827
        %v829 = vpop.f32.mrf.mxu0
        %v830 = vadd.f32 0.0, %v829
        %831 = vmatmul.bf16.gmra.mxu0 %v762
        %v832 = vpop.f32.mrf.mxu0
        %v833 = vadd.f32 0.0, %v832
        %v834 = vpop.f32.mrf.mxu0
        %v835 = vadd.f32 0.0, %v834
        %836 = vmatmul.bf16.gmra.mxu0 %v765
        %v837 = vpop.f32.mrf.mxu0
        %v838 = vadd.f32 0.0, %v837
        %v839 = vpop.f32.mrf.mxu0
        %v840 = vadd.f32 0.0, %v839
        %841 = vmatmul.bf16.gmra.mxu0 %v768
        %v842 = vpop.f32.mrf.mxu0
        %v843 = vadd.f32 0.0, %v842
        %v844 = vpop.f32.mrf.mxu0
        %v845 = vadd.f32 0.0, %v844
        %846 = vmatmul.bf16.gmra.mxu0 %v771
        %v847 = vpop.f32.mrf.mxu0
        %v848 = vadd.f32 0.0, %v847
        %v849 = vpop.f32.mrf.mxu0
        %v850 = vadd.f32 0.0, %v849
        %851 = vmatmul.bf16.gmra.mxu0 %v774
        %v852 = vpop.f32.mrf.mxu0
        %v853 = vadd.f32 0.0, %v852
        %v854 = vpop.f32.mrf.mxu0
        %v855 = vadd.f32 0.0, %v854
        %856 = vmatmul.bf16.gmra.mxu0 %v777
        %v857 = vpop.f32.mrf.mxu0
        %v858 = vadd.f32 0.0, %v857
        %v859 = vpop.f32.mrf.mxu0
        %v860 = vadd.f32 0.0, %v859
        %861 = vmatmul.bf16.gmra.mxu0 %v780
        %v862 = vpop.f32.mrf.mxu0
        %v863 = vadd.f32 0.0, %v862
        %v864 = vpop.f32.mrf.mxu0
        %v865 = vadd.f32 0.0, %v864
        %866 = vmatmul.bf16.gmra.mxu0 %v783
        %v867 = vpop.f32.mrf.mxu0
        %v868 = vadd.f32 0.0, %v867
        %v869 = vpop.f32.mrf.mxu0
        %v870 = vadd.f32 0.0, %v869
        %871 = vmatmul.bf16.gmra.mxu0 %v786
        %v872 = vpop.f32.mrf.mxu0
        %v873 = vadd.f32 0.0, %v872
        %v874 = vpop.f32.mrf.mxu0
        %v875 = vadd.f32 0.0, %v874
        %876 = vmatmul.bf16.gmra.mxu0 %v789
        %v877 = vpop.f32.mrf.mxu0
        %v878 = vadd.f32 0.0, %v877
        %v879 = vpop.f32.mrf.mxu0
        %v880 = vadd.f32 0.0, %v879
        %881 = vmatmul.bf16.gmra.mxu0 %v792
        %v882 = vpop.f32.mrf.mxu0
        %v883 = vadd.f32 0.0, %v882
        %v884 = vpop.f32.mrf.mxu0
        %v885 = vadd.f32 0.0, %v884
        %886 = vdwg.mxu0
        %v919 = vunpack.c.l.b16 %v259
        %v920 = vunpack.c.l.b16 %v260
        %v921 = vunpack.c.l.b16 %v261
        %v922 = vunpack.c.l.b16 %v262
        %v923 = vunpack.c.l.b16 %v263
        %v924 = vunpack.c.l.b16 %v264
        %v925 = vunpack.c.l.b16 %v265
        %v926 = vunpack.c.l.b16 %v266
        %v927 = vunpack.c.l.b16 %v267
        %v928 = vunpack.c.l.b16 %v268
        %v929 = vunpack.c.l.b16 %v269
        %v930 = vunpack.c.l.b16 %v270
        %v931 = vunpack.c.l.b16 %v271
        %v932 = vunpack.c.l.b16 %v272
        %v933 = vunpack.c.l.b16 %v273
        %v934 = vunpack.c.l.b16 %v274
        %v935 = vunpack.c.l.b16 %v275
        %v936 = vunpack.c.l.b16 %v276
        %v937 = vunpack.c.l.b16 %v277
        %v938 = vunpack.c.l.b16 %v278
        %v939 = vunpack.c.l.b16 %v279
        %v940 = vunpack.c.l.b16 %v280
        %v941 = vunpack.c.l.b16 %v281
        %v942 = vunpack.c.l.b16 %v282
        %v943 = vunpack.c.l.b16 %v283
        %v944 = vunpack.c.l.b16 %v284
        %v945 = vunpack.c.l.b16 %v285
        %v946 = vunpack.c.l.b16 %v286
        %v947 = vunpack.c.l.b16 %v287
        %v948 = vunpack.c.l.b16 %v288
        %v949 = vunpack.c.l.b16 %v289
        %v950 = vunpack.c.l.b16 %v290
        %v951 = vpack.c.b16 %v920, %v919
        %v952 = vpack.c.b16 %v922, %v921
        %v953 = vpack.c.b16 %v924, %v923
        %v954 = vpack.c.b16 %v926, %v925
        %v955 = vpack.c.b16 %v928, %v927
        %v956 = vpack.c.b16 %v930, %v929
        %v957 = vpack.c.b16 %v932, %v931
        %v958 = vpack.c.b16 %v934, %v933
        %v959 = vpack.c.b16 %v936, %v935
        %v960 = vpack.c.b16 %v938, %v937
        %v961 = vpack.c.b16 %v940, %v939
        %v962 = vpack.c.b16 %v942, %v941
        %v963 = vpack.c.b16 %v944, %v943
        %v964 = vpack.c.b16 %v946, %v945
        %v965 = vpack.c.b16 %v948, %v947
        %v966 = vpack.c.b16 %v950, %v949
        %v968 = vsel %vm745, %v951, 0
        %v971 = vsel %vm745, %v952, 0
        %v974 = vsel %vm745, %v953, 0
        %v977 = vsel %vm745, %v954, 0
        %v980 = vsel %vm745, %v955, 0
        %v983 = vsel %vm745, %v956, 0
        %v986 = vsel %vm745, %v957, 0
        %v989 = vsel %vm745, %v958, 0
        %v992 = vsel %vm745, %v959, 0
        %v995 = vsel %vm745, %v960, 0
        %v998 = vsel %vm745, %v961, 0
        %v1001 = vsel %vm745, %v962, 0
        %v1004 = vsel %vm745, %v963, 0
        %v1007 = vsel %vm745, %v964, 0
        %v1010 = vsel %vm745, %v965, 0
        %v1013 = vsel %vm745, %v966, 0
        %v1016 = vsel %vm794, %v291, 0
        %1018 = vmatpush.bf16.msra.mxu0 0
        %1019 = vmatpush.bf16.msra.mxu0 0
        %1020 = vmatpush.bf16.msra.mxu0 0
        %1021 = vmatpush.bf16.msra.mxu0 0
        %1022 = vmatpush.bf16.msra.mxu0 0
        %1023 = vmatpush.bf16.msra.mxu0 0
        %1024 = vmatpush.bf16.msra.mxu0 0
        %1025 = vmatpush.bf16.msra.mxu0 %v1016
        %1026 = vmatmul.bf16.gmra.mxu0 %v968
        %v1027 = vpop.f32.mrf.mxu0
        %v1028 = vadd.f32 %v808, %v1027
        %v1029 = vpop.f32.mrf.mxu0
        %v1030 = vadd.f32 %v810, %v1029
        %1031 = vmatmul.bf16.gmra.mxu0 %v971
        %v1032 = vpop.f32.mrf.mxu0
        %v1033 = vadd.f32 %v813, %v1032
        %v1034 = vpop.f32.mrf.mxu0
        %v1035 = vadd.f32 %v815, %v1034
        %1036 = vmatmul.bf16.gmra.mxu0 %v974
        %v1037 = vpop.f32.mrf.mxu0
        %v1038 = vadd.f32 %v818, %v1037
        %v1039 = vpop.f32.mrf.mxu0
        %v1040 = vadd.f32 %v820, %v1039
        %1041 = vmatmul.bf16.gmra.mxu0 %v977
        %v1042 = vpop.f32.mrf.mxu0
        %v1043 = vadd.f32 %v823, %v1042
        %v1044 = vpop.f32.mrf.mxu0
        %v1045 = vadd.f32 %v825, %v1044
        %1046 = vmatmul.bf16.gmra.mxu0 %v980
        %v1047 = vpop.f32.mrf.mxu0
        %v1048 = vadd.f32 %v828, %v1047
        %v1049 = vpop.f32.mrf.mxu0
        %v1050 = vadd.f32 %v830, %v1049
        %1051 = vmatmul.bf16.gmra.mxu0 %v983
        %v1052 = vpop.f32.mrf.mxu0
        %v1053 = vadd.f32 %v833, %v1052
        %v1054 = vpop.f32.mrf.mxu0
        %v1055 = vadd.f32 %v835, %v1054
        %1056 = vmatmul.bf16.gmra.mxu0 %v986
        %v1057 = vpop.f32.mrf.mxu0
        %v1058 = vadd.f32 %v838, %v1057
        %v1059 = vpop.f32.mrf.mxu0
        %v1060 = vadd.f32 %v840, %v1059
        %1061 = vmatmul.bf16.gmra.mxu0 %v989
        %v1062 = vpop.f32.mrf.mxu0
        %v1063 = vadd.f32 %v843, %v1062
        %v1064 = vpop.f32.mrf.mxu0
        %v1065 = vadd.f32 %v845, %v1064
        %1066 = vmatmul.bf16.gmra.mxu0 %v992
        %v1067 = vpop.f32.mrf.mxu0
        %v1068 = vadd.f32 %v848, %v1067
        %v1069 = vpop.f32.mrf.mxu0
        %v1070 = vadd.f32 %v850, %v1069
        %1071 = vmatmul.bf16.gmra.mxu0 %v995
        %v1072 = vpop.f32.mrf.mxu0
        %v1073 = vadd.f32 %v853, %v1072
        %v1074 = vpop.f32.mrf.mxu0
        %v1075 = vadd.f32 %v855, %v1074
        %1076 = vmatmul.bf16.gmra.mxu0 %v998
        %v1077 = vpop.f32.mrf.mxu0
        %v1078 = vadd.f32 %v858, %v1077
        %v1079 = vpop.f32.mrf.mxu0
        %v1080 = vadd.f32 %v860, %v1079
        %1081 = vmatmul.bf16.gmra.mxu0 %v1001
        %v1082 = vpop.f32.mrf.mxu0
        %v1083 = vadd.f32 %v863, %v1082
        %v1084 = vpop.f32.mrf.mxu0
        %v1085 = vadd.f32 %v865, %v1084
        %1086 = vmatmul.bf16.gmra.mxu0 %v1004
        %v1087 = vpop.f32.mrf.mxu0
        %v1088 = vadd.f32 %v868, %v1087
        %v1089 = vpop.f32.mrf.mxu0
        %v1090 = vadd.f32 %v870, %v1089
        %1091 = vmatmul.bf16.gmra.mxu0 %v1007
        %v1092 = vpop.f32.mrf.mxu0
        %v1093 = vadd.f32 %v873, %v1092
        %v1094 = vpop.f32.mrf.mxu0
        %v1095 = vadd.f32 %v875, %v1094
        %1096 = vmatmul.bf16.gmra.mxu0 %v1010
        %v1097 = vpop.f32.mrf.mxu0
        %v1098 = vadd.f32 %v878, %v1097
        %v1099 = vpop.f32.mrf.mxu0
        %v1100 = vadd.f32 %v880, %v1099
        %1101 = vmatmul.bf16.gmra.mxu0 %v1013
        %v1102 = vpop.f32.mrf.mxu0
        %v1103 = vadd.f32 %v883, %v1102
        %v1104 = vpop.f32.mrf.mxu0
        %v1105 = vadd.f32 %v885, %v1104
        %1106 = vdwg.mxu0
        %v1107 = vld [vmem:[%s254] sm:$0xe]
        %v1108 = vld [vmem:[%s254 + $0xc] sm:$0xe]
        %v1109 = vld [vmem:[%s254 + $0x18] sm:$0xe]
        %v1110 = vld [vmem:[%s254 + $0x24] sm:$0xe]
        %v1111 = vld [vmem:[%s254 + $0x30] sm:$0xe]
        %v1112 = vld [vmem:[%s254 + $0x3c] sm:$0xe]
        %v1113 = vld [vmem:[%s254 + $0x48] sm:$0xe]
        %v1114 = vld [vmem:[%s254 + $0x54] sm:$0xe]
        %v1115 = vld [vmem:[%s254 + $0x60] sm:$0xe]
        %v1116 = vld [vmem:[%s254 + $0x6c] sm:$0xe]
        %v1117 = vld [vmem:[%s254 + $0x78] sm:$0xe]
        %v1118 = vld [vmem:[%s254 + $0x84] sm:$0xe]
        %v1119 = vld [vmem:[%s254 + $0x90] sm:$0xe]
        %v1120 = vld [vmem:[%s254 + $0x9c] sm:$0xe]
        %v1121 = vld [vmem:[%s254 + $0xa8] sm:$0xe]
        %v1122 = vld [vmem:[%s254 + $0xb4] sm:$0xe]
        %vm1155 = vcmask 1042432
        %vm1156 = vcmask 1046532
        %vm1157 = vmor %vm1155, %vm1156
        %v1158 = vrot.slane %v1107, 5
        %v1159 = vrot.slane %v1158, 4
        %v1160 = vrot.slane %v260, 5
        %v1161 = vsel %vm1157, %v1159, %v1160
        %v1162 = vrot.slane %v1160, 4
        %v1163 = vrot.slane %v292, 5
        %v1164 = vsel %vm1157, %v1162, %v1163
        %v1165 = vrot.slane %v1108, 5
        %v1166 = vrot.slane %v1165, 4
        %v1167 = vrot.slane %v262, 5
        %v1168 = vsel %vm1157, %v1166, %v1167
        %v1169 = vrot.slane %v1167, 4
        %v1170 = vrot.slane %v293, 5
        %v1171 = vsel %vm1157, %v1169, %v1170
        %v1172 = vrot.slane %v1109, 5
        %v1173 = vrot.slane %v1172, 4
        %v1174 = vrot.slane %v264, 5
        %v1175 = vsel %vm1157, %v1173, %v1174
        %v1176 = vrot.slane %v1174, 4
        %v1177 = vrot.slane %v294, 5
        %v1178 = vsel %vm1157, %v1176, %v1177
        %v1179 = vrot.slane %v1110, 5
        %v1180 = vrot.slane %v1179, 4
        %v1181 = vrot.slane %v266, 5
        %v1182 = vsel %vm1157, %v1180, %v1181
        %v1183 = vrot.slane %v1181, 4
        %v1184 = vrot.slane %v295, 5
        %v1185 = vsel %vm1157, %v1183, %v1184
        %v1186 = vrot.slane %v1111, 5
        %v1187 = vrot.slane %v1186, 4
        %v1188 = vrot.slane %v268, 5
        %v1189 = vsel %vm1157, %v1187, %v1188
        %v1190 = vrot.slane %v1188, 4
        %v1191 = vrot.slane %v296, 5
        %v1192 = vsel %vm1157, %v1190, %v1191
        %v1193 = vrot.slane %v1112, 5
        %v1194 = vrot.slane %v1193, 4
        %v1195 = vrot.slane %v270, 5
        %v1196 = vsel %vm1157, %v1194, %v1195
        %v1197 = vrot.slane %v1195, 4
        %v1198 = vrot.slane %v297, 5
        %v1199 = vsel %vm1157, %v1197, %v1198
        %v1200 = vrot.slane %v1113, 5
        %v1201 = vrot.slane %v1200, 4
        %v1202 = vrot.slane %v272, 5
        %v1203 = vsel %vm1157, %v1201, %v1202
        %v1204 = vrot.slane %v1202, 4
        %v1205 = vrot.slane %v298, 5
        %v1206 = vsel %vm1157, %v1204, %v1205
        %v1207 = vrot.slane %v1114, 5
        %v1208 = vrot.slane %v1207, 4
        %v1209 = vrot.slane %v274, 5
        %v1210 = vsel %vm1157, %v1208, %v1209
        %v1211 = vrot.slane %v1209, 4
        %v1212 = vrot.slane %v299, 5
        %v1213 = vsel %vm1157, %v1211, %v1212
        %v1214 = vrot.slane %v1115, 5
        %v1215 = vrot.slane %v1214, 4
        %v1216 = vrot.slane %v276, 5
        %v1217 = vsel %vm1157, %v1215, %v1216
        %v1218 = vrot.slane %v1216, 4
        %v1219 = vrot.slane %v300, 5
        %v1220 = vsel %vm1157, %v1218, %v1219
        %v1221 = vrot.slane %v1116, 5
        %v1222 = vrot.slane %v1221, 4
        %v1223 = vrot.slane %v278, 5
        %v1224 = vsel %vm1157, %v1222, %v1223
        %v1225 = vrot.slane %v1223, 4
        %v1226 = vrot.slane %v301, 5
        %v1227 = vsel %vm1157, %v1225, %v1226
        %v1228 = vrot.slane %v1117, 5
        %v1229 = vrot.slane %v1228, 4
        %v1230 = vrot.slane %v280, 5
        %v1231 = vsel %vm1157, %v1229, %v1230
        %v1232 = vrot.slane %v1230, 4
        %v1233 = vrot.slane %v302, 5
        %v1234 = vsel %vm1157, %v1232, %v1233
        %v1235 = vrot.slane %v1118, 5
        %v1236 = vrot.slane %v1235, 4
        %v1237 = vrot.slane %v282, 5
        %v1238 = vsel %vm1157, %v1236, %v1237
        %v1239 = vrot.slane %v1237, 4
        %v1240 = vrot.slane %v303, 5
        %v1241 = vsel %vm1157, %v1239, %v1240
        %v1242 = vrot.slane %v1119, 5
        %v1243 = vrot.slane %v1242, 4
        %v1244 = vrot.slane %v284, 5
        %v1245 = vsel %vm1157, %v1243, %v1244
        %v1246 = vrot.slane %v1244, 4
        %v1247 = vrot.slane %v304, 5
        %v1248 = vsel %vm1157, %v1246, %v1247
        %v1249 = vrot.slane %v1120, 5
        %v1250 = vrot.slane %v1249, 4
        %v1251 = vrot.slane %v286, 5
        %v1252 = vsel %vm1157, %v1250, %v1251
        %v1253 = vrot.slane %v1251, 4
        %v1254 = vrot.slane %v305, 5
        %v1255 = vsel %vm1157, %v1253, %v1254
        %v1256 = vrot.slane %v1121, 5
        %v1257 = vrot.slane %v1256, 4
        %v1258 = vrot.slane %v288, 5
        %v1259 = vsel %vm1157, %v1257, %v1258
        %v1260 = vrot.slane %v1258, 4
        %v1261 = vrot.slane %v306, 5
        %v1262 = vsel %vm1157, %v1260, %v1261
        %v1263 = vrot.slane %v1122, 5
        %v1264 = vrot.slane %v1263, 4
        %v1265 = vrot.slane %v290, 5
        %v1266 = vsel %vm1157, %v1264, %v1265
        %v1267 = vrot.slane %v1265, 4
        %v1268 = vrot.slane %v307, 5
        %v1269 = vsel %vm1157, %v1267, %v1268
        %s1270 = scalar_lea.vmem %s1, 4
        %v1271 = vld [vmem:[%s1270] sm:$0x3]
        %v1272 = vunpack.c.l.b16 %v1161
        %v1273 = vunpack.c.l.b16 %v1164
        %v1274 = vunpack.c.l.b16 %v1168
        %v1275 = vunpack.c.l.b16 %v1171
        %v1276 = vunpack.c.l.b16 %v1175
        %v1277 = vunpack.c.l.b16 %v1178
        %v1278 = vunpack.c.l.b16 %v1182
        %v1279 = vunpack.c.l.b16 %v1185
        %v1280 = vunpack.c.l.b16 %v1189
        %v1281 = vunpack.c.l.b16 %v1192
        %v1282 = vunpack.c.l.b16 %v1196
        %v1283 = vunpack.c.l.b16 %v1199
        %v1284 = vunpack.c.l.b16 %v1203
        %v1285 = vunpack.c.l.b16 %v1206
        %v1286 = vunpack.c.l.b16 %v1210
        %v1287 = vunpack.c.l.b16 %v1213
        %v1288 = vunpack.c.l.b16 %v1217
        %v1289 = vunpack.c.l.b16 %v1220
        %v1290 = vunpack.c.l.b16 %v1224
        %v1291 = vunpack.c.l.b16 %v1227
        %v1292 = vunpack.c.l.b16 %v1231
        %v1293 = vunpack.c.l.b16 %v1234
        %v1294 = vunpack.c.l.b16 %v1238
        %v1295 = vunpack.c.l.b16 %v1241
        %v1296 = vunpack.c.l.b16 %v1245
        %v1297 = vunpack.c.l.b16 %v1248
        %v1298 = vunpack.c.l.b16 %v1252
        %v1299 = vunpack.c.l.b16 %v1255
        %v1300 = vunpack.c.l.b16 %v1259
        %v1301 = vunpack.c.l.b16 %v1262
        %v1302 = vunpack.c.l.b16 %v1266
        %v1303 = vunpack.c.l.b16 %v1269
        %v1304 = vpack.c.b16 %v1273, %v1272
        %v1305 = vpack.c.b16 %v1275, %v1274
        %v1306 = vpack.c.b16 %v1277, %v1276
        %v1307 = vpack.c.b16 %v1279, %v1278
        %v1308 = vpack.c.b16 %v1281, %v1280
        %v1309 = vpack.c.b16 %v1283, %v1282
        %v1310 = vpack.c.b16 %v1285, %v1284
        %v1311 = vpack.c.b16 %v1287, %v1286
        %v1312 = vpack.c.b16 %v1289, %v1288
        %v1313 = vpack.c.b16 %v1291, %v1290
        %v1314 = vpack.c.b16 %v1293, %v1292
        %v1315 = vpack.c.b16 %v1295, %v1294
        %v1316 = vpack.c.b16 %v1297, %v1296
        %v1317 = vpack.c.b16 %v1299, %v1298
        %v1318 = vpack.c.b16 %v1301, %v1300
        %v1319 = vpack.c.b16 %v1303, %v1302
        %v1321 = vsel %vm745, %v1304, 0
        %v1324 = vsel %vm745, %v1305, 0
        %v1327 = vsel %vm745, %v1306, 0
        %v1330 = vsel %vm745, %v1307, 0
        %v1333 = vsel %vm745, %v1308, 0
        %v1336 = vsel %vm745, %v1309, 0
        %v1339 = vsel %vm745, %v1310, 0
        %v1342 = vsel %vm745, %v1311, 0
        %v1345 = vsel %vm745, %v1312, 0
        %v1348 = vsel %vm745, %v1313, 0
        %v1351 = vsel %vm745, %v1314, 0
        %v1354 = vsel %vm745, %v1315, 0
        %v1357 = vsel %vm745, %v1316, 0
        %v1360 = vsel %vm745, %v1317, 0
        %v1363 = vsel %vm745, %v1318, 0
        %v1366 = vsel %vm745, %v1319, 0
        %v1369 = vsel %vm794, %v1271, 0
        %1371 = vmatpush.bf16.msra.mxu0 0
        %1372 = vmatpush.bf16.msra.mxu0 0
        %1373 = vmatpush.bf16.msra.mxu0 0
        %1374 = vmatpush.bf16.msra.mxu0 0
        %1375 = vmatpush.bf16.msra.mxu0 0
        %1376 = vmatpush.bf16.msra.mxu0 0
        %1377 = vmatpush.bf16.msra.mxu0 0
        %1378 = vmatpush.bf16.msra.mxu0 %v1369
        %1379 = vmatmul.bf16.gmra.mxu0 %v1321
        %v1380 = vpop.f32.mrf.mxu0
        %v1381 = vadd.f32 0.0, %v1380
        %v1382 = vpop.f32.mrf.mxu0
        %v1383 = vadd.f32 0.0, %v1382
        %1384 = vmatmul.bf16.gmra.mxu0 %v1324
        %v1385 = vpop.f32.mrf.mxu0
        %v1386 = vadd.f32 0.0, %v1385
        %v1387 = vpop.f32.mrf.mxu0
        %v1388 = vadd.f32 0.0, %v1387
        %1389 = vmatmul.bf16.gmra.mxu0 %v1327
        %v1390 = vpop.f32.mrf.mxu0
        %v1391 = vadd.f32 0.0, %v1390
        %v1392 = vpop.f32.mrf.mxu0
        %v1393 = vadd.f32 0.0, %v1392
        %1394 = vmatmul.bf16.gmra.mxu0 %v1330
        %v1395 = vpop.f32.mrf.mxu0
        %v1396 = vadd.f32 0.0, %v1395
        %v1397 = vpop.f32.mrf.mxu0
        %v1398 = vadd.f32 0.0, %v1397
        %1399 = vmatmul.bf16.gmra.mxu0 %v1333
        %v1400 = vpop.f32.mrf.mxu0
        %v1401 = vadd.f32 0.0, %v1400
        %v1402 = vpop.f32.mrf.mxu0
        %v1403 = vadd.f32 0.0, %v1402
        %1404 = vmatmul.bf16.gmra.mxu0 %v1336
        %v1405 = vpop.f32.mrf.mxu0
        %v1406 = vadd.f32 0.0, %v1405
        %v1407 = vpop.f32.mrf.mxu0
        %v1408 = vadd.f32 0.0, %v1407
        %1409 = vmatmul.bf16.gmra.mxu0 %v1339
        %v1410 = vpop.f32.mrf.mxu0
        %v1411 = vadd.f32 0.0, %v1410
        %v1412 = vpop.f32.mrf.mxu0
        %v1413 = vadd.f32 0.0, %v1412
        %1414 = vmatmul.bf16.gmra.mxu0 %v1342
        %v1415 = vpop.f32.mrf.mxu0
        %v1416 = vadd.f32 0.0, %v1415
        %v1417 = vpop.f32.mrf.mxu0
        %v1418 = vadd.f32 0.0, %v1417
        %1419 = vmatmul.bf16.gmra.mxu0 %v1345
        %v1420 = vpop.f32.mrf.mxu0
        %v1421 = vadd.f32 0.0, %v1420
        %v1422 = vpop.f32.mrf.mxu0
        %v1423 = vadd.f32 0.0, %v1422
        %1424 = vmatmul.bf16.gmra.mxu0 %v1348
        %v1425 = vpop.f32.mrf.mxu0
        %v1426 = vadd.f32 0.0, %v1425
        %v1427 = vpop.f32.mrf.mxu0
        %v1428 = vadd.f32 0.0, %v1427
        %1429 = vmatmul.bf16.gmra.mxu0 %v1351
        %v1430 = vpop.f32.mrf.mxu0
        %v1431 = vadd.f32 0.0, %v1430
        %v1432 = vpop.f32.mrf.mxu0
        %v1433 = vadd.f32 0.0, %v1432
        %1434 = vmatmul.bf16.gmra.mxu0 %v1354
        %v1435 = vpop.f32.mrf.mxu0
        %v1436 = vadd.f32 0.0, %v1435
        %v1437 = vpop.f32.mrf.mxu0
        %v1438 = vadd.f32 0.0, %v1437
        %1439 = vmatmul.bf16.gmra.mxu0 %v1357
        %v1440 = vpop.f32.mrf.mxu0
        %v1441 = vadd.f32 0.0, %v1440
        %v1442 = vpop.f32.mrf.mxu0
        %v1443 = vadd.f32 0.0, %v1442
        %1444 = vmatmul.bf16.gmra.mxu0 %v1360
        %v1445 = vpop.f32.mrf.mxu0
        %v1446 = vadd.f32 0.0, %v1445
        %v1447 = vpop.f32.mrf.mxu0
        %v1448 = vadd.f32 0.0, %v1447
        %1449 = vmatmul.bf16.gmra.mxu0 %v1363
        %v1450 = vpop.f32.mrf.mxu0
        %v1451 = vadd.f32 0.0, %v1450
        %v1452 = vpop.f32.mrf.mxu0
        %v1453 = vadd.f32 0.0, %v1452
        %1454 = vmatmul.bf16.gmra.mxu0 %v1366
        %v1455 = vpop.f32.mrf.mxu0
        %v1456 = vadd.f32 0.0, %v1455
        %v1457 = vpop.f32.mrf.mxu0
        %v1458 = vadd.f32 0.0, %v1457
        %1459 = vdwg.mxu0
        %v1460 = vadd.f32 %v1028, %v1381
        %v1461 = vadd.f32 %v1030, %v1383
        %v1462 = vadd.f32 %v1033, %v1386
        %v1463 = vadd.f32 %v1035, %v1388
        %v1464 = vadd.f32 %v1038, %v1391
        %v1465 = vadd.f32 %v1040, %v1393
        %v1466 = vadd.f32 %v1043, %v1396
        %v1467 = vadd.f32 %v1045, %v1398
        %v1468 = vadd.f32 %v1048, %v1401
        %v1469 = vadd.f32 %v1050, %v1403
        %v1470 = vadd.f32 %v1053, %v1406
        %v1471 = vadd.f32 %v1055, %v1408
        %v1472 = vadd.f32 %v1058, %v1411
        %v1473 = vadd.f32 %v1060, %v1413
        %v1474 = vadd.f32 %v1063, %v1416
        %v1475 = vadd.f32 %v1065, %v1418
        %v1476 = vadd.f32 %v1068, %v1421
        %v1477 = vadd.f32 %v1070, %v1423
        %v1478 = vadd.f32 %v1073, %v1426
        %v1479 = vadd.f32 %v1075, %v1428
        %v1480 = vadd.f32 %v1078, %v1431
        %v1481 = vadd.f32 %v1080, %v1433
        %v1482 = vadd.f32 %v1083, %v1436
        %v1483 = vadd.f32 %v1085, %v1438
        %v1484 = vadd.f32 %v1088, %v1441
        %v1485 = vadd.f32 %v1090, %v1443
        %v1486 = vadd.f32 %v1093, %v1446
        %v1487 = vadd.f32 %v1095, %v1448
        %v1488 = vadd.f32 %v1098, %v1451
        %v1489 = vadd.f32 %v1100, %v1453
        %v1490 = vadd.f32 %v1103, %v1456
        %v1491 = vadd.f32 %v1105, %v1458
        %s1492 = scalar_lea.vmem %s254, 12
        %v1493 = vld [vmem:[%s1492] sm:$0xf]
        %v1494 = vld [vmem:[%s1492 + $0x4] sm:$0xf]
        %v1495 = vld [vmem:[%s1492 + $0xc] sm:$0xf]
        %v1496 = vld [vmem:[%s1492 + $0x10] sm:$0xf]
        %v1497 = vld [vmem:[%s1492 + $0x18] sm:$0xf]
        %v1498 = vld [vmem:[%s1492 + $0x1c] sm:$0xf]
        %v1499 = vld [vmem:[%s1492 + $0x24] sm:$0xf]
        %v1500 = vld [vmem:[%s1492 + $0x28] sm:$0xf]
        %v1501 = vld [vmem:[%s1492 + $0x30] sm:$0xf]
        %v1502 = vld [vmem:[%s1492 + $0x34] sm:$0xf]
        %v1503 = vld [vmem:[%s1492 + $0x3c] sm:$0xf]
        %v1504 = vld [vmem:[%s1492 + $0x40] sm:$0xf]
        %v1505 = vld [vmem:[%s1492 + $0x48] sm:$0xf]
        %v1506 = vld [vmem:[%s1492 + $0x4c] sm:$0xf]
        %v1507 = vld [vmem:[%s1492 + $0x54] sm:$0xf]
        %v1508 = vld [vmem:[%s1492 + $0x58] sm:$0xf]
        %v1509 = vld [vmem:[%s1492 + $0x60] sm:$0xf]
        %v1510 = vld [vmem:[%s1492 + $0x64] sm:$0xf]
        %v1511 = vld [vmem:[%s1492 + $0x6c] sm:$0xf]
        %v1512 = vld [vmem:[%s1492 + $0x70] sm:$0xf]
        %v1513 = vld [vmem:[%s1492 + $0x78] sm:$0xf]
        %v1514 = vld [vmem:[%s1492 + $0x7c] sm:$0xf]
        %v1515 = vld [vmem:[%s1492 + $0x84] sm:$0xf]
        %v1516 = vld [vmem:[%s1492 + $0x88] sm:$0xf]
        %v1517 = vld [vmem:[%s1492 + $0x90] sm:$0xf]
        %v1518 = vld [vmem:[%s1492 + $0x94] sm:$0xf]
        %v1519 = vld [vmem:[%s1492 + $0x9c] sm:$0xf]
        %v1520 = vld [vmem:[%s1492 + $0xa0] sm:$0xf]
        %v1521 = vld [vmem:[%s1492 + $0xa8] sm:$0xf]
        %v1522 = vld [vmem:[%s1492 + $0xac] sm:$0xf]
        %v1523 = vld [vmem:[%s1492 + $0xb4] sm:$0xf]
        %v1524 = vld [vmem:[%s1492 + $0xb8] sm:$0xf]
        %s1525 = scalar_lea.vmem %s1, 6
        %v1526 = vld [vmem:[%s1525] sm:$0x3]
        %v1559 = vunpack.c.l.b16 %v1493
        %v1560 = vunpack.c.l.b16 %v1494
        %v1561 = vunpack.c.l.b16 %v1495
        %v1562 = vunpack.c.l.b16 %v1496
        %v1563 = vunpack.c.l.b16 %v1497
        %v1564 = vunpack.c.l.b16 %v1498
        %v1565 = vunpack.c.l.b16 %v1499
        %v1566 = vunpack.c.l.b16 %v1500
        %v1567 = vunpack.c.l.b16 %v1501
        %v1568 = vunpack.c.l.b16 %v1502
        %v1569 = vunpack.c.l.b16 %v1503
        %v1570 = vunpack.c.l.b16 %v1504
        %v1571 = vunpack.c.l.b16 %v1505
        %v1572 = vunpack.c.l.b16 %v1506
        %v1573 = vunpack.c.l.b16 %v1507
        %v1574 = vunpack.c.l.b16 %v1508
        %v1575 = vunpack.c.l.b16 %v1509
        %v1576 = vunpack.c.l.b16 %v1510
        %v1577 = vunpack.c.l.b16 %v1511
        %v1578 = vunpack.c.l.b16 %v1512
        %v1579 = vunpack.c.l.b16 %v1513
        %v1580 = vunpack.c.l.b16 %v1514
        %v1581 = vunpack.c.l.b16 %v1515
        %v1582 = vunpack.c.l.b16 %v1516
        %v1583 = vunpack.c.l.b16 %v1517
        %v1584 = vunpack.c.l.b16 %v1518
        %v1585 = vunpack.c.l.b16 %v1519
        %v1586 = vunpack.c.l.b16 %v1520
        %v1587 = vunpack.c.l.b16 %v1521
        %v1588 = vunpack.c.l.b16 %v1522
        %v1589 = vunpack.c.l.b16 %v1523
        %v1590 = vunpack.c.l.b16 %v1524
        %v1591 = vpack.c.b16 %v1560, %v1559
        %v1592 = vpack.c.b16 %v1562, %v1561
        %v1593 = vpack.c.b16 %v1564, %v1563
        %v1594 = vpack.c.b16 %v1566, %v1565
        %v1595 = vpack.c.b16 %v1568, %v1567
        %v1596 = vpack.c.b16 %v1570, %v1569
        %v1597 = vpack.c.b16 %v1572, %v1571
        %v1598 = vpack.c.b16 %v1574, %v1573
        %v1599 = vpack.c.b16 %v1576, %v1575
        %v1600 = vpack.c.b16 %v1578, %v1577
        %v1601 = vpack.c.b16 %v1580, %v1579
        %v1602 = vpack.c.b16 %v1582, %v1581
        %v1603 = vpack.c.b16 %v1584, %v1583
        %v1604 = vpack.c.b16 %v1586, %v1585
        %v1605 = vpack.c.b16 %v1588, %v1587
        %v1606 = vpack.c.b16 %v1590, %v1589
        %v1608 = vsel %vm745, %v1591, 0
        %v1611 = vsel %vm745, %v1592, 0
        %v1614 = vsel %vm745, %v1593, 0
        %v1617 = vsel %vm745, %v1594, 0
        %v1620 = vsel %vm745, %v1595, 0
        %v1623 = vsel %vm745, %v1596, 0
        %v1626 = vsel %vm745, %v1597, 0
        %v1629 = vsel %vm745, %v1598, 0
        %v1632 = vsel %vm745, %v1599, 0
        %v1635 = vsel %vm745, %v1600, 0
        %v1638 = vsel %vm745, %v1601, 0
        %v1641 = vsel %vm745, %v1602, 0
        %v1644 = vsel %vm745, %v1603, 0
        %v1647 = vsel %vm745, %v1604, 0
        %v1650 = vsel %vm745, %v1605, 0
        %v1653 = vsel %vm745, %v1606, 0
        %v1656 = vsel %vm794, %v1526, 0
        %1658 = vmatpush.bf16.msra.mxu0 0
        %1659 = vmatpush.bf16.msra.mxu0 0
        %1660 = vmatpush.bf16.msra.mxu0 0
        %1661 = vmatpush.bf16.msra.mxu0 0
        %1662 = vmatpush.bf16.msra.mxu0 0
        %1663 = vmatpush.bf16.msra.mxu0 0
        %1664 = vmatpush.bf16.msra.mxu0 0
        %1665 = vmatpush.bf16.msra.mxu0 %v1656
        %1666 = vmatmul.bf16.gmra.mxu0 %v1608
        %v1667 = vpop.f32.mrf.mxu0
        %v1668 = vadd.f32 0.0, %v1667
        %v1669 = vpop.f32.mrf.mxu0
        %v1670 = vadd.f32 0.0, %v1669
        %1671 = vmatmul.bf16.gmra.mxu0 %v1611
        %v1672 = vpop.f32.mrf.mxu0
        %v1673 = vadd.f32 0.0, %v1672
        %v1674 = vpop.f32.mrf.mxu0
        %v1675 = vadd.f32 0.0, %v1674
        %1676 = vmatmul.bf16.gmra.mxu0 %v1614
        %v1677 = vpop.f32.mrf.mxu0
        %v1678 = vadd.f32 0.0, %v1677
        %v1679 = vpop.f32.mrf.mxu0
        %v1680 = vadd.f32 0.0, %v1679
        %1681 = vmatmul.bf16.gmra.mxu0 %v1617
        %v1682 = vpop.f32.mrf.mxu0
        %v1683 = vadd.f32 0.0, %v1682
        %v1684 = vpop.f32.mrf.mxu0
        %v1685 = vadd.f32 0.0, %v1684
        %1686 = vmatmul.bf16.gmra.mxu0 %v1620
        %v1687 = vpop.f32.mrf.mxu0
        %v1688 = vadd.f32 0.0, %v1687
        %v1689 = vpop.f32.mrf.mxu0
        %v1690 = vadd.f32 0.0, %v1689
        %1691 = vmatmul.bf16.gmra.mxu0 %v1623
        %v1692 = vpop.f32.mrf.mxu0
        %v1693 = vadd.f32 0.0, %v1692
        %v1694 = vpop.f32.mrf.mxu0
        %v1695 = vadd.f32 0.0, %v1694
        %1696 = vmatmul.bf16.gmra.mxu0 %v1626
        %v1697 = vpop.f32.mrf.mxu0
        %v1698 = vadd.f32 0.0, %v1697
        %v1699 = vpop.f32.mrf.mxu0
        %v1700 = vadd.f32 0.0, %v1699
        %1701 = vmatmul.bf16.gmra.mxu0 %v1629
        %v1702 = vpop.f32.mrf.mxu0
        %v1703 = vadd.f32 0.0, %v1702
        %v1704 = vpop.f32.mrf.mxu0
        %v1705 = vadd.f32 0.0, %v1704
        %1706 = vmatmul.bf16.gmra.mxu0 %v1632
        %v1707 = vpop.f32.mrf.mxu0
        %v1708 = vadd.f32 0.0, %v1707
        %v1709 = vpop.f32.mrf.mxu0
        %v1710 = vadd.f32 0.0, %v1709
        %1711 = vmatmul.bf16.gmra.mxu0 %v1635
        %v1712 = vpop.f32.mrf.mxu0
        %v1713 = vadd.f32 0.0, %v1712
        %v1714 = vpop.f32.mrf.mxu0
        %v1715 = vadd.f32 0.0, %v1714
        %1716 = vmatmul.bf16.gmra.mxu0 %v1638
        %v1717 = vpop.f32.mrf.mxu0
        %v1718 = vadd.f32 0.0, %v1717
        %v1719 = vpop.f32.mrf.mxu0
        %v1720 = vadd.f32 0.0, %v1719
        %1721 = vmatmul.bf16.gmra.mxu0 %v1641
        %v1722 = vpop.f32.mrf.mxu0
        %v1723 = vadd.f32 0.0, %v1722
        %v1724 = vpop.f32.mrf.mxu0
        %v1725 = vadd.f32 0.0, %v1724
        %1726 = vmatmul.bf16.gmra.mxu0 %v1644
        %v1727 = vpop.f32.mrf.mxu0
        %v1728 = vadd.f32 0.0, %v1727
        %v1729 = vpop.f32.mrf.mxu0
        %v1730 = vadd.f32 0.0, %v1729
        %1731 = vmatmul.bf16.gmra.mxu0 %v1647
        %v1732 = vpop.f32.mrf.mxu0
        %v1733 = vadd.f32 0.0, %v1732
        %v1734 = vpop.f32.mrf.mxu0
        %v1735 = vadd.f32 0.0, %v1734
        %1736 = vmatmul.bf16.gmra.mxu0 %v1650
        %v1737 = vpop.f32.mrf.mxu0
        %v1738 = vadd.f32 0.0, %v1737
        %v1739 = vpop.f32.mrf.mxu0
        %v1740 = vadd.f32 0.0, %v1739
        %1741 = vmatmul.bf16.gmra.mxu0 %v1653
        %v1742 = vpop.f32.mrf.mxu0
        %v1743 = vadd.f32 0.0, %v1742
        %v1744 = vpop.f32.mrf.mxu0
        %v1745 = vadd.f32 0.0, %v1744
        %1746 = vdwg.mxu0
        %v1747 = vadd.f32 %v1460, %v1668
        %v1748 = vadd.f32 %v1461, %v1670
        %v1749 = vadd.f32 %v1462, %v1673
        %v1750 = vadd.f32 %v1463, %v1675
        %v1751 = vadd.f32 %v1464, %v1678
        %v1752 = vadd.f32 %v1465, %v1680
        %v1753 = vadd.f32 %v1466, %v1683
        %v1754 = vadd.f32 %v1467, %v1685
        %v1755 = vadd.f32 %v1468, %v1688
        %v1756 = vadd.f32 %v1469, %v1690
        %v1757 = vadd.f32 %v1470, %v1693
        %v1758 = vadd.f32 %v1471, %v1695
        %v1759 = vadd.f32 %v1472, %v1698
        %v1760 = vadd.f32 %v1473, %v1700
        %v1761 = vadd.f32 %v1474, %v1703
        %v1762 = vadd.f32 %v1475, %v1705
        %v1763 = vadd.f32 %v1476, %v1708
        %v1764 = vadd.f32 %v1477, %v1710
        %v1765 = vadd.f32 %v1478, %v1713
        %v1766 = vadd.f32 %v1479, %v1715
        %v1767 = vadd.f32 %v1480, %v1718
        %v1768 = vadd.f32 %v1481, %v1720
        %v1769 = vadd.f32 %v1482, %v1723
        %v1770 = vadd.f32 %v1483, %v1725
        %v1771 = vadd.f32 %v1484, %v1728
        %v1772 = vadd.f32 %v1485, %v1730
        %v1773 = vadd.f32 %v1486, %v1733
        %v1774 = vadd.f32 %v1487, %v1735
        %v1775 = vadd.f32 %v1488, %v1738
        %v1776 = vadd.f32 %v1489, %v1740
        %v1777 = vadd.f32 %v1490, %v1743
        %v1778 = vadd.f32 %v1491, %v1745
        %v1779 = vld [vmem:[%s1492] sm:$0xf]
        %v1780 = vld [vmem:[%s1492 + $0x4] sm:$0xf]
        %v1781 = vld [vmem:[%s1492 + $0x8] sm:$0x1]
        %v1782 = vld [vmem:[%s1492 + $0xc] sm:$0xf]
        %v1783 = vld [vmem:[%s1492 + $0x10] sm:$0xf]
        %v1784 = vld [vmem:[%s1492 + $0x14] sm:$0x1]
        %v1785 = vld [vmem:[%s1492 + $0x18] sm:$0xf]
        %v1786 = vld [vmem:[%s1492 + $0x1c] sm:$0xf]
        %v1787 = vld [vmem:[%s1492 + $0x20] sm:$0x1]
        %v1788 = vld [vmem:[%s1492 + $0x24] sm:$0xf]
        %v1789 = vld [vmem:[%s1492 + $0x28] sm:$0xf]
        %v1790 = vld [vmem:[%s1492 + $0x2c] sm:$0x1]
        %v1791 = vld [vmem:[%s1492 + $0x30] sm:$0xf]
        %v1792 = vld [vmem:[%s1492 + $0x34] sm:$0xf]
        %v1793 = vld [vmem:[%s1492 + $0x38] sm:$0x1]
        %v1794 = vld [vmem:[%s1492 + $0x3c] sm:$0xf]
        %v1795 = vld [vmem:[%s1492 + $0x40] sm:$0xf]
        %v1796 = vld [vmem:[%s1492 + $0x44] sm:$0x1]
        %v1797 = vld [vmem:[%s1492 + $0x48] sm:$0xf]
        %v1798 = vld [vmem:[%s1492 + $0x4c] sm:$0xf]
        %v1799 = vld [vmem:[%s1492 + $0x50] sm:$0x1]
        %v1800 = vld [vmem:[%s1492 + $0x54] sm:$0xf]
        %v1801 = vld [vmem:[%s1492 + $0x58] sm:$0xf]
        %v1802 = vld [vmem:[%s1492 + $0x5c] sm:$0x1]
        %v1803 = vld [vmem:[%s1492 + $0x60] sm:$0xf]
        %v1804 = vld [vmem:[%s1492 + $0x64] sm:$0xf]
        %v1805 = vld [vmem:[%s1492 + $0x68] sm:$0x1]
        %v1806 = vld [vmem:[%s1492 + $0x6c] sm:$0xf]
        %v1807 = vld [vmem:[%s1492 + $0x70] sm:$0xf]
        %v1808 = vld [vmem:[%s1492 + $0x74] sm:$0x1]
        %v1809 = vld [vmem:[%s1492 + $0x78] sm:$0xf]
        %v1810 = vld [vmem:[%s1492 + $0x7c] sm:$0xf]
        %v1811 = vld [vmem:[%s1492 + $0x80] sm:$0x1]
        %v1812 = vld [vmem:[%s1492 + $0x84] sm:$0xf]
        %v1813 = vld [vmem:[%s1492 + $0x88] sm:$0xf]
        %v1814 = vld [vmem:[%s1492 + $0x8c] sm:$0x1]
        %v1815 = vld [vmem:[%s1492 + $0x90] sm:$0xf]
        %v1816 = vld [vmem:[%s1492 + $0x94] sm:$0xf]
        %v1817 = vld [vmem:[%s1492 + $0x98] sm:$0x1]
        %v1818 = vld [vmem:[%s1492 + $0x9c] sm:$0xf]
        %v1819 = vld [vmem:[%s1492 + $0xa0] sm:$0xf]
        %v1820 = vld [vmem:[%s1492 + $0xa4] sm:$0x1]
        %v1821 = vld [vmem:[%s1492 + $0xa8] sm:$0xf]
        %v1822 = vld [vmem:[%s1492 + $0xac] sm:$0xf]
        %v1823 = vld [vmem:[%s1492 + $0xb0] sm:$0x1]
        %v1824 = vld [vmem:[%s1492 + $0xb4] sm:$0xf]
        %v1825 = vld [vmem:[%s1492 + $0xb8] sm:$0xf]
        %v1826 = vld [vmem:[%s1492 + $0xbc] sm:$0x1]
        %v1828 = vshrl.u32 %v1779, 16
        %v1830 = vrot.slane %v1828, 4
        %v1831 = vshll.u32 %v1779, 16
        %v1833 = vrot.slane %v1831, 5
        %v1834 = vor.u32 %v1830, %v1833
        %v1835 = vrot.slane %v1834, 4
        %v1837 = vshll.u32 %v1780, 16
        %v1839 = vrot.slane %v1837, 5
        %v1840 = vsel %vm310, %v1835, %v1839
        %v1841 = vshrl.u32 %v1780, 16
        %v1843 = vrot.slane %v1841, 4
        %v1844 = vor.u32 %v1843, %v1839
        %v1845 = vrot.slane %v1844, 4
        %v1847 = vshll.u32 %v1781, 16
        %v1849 = vrot.slane %v1847, 5
        %v1850 = vsel %vm310, %v1845, %v1849
        %v1852 = vshrl.u32 %v1782, 16
        %v1854 = vrot.slane %v1852, 4
        %v1855 = vshll.u32 %v1782, 16
        %v1857 = vrot.slane %v1855, 5
        %v1858 = vor.u32 %v1854, %v1857
        %v1859 = vrot.slane %v1858, 4
        %v1861 = vshll.u32 %v1783, 16
        %v1863 = vrot.slane %v1861, 5
        %v1864 = vsel %vm310, %v1859, %v1863
        %v1865 = vshrl.u32 %v1783, 16
        %v1867 = vrot.slane %v1865, 4
        %v1868 = vor.u32 %v1867, %v1863
        %v1869 = vrot.slane %v1868, 4
        %v1871 = vshll.u32 %v1784, 16
        %v1873 = vrot.slane %v1871, 5
        %v1874 = vsel %vm310, %v1869, %v1873
        %v1876 = vshrl.u32 %v1785, 16
        %v1878 = vrot.slane %v1876, 4
        %v1879 = vshll.u32 %v1785, 16
        %v1881 = vrot.slane %v1879, 5
        %v1882 = vor.u32 %v1878, %v1881
        %v1883 = vrot.slane %v1882, 4
        %v1885 = vshll.u32 %v1786, 16
        %v1887 = vrot.slane %v1885, 5
        %v1888 = vsel %vm310, %v1883, %v1887
        %v1889 = vshrl.u32 %v1786, 16
        %v1891 = vrot.slane %v1889, 4
        %v1892 = vor.u32 %v1891, %v1887
        %v1893 = vrot.slane %v1892, 4
        %v1895 = vshll.u32 %v1787, 16
        %v1897 = vrot.slane %v1895, 5
        %v1898 = vsel %vm310, %v1893, %v1897
        %v1900 = vshrl.u32 %v1788, 16
        %v1902 = vrot.slane %v1900, 4
        %v1903 = vshll.u32 %v1788, 16
        %v1905 = vrot.slane %v1903, 5
        %v1906 = vor.u32 %v1902, %v1905
        %v1907 = vrot.slane %v1906, 4
        %v1909 = vshll.u32 %v1789, 16
        %v1911 = vrot.slane %v1909, 5
        %v1912 = vsel %vm310, %v1907, %v1911
        %v1913 = vshrl.u32 %v1789, 16
        %v1915 = vrot.slane %v1913, 4
        %v1916 = vor.u32 %v1915, %v1911
        %v1917 = vrot.slane %v1916, 4
        %v1919 = vshll.u32 %v1790, 16
        %v1921 = vrot.slane %v1919, 5
        %v1922 = vsel %vm310, %v1917, %v1921
        %v1924 = vshrl.u32 %v1791, 16
        %v1926 = vrot.slane %v1924, 4
        %v1927 = vshll.u32 %v1791, 16
        %v1929 = vrot.slane %v1927, 5
        %v1930 = vor.u32 %v1926, %v1929
        %v1931 = vrot.slane %v1930, 4
        %v1933 = vshll.u32 %v1792, 16
        %v1935 = vrot.slane %v1933, 5
        %v1936 = vsel %vm310, %v1931, %v1935
        %v1937 = vshrl.u32 %v1792, 16
        %v1939 = vrot.slane %v1937, 4
        %v1940 = vor.u32 %v1939, %v1935
        %v1941 = vrot.slane %v1940, 4
        %v1943 = vshll.u32 %v1793, 16
        %v1945 = vrot.slane %v1943, 5
        %v1946 = vsel %vm310, %v1941, %v1945
        %v1948 = vshrl.u32 %v1794, 16
        %v1950 = vrot.slane %v1948, 4
        %v1951 = vshll.u32 %v1794, 16
        %v1953 = vrot.slane %v1951, 5
        %v1954 = vor.u32 %v1950, %v1953
        %v1955 = vrot.slane %v1954, 4
        %v1957 = vshll.u32 %v1795, 16
        %v1959 = vrot.slane %v1957, 5
        %v1960 = vsel %vm310, %v1955, %v1959
        %v1961 = vshrl.u32 %v1795, 16
        %v1963 = vrot.slane %v1961, 4
        %v1964 = vor.u32 %v1963, %v1959
        %v1965 = vrot.slane %v1964, 4
        %v1967 = vshll.u32 %v1796, 16
        %v1969 = vrot.slane %v1967, 5
        %v1970 = vsel %vm310, %v1965, %v1969
        %v1972 = vshrl.u32 %v1797, 16
        %v1974 = vrot.slane %v1972, 4
        %v1975 = vshll.u32 %v1797, 16
        %v1977 = vrot.slane %v1975, 5
        %v1978 = vor.u32 %v1974, %v1977
        %v1979 = vrot.slane %v1978, 4
        %v1981 = vshll.u32 %v1798, 16
        %v1983 = vrot.slane %v1981, 5
        %v1984 = vsel %vm310, %v1979, %v1983
        %v1985 = vshrl.u32 %v1798, 16
        %v1987 = vrot.slane %v1985, 4
        %v1988 = vor.u32 %v1987, %v1983
        %v1989 = vrot.slane %v1988, 4
        %v1991 = vshll.u32 %v1799, 16
        %v1993 = vrot.slane %v1991, 5
        %v1994 = vsel %vm310, %v1989, %v1993
        %v1996 = vshrl.u32 %v1800, 16
        %v1998 = vrot.slane %v1996, 4
        %v1999 = vshll.u32 %v1800, 16
        %v2001 = vrot.slane %v1999, 5
        %v2002 = vor.u32 %v1998, %v2001
        %v2003 = vrot.slane %v2002, 4
        %v2005 = vshll.u32 %v1801, 16
        %v2007 = vrot.slane %v2005, 5
        %v2008 = vsel %vm310, %v2003, %v2007
        %v2009 = vshrl.u32 %v1801, 16
        %v2011 = vrot.slane %v2009, 4
        %v2012 = vor.u32 %v2011, %v2007
        %v2013 = vrot.slane %v2012, 4
        %v2015 = vshll.u32 %v1802, 16
        %v2017 = vrot.slane %v2015, 5
        %v2018 = vsel %vm310, %v2013, %v2017
        %v2020 = vshrl.u32 %v1803, 16
        %v2022 = vrot.slane %v2020, 4
        %v2023 = vshll.u32 %v1803, 16
        %v2025 = vrot.slane %v2023, 5
        %v2026 = vor.u32 %v2022, %v2025
        %v2027 = vrot.slane %v2026, 4
        %v2029 = vshll.u32 %v1804, 16
        %v2031 = vrot.slane %v2029, 5
        %v2032 = vsel %vm310, %v2027, %v2031
        %v2033 = vshrl.u32 %v1804, 16
        %v2035 = vrot.slane %v2033, 4
        %v2036 = vor.u32 %v2035, %v2031
        %v2037 = vrot.slane %v2036, 4
        %v2039 = vshll.u32 %v1805, 16
        %v2041 = vrot.slane %v2039, 5
        %v2042 = vsel %vm310, %v2037, %v2041
        %v2044 = vshrl.u32 %v1806, 16
        %v2046 = vrot.slane %v2044, 4
        %v2047 = vshll.u32 %v1806, 16
        %v2049 = vrot.slane %v2047, 5
        %v2050 = vor.u32 %v2046, %v2049
        %v2051 = vrot.slane %v2050, 4
        %v2053 = vshll.u32 %v1807, 16
        %v2055 = vrot.slane %v2053, 5
        %v2056 = vsel %vm310, %v2051, %v2055
        %v2057 = vshrl.u32 %v1807, 16
        %v2059 = vrot.slane %v2057, 4
        %v2060 = vor.u32 %v2059, %v2055
        %v2061 = vrot.slane %v2060, 4
        %v2063 = vshll.u32 %v1808, 16
        %v2065 = vrot.slane %v2063, 5
        %v2066 = vsel %vm310, %v2061, %v2065
        %v2068 = vshrl.u32 %v1809, 16
        %v2070 = vrot.slane %v2068, 4
        %v2071 = vshll.u32 %v1809, 16
        %v2073 = vrot.slane %v2071, 5
        %v2074 = vor.u32 %v2070, %v2073
        %v2075 = vrot.slane %v2074, 4
        %v2077 = vshll.u32 %v1810, 16
        %v2079 = vrot.slane %v2077, 5
        %v2080 = vsel %vm310, %v2075, %v2079
        %v2081 = vshrl.u32 %v1810, 16
        %v2083 = vrot.slane %v2081, 4
        %v2084 = vor.u32 %v2083, %v2079
        %v2085 = vrot.slane %v2084, 4
        %v2087 = vshll.u32 %v1811, 16
        %v2089 = vrot.slane %v2087, 5
        %v2090 = vsel %vm310, %v2085, %v2089
        %v2092 = vshrl.u32 %v1812, 16
        %v2094 = vrot.slane %v2092, 4
        %v2095 = vshll.u32 %v1812, 16
        %v2097 = vrot.slane %v2095, 5
        %v2098 = vor.u32 %v2094, %v2097
        %v2099 = vrot.slane %v2098, 4
        %v2101 = vshll.u32 %v1813, 16
        %v2103 = vrot.slane %v2101, 5
        %v2104 = vsel %vm310, %v2099, %v2103
        %v2105 = vshrl.u32 %v1813, 16
        %v2107 = vrot.slane %v2105, 4
        %v2108 = vor.u32 %v2107, %v2103
        %v2109 = vrot.slane %v2108, 4
        %v2111 = vshll.u32 %v1814, 16
        %v2113 = vrot.slane %v2111, 5
        %v2114 = vsel %vm310, %v2109, %v2113
        %v2116 = vshrl.u32 %v1815, 16
        %v2118 = vrot.slane %v2116, 4
        %v2119 = vshll.u32 %v1815, 16
        %v2121 = vrot.slane %v2119, 5
        %v2122 = vor.u32 %v2118, %v2121
        %v2123 = vrot.slane %v2122, 4
        %v2125 = vshll.u32 %v1816, 16
        %v2127 = vrot.slane %v2125, 5
        %v2128 = vsel %vm310, %v2123, %v2127
        %v2129 = vshrl.u32 %v1816, 16
        %v2131 = vrot.slane %v2129, 4
        %v2132 = vor.u32 %v2131, %v2127
        %v2133 = vrot.slane %v2132, 4
        %v2135 = vshll.u32 %v1817, 16
        %v2137 = vrot.slane %v2135, 5
        %v2138 = vsel %vm310, %v2133, %v2137
        %v2140 = vshrl.u32 %v1818, 16
        %v2142 = vrot.slane %v2140, 4
        %v2143 = vshll.u32 %v1818, 16
        %v2145 = vrot.slane %v2143, 5
        %v2146 = vor.u32 %v2142, %v2145
        %v2147 = vrot.slane %v2146, 4
        %v2149 = vshll.u32 %v1819, 16
        %v2151 = vrot.slane %v2149, 5
        %v2152 = vsel %vm310, %v2147, %v2151
        %v2153 = vshrl.u32 %v1819, 16
        %v2155 = vrot.slane %v2153, 4
        %v2156 = vor.u32 %v2155, %v2151
        %v2157 = vrot.slane %v2156, 4
        %v2159 = vshll.u32 %v1820, 16
        %v2161 = vrot.slane %v2159, 5
        %v2162 = vsel %vm310, %v2157, %v2161
        %v2164 = vshrl.u32 %v1821, 16
        %v2166 = vrot.slane %v2164, 4
        %v2167 = vshll.u32 %v1821, 16
        %v2169 = vrot.slane %v2167, 5
        %v2170 = vor.u32 %v2166, %v2169
        %v2171 = vrot.slane %v2170, 4
        %v2173 = vshll.u32 %v1822, 16
        %v2175 = vrot.slane %v2173, 5
        %v2176 = vsel %vm310, %v2171, %v2175
        %v2177 = vshrl.u32 %v1822, 16
        %v2179 = vrot.slane %v2177, 4
        %v2180 = vor.u32 %v2179, %v2175
        %v2181 = vrot.slane %v2180, 4
        %v2183 = vshll.u32 %v1823, 16
        %v2185 = vrot.slane %v2183, 5
        %v2186 = vsel %vm310, %v2181, %v2185
        %v2188 = vshrl.u32 %v1824, 16
        %v2190 = vrot.slane %v2188, 4
        %v2191 = vshll.u32 %v1824, 16
        %v2193 = vrot.slane %v2191, 5
        %v2194 = vor.u32 %v2190, %v2193
        %v2195 = vrot.slane %v2194, 4
        %v2197 = vshll.u32 %v1825, 16
        %v2199 = vrot.slane %v2197, 5
        %v2200 = vsel %vm310, %v2195, %v2199
        %v2201 = vshrl.u32 %v1825, 16
        %v2203 = vrot.slane %v2201, 4
        %v2204 = vor.u32 %v2203, %v2199
        %v2205 = vrot.slane %v2204, 4
        %v2207 = vshll.u32 %v1826, 16
        %v2209 = vrot.slane %v2207, 5
        %v2210 = vsel %vm310, %v2205, %v2209
        %s2211 = scalar_lea.vmem %s1, 8
        %v2212 = vld [vmem:[%s2211] sm:$0x3]
        %v2213 = vunpack.c.l.b16 %v1840
        %v2214 = vunpack.c.l.b16 %v1850
        %v2215 = vunpack.c.l.b16 %v1864
        %v2216 = vunpack.c.l.b16 %v1874
        %v2217 = vunpack.c.l.b16 %v1888
        %v2218 = vunpack.c.l.b16 %v1898
        %v2219 = vunpack.c.l.b16 %v1912
        %v2220 = vunpack.c.l.b16 %v1922
        %v2221 = vunpack.c.l.b16 %v1936
        %v2222 = vunpack.c.l.b16 %v1946
        %v2223 = vunpack.c.l.b16 %v1960
        %v2224 = vunpack.c.l.b16 %v1970
        %v2225 = vunpack.c.l.b16 %v1984
        %v2226 = vunpack.c.l.b16 %v1994
        %v2227 = vunpack.c.l.b16 %v2008
        %v2228 = vunpack.c.l.b16 %v2018
        %v2229 = vunpack.c.l.b16 %v2032
        %v2230 = vunpack.c.l.b16 %v2042
        %v2231 = vunpack.c.l.b16 %v2056
        %v2232 = vunpack.c.l.b16 %v2066
        %v2233 = vunpack.c.l.b16 %v2080
        %v2234 = vunpack.c.l.b16 %v2090
        %v2235 = vunpack.c.l.b16 %v2104
        %v2236 = vunpack.c.l.b16 %v2114
        %v2237 = vunpack.c.l.b16 %v2128
        %v2238 = vunpack.c.l.b16 %v2138
        %v2239 = vunpack.c.l.b16 %v2152
        %v2240 = vunpack.c.l.b16 %v2162
        %v2241 = vunpack.c.l.b16 %v2176
        %v2242 = vunpack.c.l.b16 %v2186
        %v2243 = vunpack.c.l.b16 %v2200
        %v2244 = vunpack.c.l.b16 %v2210
        %v2245 = vpack.c.b16 %v2214, %v2213
        %v2246 = vpack.c.b16 %v2216, %v2215
        %v2247 = vpack.c.b16 %v2218, %v2217
        %v2248 = vpack.c.b16 %v2220, %v2219
        %v2249 = vpack.c.b16 %v2222, %v2221
        %v2250 = vpack.c.b16 %v2224, %v2223
        %v2251 = vpack.c.b16 %v2226, %v2225
        %v2252 = vpack.c.b16 %v2228, %v2227
        %v2253 = vpack.c.b16 %v2230, %v2229
        %v2254 = vpack.c.b16 %v2232, %v2231
        %v2255 = vpack.c.b16 %v2234, %v2233
        %v2256 = vpack.c.b16 %v2236, %v2235
        %v2257 = vpack.c.b16 %v2238, %v2237
        %v2258 = vpack.c.b16 %v2240, %v2239
        %v2259 = vpack.c.b16 %v2242, %v2241
        %v2260 = vpack.c.b16 %v2244, %v2243
        %v2262 = vsel %vm745, %v2245, 0
        %v2265 = vsel %vm745, %v2246, 0
        %v2268 = vsel %vm745, %v2247, 0
        %v2271 = vsel %vm745, %v2248, 0
        %v2274 = vsel %vm745, %v2249, 0
        %v2277 = vsel %vm745, %v2250, 0
        %v2280 = vsel %vm745, %v2251, 0
        %v2283 = vsel %vm745, %v2252, 0
        %v2286 = vsel %vm745, %v2253, 0
        %v2289 = vsel %vm745, %v2254, 0
        %v2292 = vsel %vm745, %v2255, 0
        %v2295 = vsel %vm745, %v2256, 0
        %v2298 = vsel %vm745, %v2257, 0
        %v2301 = vsel %vm745, %v2258, 0
        %v2304 = vsel %vm745, %v2259, 0
        %v2307 = vsel %vm745, %v2260, 0
        %v2310 = vsel %vm794, %v2212, 0
        %2312 = vmatpush.bf16.msra.mxu0 0
        %2313 = vmatpush.bf16.msra.mxu0 0
        %2314 = vmatpush.bf16.msra.mxu0 0
        %2315 = vmatpush.bf16.msra.mxu0 0
        %2316 = vmatpush.bf16.msra.mxu0 0
        %2317 = vmatpush.bf16.msra.mxu0 0
        %2318 = vmatpush.bf16.msra.mxu0 0
        %2319 = vmatpush.bf16.msra.mxu0 %v2310
        %2320 = vmatmul.bf16.gmra.mxu0 %v2262
        %v2321 = vpop.f32.mrf.mxu0
        %v2322 = vadd.f32 0.0, %v2321
        %v2323 = vpop.f32.mrf.mxu0
        %v2324 = vadd.f32 0.0, %v2323
        %2325 = vmatmul.bf16.gmra.mxu0 %v2265
        %v2326 = vpop.f32.mrf.mxu0
        %v2327 = vadd.f32 0.0, %v2326
        %v2328 = vpop.f32.mrf.mxu0
        %v2329 = vadd.f32 0.0, %v2328
        %2330 = vmatmul.bf16.gmra.mxu0 %v2268
        %v2331 = vpop.f32.mrf.mxu0
        %v2332 = vadd.f32 0.0, %v2331
        %v2333 = vpop.f32.mrf.mxu0
        %v2334 = vadd.f32 0.0, %v2333
        %2335 = vmatmul.bf16.gmra.mxu0 %v2271
        %v2336 = vpop.f32.mrf.mxu0
        %v2337 = vadd.f32 0.0, %v2336
        %v2338 = vpop.f32.mrf.mxu0
        %v2339 = vadd.f32 0.0, %v2338
        %2340 = vmatmul.bf16.gmra.mxu0 %v2274
        %v2341 = vpop.f32.mrf.mxu0
        %v2342 = vadd.f32 0.0, %v2341
        %v2343 = vpop.f32.mrf.mxu0
        %v2344 = vadd.f32 0.0, %v2343
        %2345 = vmatmul.bf16.gmra.mxu0 %v2277
        %v2346 = vpop.f32.mrf.mxu0
        %v2347 = vadd.f32 0.0, %v2346
        %v2348 = vpop.f32.mrf.mxu0
        %v2349 = vadd.f32 0.0, %v2348
        %2350 = vmatmul.bf16.gmra.mxu0 %v2280
        %v2351 = vpop.f32.mrf.mxu0
        %v2352 = vadd.f32 0.0, %v2351
        %v2353 = vpop.f32.mrf.mxu0
        %v2354 = vadd.f32 0.0, %v2353
        %2355 = vmatmul.bf16.gmra.mxu0 %v2283
        %v2356 = vpop.f32.mrf.mxu0
        %v2357 = vadd.f32 0.0, %v2356
        %v2358 = vpop.f32.mrf.mxu0
        %v2359 = vadd.f32 0.0, %v2358
        %2360 = vmatmul.bf16.gmra.mxu0 %v2286
        %v2361 = vpop.f32.mrf.mxu0
        %v2362 = vadd.f32 0.0, %v2361
        %v2363 = vpop.f32.mrf.mxu0
        %v2364 = vadd.f32 0.0, %v2363
        %2365 = vmatmul.bf16.gmra.mxu0 %v2289
        %v2366 = vpop.f32.mrf.mxu0
        %v2367 = vadd.f32 0.0, %v2366
        %v2368 = vpop.f32.mrf.mxu0
        %v2369 = vadd.f32 0.0, %v2368
        %2370 = vmatmul.bf16.gmra.mxu0 %v2292
        %v2371 = vpop.f32.mrf.mxu0
        %v2372 = vadd.f32 0.0, %v2371
        %v2373 = vpop.f32.mrf.mxu0
        %v2374 = vadd.f32 0.0, %v2373
        %2375 = vmatmul.bf16.gmra.mxu0 %v2295
        %v2376 = vpop.f32.mrf.mxu0
        %v2377 = vadd.f32 0.0, %v2376
        %v2378 = vpop.f32.mrf.mxu0
        %v2379 = vadd.f32 0.0, %v2378
        %2380 = vmatmul.bf16.gmra.mxu0 %v2298
        %v2381 = vpop.f32.mrf.mxu0
        %v2382 = vadd.f32 0.0, %v2381
        %v2383 = vpop.f32.mrf.mxu0
        %v2384 = vadd.f32 0.0, %v2383
        %2385 = vmatmul.bf16.gmra.mxu0 %v2301
        %v2386 = vpop.f32.mrf.mxu0
        %v2387 = vadd.f32 0.0, %v2386
        %v2388 = vpop.f32.mrf.mxu0
        %v2389 = vadd.f32 0.0, %v2388
        %2390 = vmatmul.bf16.gmra.mxu0 %v2304
        %v2391 = vpop.f32.mrf.mxu0
        %v2392 = vadd.f32 0.0, %v2391
        %v2393 = vpop.f32.mrf.mxu0
        %v2394 = vadd.f32 0.0, %v2393
        %2395 = vmatmul.bf16.gmra.mxu0 %v2307
        %v2396 = vpop.f32.mrf.mxu0
        %v2397 = vadd.f32 0.0, %v2396
        %v2398 = vpop.f32.mrf.mxu0
        %v2399 = vadd.f32 0.0, %v2398
        %2400 = vdwg.mxu0
        %v2401 = vadd.f32 %v1747, %v2322
        %v2402 = vadd.f32 %v1748, %v2324
        %v2403 = vadd.f32 %v1749, %v2327
        %v2404 = vadd.f32 %v1750, %v2329
        %v2405 = vadd.f32 %v1751, %v2332
        %v2406 = vadd.f32 %v1752, %v2334
        %v2407 = vadd.f32 %v1753, %v2337
        %v2408 = vadd.f32 %v1754, %v2339
        %v2409 = vadd.f32 %v1755, %v2342
        %v2410 = vadd.f32 %v1756, %v2344
        %v2411 = vadd.f32 %v1757, %v2347
        %v2412 = vadd.f32 %v1758, %v2349
        %v2413 = vadd.f32 %v1759, %v2352
        %v2414 = vadd.f32 %v1760, %v2354
        %v2415 = vadd.f32 %v1761, %v2357
        %v2416 = vadd.f32 %v1762, %v2359
        %v2417 = vadd.f32 %v1763, %v2362
        %v2418 = vadd.f32 %v1764, %v2364
        %v2419 = vadd.f32 %v1765, %v2367
        %v2420 = vadd.f32 %v1766, %v2369
        %v2421 = vadd.f32 %v1767, %v2372
        %v2422 = vadd.f32 %v1768, %v2374
        %v2423 = vadd.f32 %v1769, %v2377
        %v2424 = vadd.f32 %v1770, %v2379
        %v2425 = vadd.f32 %v1771, %v2382
        %v2426 = vadd.f32 %v1772, %v2384
        %v2427 = vadd.f32 %v1773, %v2387
        %v2428 = vadd.f32 %v1774, %v2389
        %v2429 = vadd.f32 %v1775, %v2392
        %v2430 = vadd.f32 %v1776, %v2394
        %v2431 = vadd.f32 %v1777, %v2397
        %v2432 = vadd.f32 %v1778, %v2399
        %v2433 = vld [vmem:[%s1492] sm:$0xe]
        %v2434 = vld [vmem:[%s1492 + $0xc] sm:$0xe]
        %v2435 = vld [vmem:[%s1492 + $0x18] sm:$0xe]
        %v2436 = vld [vmem:[%s1492 + $0x24] sm:$0xe]
        %v2437 = vld [vmem:[%s1492 + $0x30] sm:$0xe]
        %v2438 = vld [vmem:[%s1492 + $0x3c] sm:$0xe]
        %v2439 = vld [vmem:[%s1492 + $0x48] sm:$0xe]
        %v2440 = vld [vmem:[%s1492 + $0x54] sm:$0xe]
        %v2441 = vld [vmem:[%s1492 + $0x60] sm:$0xe]
        %v2442 = vld [vmem:[%s1492 + $0x6c] sm:$0xe]
        %v2443 = vld [vmem:[%s1492 + $0x78] sm:$0xe]
        %v2444 = vld [vmem:[%s1492 + $0x84] sm:$0xe]
        %v2445 = vld [vmem:[%s1492 + $0x90] sm:$0xe]
        %v2446 = vld [vmem:[%s1492 + $0x9c] sm:$0xe]
        %v2447 = vld [vmem:[%s1492 + $0xa8] sm:$0xe]
        %v2448 = vld [vmem:[%s1492 + $0xb4] sm:$0xe]
        %v2497 = vrot.slane %v2433, 5
        %v2498 = vrot.slane %v2497, 4
        %v2499 = vrot.slane %v1780, 5
        %v2500 = vsel %vm1157, %v2498, %v2499
        %v2501 = vrot.slane %v2499, 4
        %v2502 = vrot.slane %v1781, 5
        %v2503 = vsel %vm1157, %v2501, %v2502
        %v2504 = vrot.slane %v2434, 5
        %v2505 = vrot.slane %v2504, 4
        %v2506 = vrot.slane %v1783, 5
        %v2507 = vsel %vm1157, %v2505, %v2506
        %v2508 = vrot.slane %v2506, 4
        %v2509 = vrot.slane %v1784, 5
        %v2510 = vsel %vm1157, %v2508, %v2509
        %v2511 = vrot.slane %v2435, 5
        %v2512 = vrot.slane %v2511, 4
        %v2513 = vrot.slane %v1786, 5
        %v2514 = vsel %vm1157, %v2512, %v2513
        %v2515 = vrot.slane %v2513, 4
        %v2516 = vrot.slane %v1787, 5
        %v2517 = vsel %vm1157, %v2515, %v2516
        %v2518 = vrot.slane %v2436, 5
        %v2519 = vrot.slane %v2518, 4
        %v2520 = vrot.slane %v1789, 5
        %v2521 = vsel %vm1157, %v2519, %v2520
        %v2522 = vrot.slane %v2520, 4
        %v2523 = vrot.slane %v1790, 5
        %v2524 = vsel %vm1157, %v2522, %v2523
        %v2525 = vrot.slane %v2437, 5
        %v2526 = vrot.slane %v2525, 4
        %v2527 = vrot.slane %v1792, 5
        %v2528 = vsel %vm1157, %v2526, %v2527
        %v2529 = vrot.slane %v2527, 4
        %v2530 = vrot.slane %v1793, 5
        %v2531 = vsel %vm1157, %v2529, %v2530
        %v2532 = vrot.slane %v2438, 5
        %v2533 = vrot.slane %v2532, 4
        %v2534 = vrot.slane %v1795, 5
        %v2535 = vsel %vm1157, %v2533, %v2534
        %v2536 = vrot.slane %v2534, 4
        %v2537 = vrot.slane %v1796, 5
        %v2538 = vsel %vm1157, %v2536, %v2537
        %v2539 = vrot.slane %v2439, 5
        %v2540 = vrot.slane %v2539, 4
        %v2541 = vrot.slane %v1798, 5
        %v2542 = vsel %vm1157, %v2540, %v2541
        %v2543 = vrot.slane %v2541, 4
        %v2544 = vrot.slane %v1799, 5
        %v2545 = vsel %vm1157, %v2543, %v2544
        %v2546 = vrot.slane %v2440, 5
        %v2547 = vrot.slane %v2546, 4
        %v2548 = vrot.slane %v1801, 5
        %v2549 = vsel %vm1157, %v2547, %v2548
        %v2550 = vrot.slane %v2548, 4
        %v2551 = vrot.slane %v1802, 5
        %v2552 = vsel %vm1157, %v2550, %v2551
        %v2553 = vrot.slane %v2441, 5
        %v2554 = vrot.slane %v2553, 4
        %v2555 = vrot.slane %v1804, 5
        %v2556 = vsel %vm1157, %v2554, %v2555
        %v2557 = vrot.slane %v2555, 4
        %v2558 = vrot.slane %v1805, 5
        %v2559 = vsel %vm1157, %v2557, %v2558
        %v2560 = vrot.slane %v2442, 5
        %v2561 = vrot.slane %v2560, 4
        %v2562 = vrot.slane %v1807, 5
        %v2563 = vsel %vm1157, %v2561, %v2562
        %v2564 = vrot.slane %v2562, 4
        %v2565 = vrot.slane %v1808, 5
        %v2566 = vsel %vm1157, %v2564, %v2565
        %v2567 = vrot.slane %v2443, 5
        %v2568 = vrot.slane %v2567, 4
        %v2569 = vrot.slane %v1810, 5
        %v2570 = vsel %vm1157, %v2568, %v2569
        %v2571 = vrot.slane %v2569, 4
        %v2572 = vrot.slane %v1811, 5
        %v2573 = vsel %vm1157, %v2571, %v2572
        %v2574 = vrot.slane %v2444, 5
        %v2575 = vrot.slane %v2574, 4
        %v2576 = vrot.slane %v1813, 5
        %v2577 = vsel %vm1157, %v2575, %v2576
        %v2578 = vrot.slane %v2576, 4
        %v2579 = vrot.slane %v1814, 5
        %v2580 = vsel %vm1157, %v2578, %v2579
        %v2581 = vrot.slane %v2445, 5
        %v2582 = vrot.slane %v2581, 4
        %v2583 = vrot.slane %v1816, 5
        %v2584 = vsel %vm1157, %v2582, %v2583
        %v2585 = vrot.slane %v2583, 4
        %v2586 = vrot.slane %v1817, 5
        %v2587 = vsel %vm1157, %v2585, %v2586
        %v2588 = vrot.slane %v2446, 5
        %v2589 = vrot.slane %v2588, 4
        %v2590 = vrot.slane %v1819, 5
        %v2591 = vsel %vm1157, %v2589, %v2590
        %v2592 = vrot.slane %v2590, 4
        %v2593 = vrot.slane %v1820, 5
        %v2594 = vsel %vm1157, %v2592, %v2593
        %v2595 = vrot.slane %v2447, 5
        %v2596 = vrot.slane %v2595, 4
        %v2597 = vrot.slane %v1822, 5
        %v2598 = vsel %vm1157, %v2596, %v2597
        %v2599 = vrot.slane %v2597, 4
        %v2600 = vrot.slane %v1823, 5
        %v2601 = vsel %vm1157, %v2599, %v2600
        %v2602 = vrot.slane %v2448, 5
        %v2603 = vrot.slane %v2602, 4
        %v2604 = vrot.slane %v1825, 5
        %v2605 = vsel %vm1157, %v2603, %v2604
        %v2606 = vrot.slane %v2604, 4
        %v2607 = vrot.slane %v1826, 5
        %v2608 = vsel %vm1157, %v2606, %v2607
        %s2609 = scalar_lea.vmem %s1, 10
        %v2610 = vld [vmem:[%s2609] sm:$0x3]
        %v2611 = vunpack.c.l.b16 %v2500
        %v2612 = vunpack.c.l.b16 %v2503
        %v2613 = vunpack.c.l.b16 %v2507
        %v2614 = vunpack.c.l.b16 %v2510
        %v2615 = vunpack.c.l.b16 %v2514
        %v2616 = vunpack.c.l.b16 %v2517
        %v2617 = vunpack.c.l.b16 %v2521
        %v2618 = vunpack.c.l.b16 %v2524
        %v2619 = vunpack.c.l.b16 %v2528
        %v2620 = vunpack.c.l.b16 %v2531
        %v2621 = vunpack.c.l.b16 %v2535
        %v2622 = vunpack.c.l.b16 %v2538
        %v2623 = vunpack.c.l.b16 %v2542
        %v2624 = vunpack.c.l.b16 %v2545
        %v2625 = vunpack.c.l.b16 %v2549
        %v2626 = vunpack.c.l.b16 %v2552
        %v2627 = vunpack.c.l.b16 %v2556
        %v2628 = vunpack.c.l.b16 %v2559
        %v2629 = vunpack.c.l.b16 %v2563
        %v2630 = vunpack.c.l.b16 %v2566
        %v2631 = vunpack.c.l.b16 %v2570
        %v2632 = vunpack.c.l.b16 %v2573
        %v2633 = vunpack.c.l.b16 %v2577
        %v2634 = vunpack.c.l.b16 %v2580
        %v2635 = vunpack.c.l.b16 %v2584
        %v2636 = vunpack.c.l.b16 %v2587
        %v2637 = vunpack.c.l.b16 %v2591
        %v2638 = vunpack.c.l.b16 %v2594
        %v2639 = vunpack.c.l.b16 %v2598
        %v2640 = vunpack.c.l.b16 %v2601
        %v2641 = vunpack.c.l.b16 %v2605
        %v2642 = vunpack.c.l.b16 %v2608
        %v2643 = vpack.c.b16 %v2612, %v2611
        %v2644 = vpack.c.b16 %v2614, %v2613
        %v2645 = vpack.c.b16 %v2616, %v2615
        %v2646 = vpack.c.b16 %v2618, %v2617
        %v2647 = vpack.c.b16 %v2620, %v2619
        %v2648 = vpack.c.b16 %v2622, %v2621
        %v2649 = vpack.c.b16 %v2624, %v2623
        %v2650 = vpack.c.b16 %v2626, %v2625
        %v2651 = vpack.c.b16 %v2628, %v2627
        %v2652 = vpack.c.b16 %v2630, %v2629
        %v2653 = vpack.c.b16 %v2632, %v2631
        %v2654 = vpack.c.b16 %v2634, %v2633
        %v2655 = vpack.c.b16 %v2636, %v2635
        %v2656 = vpack.c.b16 %v2638, %v2637
        %v2657 = vpack.c.b16 %v2640, %v2639
        %v2658 = vpack.c.b16 %v2642, %v2641
        %v2660 = vsel %vm745, %v2643, 0
        %v2663 = vsel %vm745, %v2644, 0
        %v2666 = vsel %vm745, %v2645, 0
        %v2669 = vsel %vm745, %v2646, 0
        %v2672 = vsel %vm745, %v2647, 0
        %v2675 = vsel %vm745, %v2648, 0
        %v2678 = vsel %vm745, %v2649, 0
        %v2681 = vsel %vm745, %v2650, 0
        %v2684 = vsel %vm745, %v2651, 0
        %v2687 = vsel %vm745, %v2652, 0
        %v2690 = vsel %vm745, %v2653, 0
        %v2693 = vsel %vm745, %v2654, 0
        %v2696 = vsel %vm745, %v2655, 0
        %v2699 = vsel %vm745, %v2656, 0
        %v2702 = vsel %vm745, %v2657, 0
        %v2705 = vsel %vm745, %v2658, 0
        %v2708 = vsel %vm794, %v2610, 0
        %2710 = vmatpush.bf16.msra.mxu0 0
        %2711 = vmatpush.bf16.msra.mxu0 0
        %2712 = vmatpush.bf16.msra.mxu0 0
        %2713 = vmatpush.bf16.msra.mxu0 0
        %2714 = vmatpush.bf16.msra.mxu0 0
        %2715 = vmatpush.bf16.msra.mxu0 0
        %2716 = vmatpush.bf16.msra.mxu0 0
        %2717 = vmatpush.bf16.msra.mxu0 %v2708
        %2718 = vmatmul.bf16.gmra.mxu0 %v2660
        %v2719 = vpop.f32.mrf.mxu0
        %v2720 = vadd.f32 0.0, %v2719
        %v2721 = vpop.f32.mrf.mxu0
        %v2722 = vadd.f32 0.0, %v2721
        %2723 = vmatmul.bf16.gmra.mxu0 %v2663
        %v2724 = vpop.f32.mrf.mxu0
        %v2725 = vadd.f32 0.0, %v2724
        %v2726 = vpop.f32.mrf.mxu0
        %v2727 = vadd.f32 0.0, %v2726
        %2728 = vmatmul.bf16.gmra.mxu0 %v2666
        %v2729 = vpop.f32.mrf.mxu0
        %v2730 = vadd.f32 0.0, %v2729
        %v2731 = vpop.f32.mrf.mxu0
        %v2732 = vadd.f32 0.0, %v2731
        %2733 = vmatmul.bf16.gmra.mxu0 %v2669
        %v2734 = vpop.f32.mrf.mxu0
        %v2735 = vadd.f32 0.0, %v2734
        %v2736 = vpop.f32.mrf.mxu0
        %v2737 = vadd.f32 0.0, %v2736
        %2738 = vmatmul.bf16.gmra.mxu0 %v2672
        %v2739 = vpop.f32.mrf.mxu0
        %v2740 = vadd.f32 0.0, %v2739
        %v2741 = vpop.f32.mrf.mxu0
        %v2742 = vadd.f32 0.0, %v2741
        %2743 = vmatmul.bf16.gmra.mxu0 %v2675
        %v2744 = vpop.f32.mrf.mxu0
        %v2745 = vadd.f32 0.0, %v2744
        %v2746 = vpop.f32.mrf.mxu0
        %v2747 = vadd.f32 0.0, %v2746
        %2748 = vmatmul.bf16.gmra.mxu0 %v2678
        %v2749 = vpop.f32.mrf.mxu0
        %v2750 = vadd.f32 0.0, %v2749
        %v2751 = vpop.f32.mrf.mxu0
        %v2752 = vadd.f32 0.0, %v2751
        %2753 = vmatmul.bf16.gmra.mxu0 %v2681
        %v2754 = vpop.f32.mrf.mxu0
        %v2755 = vadd.f32 0.0, %v2754
        %v2756 = vpop.f32.mrf.mxu0
        %v2757 = vadd.f32 0.0, %v2756
        %2758 = vmatmul.bf16.gmra.mxu0 %v2684
        %v2759 = vpop.f32.mrf.mxu0
        %v2760 = vadd.f32 0.0, %v2759
        %v2761 = vpop.f32.mrf.mxu0
        %v2762 = vadd.f32 0.0, %v2761
        %2763 = vmatmul.bf16.gmra.mxu0 %v2687
        %v2764 = vpop.f32.mrf.mxu0
        %v2765 = vadd.f32 0.0, %v2764
        %v2766 = vpop.f32.mrf.mxu0
        %v2767 = vadd.f32 0.0, %v2766
        %2768 = vmatmul.bf16.gmra.mxu0 %v2690
        %v2769 = vpop.f32.mrf.mxu0
        %v2770 = vadd.f32 0.0, %v2769
        %v2771 = vpop.f32.mrf.mxu0
        %v2772 = vadd.f32 0.0, %v2771
        %2773 = vmatmul.bf16.gmra.mxu0 %v2693
        %v2774 = vpop.f32.mrf.mxu0
        %v2775 = vadd.f32 0.0, %v2774
        %v2776 = vpop.f32.mrf.mxu0
        %v2777 = vadd.f32 0.0, %v2776
        %2778 = vmatmul.bf16.gmra.mxu0 %v2696
        %v2779 = vpop.f32.mrf.mxu0
        %v2780 = vadd.f32 0.0, %v2779
        %v2781 = vpop.f32.mrf.mxu0
        %v2782 = vadd.f32 0.0, %v2781
        %2783 = vmatmul.bf16.gmra.mxu0 %v2699
        %v2784 = vpop.f32.mrf.mxu0
        %v2785 = vadd.f32 0.0, %v2784
        %v2786 = vpop.f32.mrf.mxu0
        %v2787 = vadd.f32 0.0, %v2786
        %2788 = vmatmul.bf16.gmra.mxu0 %v2702
        %v2789 = vpop.f32.mrf.mxu0
        %v2790 = vadd.f32 0.0, %v2789
        %v2791 = vpop.f32.mrf.mxu0
        %v2792 = vadd.f32 0.0, %v2791
        %2793 = vmatmul.bf16.gmra.mxu0 %v2705
        %v2794 = vpop.f32.mrf.mxu0
        %v2795 = vadd.f32 0.0, %v2794
        %v2796 = vpop.f32.mrf.mxu0
        %v2797 = vadd.f32 0.0, %v2796
        %2798 = vdwg.mxu0
        %v2799 = vadd.f32 %v2401, %v2720
        %v2800 = vadd.f32 %v2402, %v2722
        %v2801 = vadd.f32 %v2403, %v2725
        %v2802 = vadd.f32 %v2404, %v2727
        %v2803 = vadd.f32 %v2405, %v2730
        %v2804 = vadd.f32 %v2406, %v2732
        %v2805 = vadd.f32 %v2407, %v2735
        %v2806 = vadd.f32 %v2408, %v2737
        %v2807 = vadd.f32 %v2409, %v2740
        %v2808 = vadd.f32 %v2410, %v2742
        %v2809 = vadd.f32 %v2411, %v2745
        %v2810 = vadd.f32 %v2412, %v2747
        %v2811 = vadd.f32 %v2413, %v2750
        %v2812 = vadd.f32 %v2414, %v2752
        %v2813 = vadd.f32 %v2415, %v2755
        %v2814 = vadd.f32 %v2416, %v2757
        %v2815 = vadd.f32 %v2417, %v2760
        %v2816 = vadd.f32 %v2418, %v2762
        %v2817 = vadd.f32 %v2419, %v2765
        %v2818 = vadd.f32 %v2420, %v2767
        %v2819 = vadd.f32 %v2421, %v2770
        %v2820 = vadd.f32 %v2422, %v2772
        %v2821 = vadd.f32 %v2423, %v2775
        %v2822 = vadd.f32 %v2424, %v2777
        %v2823 = vadd.f32 %v2425, %v2780
        %v2824 = vadd.f32 %v2426, %v2782
        %v2825 = vadd.f32 %v2427, %v2785
        %v2826 = vadd.f32 %v2428, %v2787
        %v2827 = vadd.f32 %v2429, %v2790
        %v2828 = vadd.f32 %v2430, %v2792
        %v2829 = vadd.f32 %v2431, %v2795
        %v2830 = vadd.f32 %v2432, %v2797
        %s2831 = scalar_lea.vmem %s254, 24
        %v2832 = vld [vmem:[%s2831] sm:$0xf]
        %v2833 = vld [vmem:[%s2831 + $0x4] sm:$0xf]
        %v2834 = vld [vmem:[%s2831 + $0xc] sm:$0xf]
        %v2835 = vld [vmem:[%s2831 + $0x10] sm:$0xf]
        %v2836 = vld [vmem:[%s2831 + $0x18] sm:$0xf]
        %v2837 = vld [vmem:[%s2831 + $0x1c] sm:$0xf]
        %v2838 = vld [vmem:[%s2831 + $0x24] sm:$0xf]
        %v2839 = vld [vmem:[%s2831 + $0x28] sm:$0xf]
        %v2840 = vld [vmem:[%s2831 + $0x30] sm:$0xf]
        %v2841 = vld [vmem:[%s2831 + $0x34] sm:$0xf]
        %v2842 = vld [vmem:[%s2831 + $0x3c] sm:$0xf]
        %v2843 = vld [vmem:[%s2831 + $0x40] sm:$0xf]
        %v2844 = vld [vmem:[%s2831 + $0x48] sm:$0xf]
        %v2845 = vld [vmem:[%s2831 + $0x4c] sm:$0xf]
        %v2846 = vld [vmem:[%s2831 + $0x54] sm:$0xf]
        %v2847 = vld [vmem:[%s2831 + $0x58] sm:$0xf]
        %v2848 = vld [vmem:[%s2831 + $0x60] sm:$0xf]
        %v2849 = vld [vmem:[%s2831 + $0x64] sm:$0xf]
        %v2850 = vld [vmem:[%s2831 + $0x6c] sm:$0xf]
        %v2851 = vld [vmem:[%s2831 + $0x70] sm:$0xf]
        %v2852 = vld [vmem:[%s2831 + $0x78] sm:$0xf]
        %v2853 = vld [vmem:[%s2831 + $0x7c] sm:$0xf]
        %v2854 = vld [vmem:[%s2831 + $0x84] sm:$0xf]
        %v2855 = vld [vmem:[%s2831 + $0x88] sm:$0xf]
        %v2856 = vld [vmem:[%s2831 + $0x90] sm:$0xf]
        %v2857 = vld [vmem:[%s2831 + $0x94] sm:$0xf]
        %v2858 = vld [vmem:[%s2831 + $0x9c] sm:$0xf]
        %v2859 = vld [vmem:[%s2831 + $0xa0] sm:$0xf]
        %v2860 = vld [vmem:[%s2831 + $0xa8] sm:$0xf]
        %v2861 = vld [vmem:[%s2831 + $0xac] sm:$0xf]
        %v2862 = vld [vmem:[%s2831 + $0xb4] sm:$0xf]
        %v2863 = vld [vmem:[%s2831 + $0xb8] sm:$0xf]
        %s2864 = scalar_lea.vmem %s1, 12
        %v2865 = vld [vmem:[%s2864] sm:$0x3]
        %v2898 = vunpack.c.l.b16 %v2832
        %v2899 = vunpack.c.l.b16 %v2833
        %v2900 = vunpack.c.l.b16 %v2834
        %v2901 = vunpack.c.l.b16 %v2835
        %v2902 = vunpack.c.l.b16 %v2836
        %v2903 = vunpack.c.l.b16 %v2837
        %v2904 = vunpack.c.l.b16 %v2838
        %v2905 = vunpack.c.l.b16 %v2839
        %v2906 = vunpack.c.l.b16 %v2840
        %v2907 = vunpack.c.l.b16 %v2841
        %v2908 = vunpack.c.l.b16 %v2842
        %v2909 = vunpack.c.l.b16 %v2843
        %v2910 = vunpack.c.l.b16 %v2844
        %v2911 = vunpack.c.l.b16 %v2845
        %v2912 = vunpack.c.l.b16 %v2846
        %v2913 = vunpack.c.l.b16 %v2847
        %v2914 = vunpack.c.l.b16 %v2848
        %v2915 = vunpack.c.l.b16 %v2849
        %v2916 = vunpack.c.l.b16 %v2850
        %v2917 = vunpack.c.l.b16 %v2851
        %v2918 = vunpack.c.l.b16 %v2852
        %v2919 = vunpack.c.l.b16 %v2853
        %v2920 = vunpack.c.l.b16 %v2854
        %v2921 = vunpack.c.l.b16 %v2855
        %v2922 = vunpack.c.l.b16 %v2856
        %v2923 = vunpack.c.l.b16 %v2857
        %v2924 = vunpack.c.l.b16 %v2858
        %v2925 = vunpack.c.l.b16 %v2859
        %v2926 = vunpack.c.l.b16 %v2860
        %v2927 = vunpack.c.l.b16 %v2861
        %v2928 = vunpack.c.l.b16 %v2862
        %v2929 = vunpack.c.l.b16 %v2863
        %v2930 = vpack.c.b16 %v2899, %v2898
        %v2931 = vpack.c.b16 %v2901, %v2900
        %v2932 = vpack.c.b16 %v2903, %v2902
        %v2933 = vpack.c.b16 %v2905, %v2904
        %v2934 = vpack.c.b16 %v2907, %v2906
        %v2935 = vpack.c.b16 %v2909, %v2908
        %v2936 = vpack.c.b16 %v2911, %v2910
        %v2937 = vpack.c.b16 %v2913, %v2912
        %v2938 = vpack.c.b16 %v2915, %v2914
        %v2939 = vpack.c.b16 %v2917, %v2916
        %v2940 = vpack.c.b16 %v2919, %v2918
        %v2941 = vpack.c.b16 %v2921, %v2920
        %v2942 = vpack.c.b16 %v2923, %v2922
        %v2943 = vpack.c.b16 %v2925, %v2924
        %v2944 = vpack.c.b16 %v2927, %v2926
        %v2945 = vpack.c.b16 %v2929, %v2928
        %v2947 = vsel %vm745, %v2930, 0
        %v2950 = vsel %vm745, %v2931, 0
        %v2953 = vsel %vm745, %v2932, 0
        %v2956 = vsel %vm745, %v2933, 0
        %v2959 = vsel %vm745, %v2934, 0
        %v2962 = vsel %vm745, %v2935, 0
        %v2965 = vsel %vm745, %v2936, 0
        %v2968 = vsel %vm745, %v2937, 0
        %v2971 = vsel %vm745, %v2938, 0
        %v2974 = vsel %vm745, %v2939, 0
        %v2977 = vsel %vm745, %v2940, 0
        %v2980 = vsel %vm745, %v2941, 0
        %v2983 = vsel %vm745, %v2942, 0
        %v2986 = vsel %vm745, %v2943, 0
        %v2989 = vsel %vm745, %v2944, 0
        %v2992 = vsel %vm745, %v2945, 0
        %v2995 = vsel %vm794, %v2865, 0
        %2997 = vmatpush.bf16.msra.mxu0 0
        %2998 = vmatpush.bf16.msra.mxu0 0
        %2999 = vmatpush.bf16.msra.mxu0 0
        %3000 = vmatpush.bf16.msra.mxu0 0
        %3001 = vmatpush.bf16.msra.mxu0 0
        %3002 = vmatpush.bf16.msra.mxu0 0
        %3003 = vmatpush.bf16.msra.mxu0 0
        %3004 = vmatpush.bf16.msra.mxu0 %v2995
        %3005 = vmatmul.bf16.gmra.mxu0 %v2947
        %v3006 = vpop.f32.mrf.mxu0
        %v3007 = vadd.f32 0.0, %v3006
        %v3008 = vpop.f32.mrf.mxu0
        %v3009 = vadd.f32 0.0, %v3008
        %3010 = vmatmul.bf16.gmra.mxu0 %v2950
        %v3011 = vpop.f32.mrf.mxu0
        %v3012 = vadd.f32 0.0, %v3011
        %v3013 = vpop.f32.mrf.mxu0
        %v3014 = vadd.f32 0.0, %v3013
        %3015 = vmatmul.bf16.gmra.mxu0 %v2953
        %v3016 = vpop.f32.mrf.mxu0
        %v3017 = vadd.f32 0.0, %v3016
        %v3018 = vpop.f32.mrf.mxu0
        %v3019 = vadd.f32 0.0, %v3018
        %3020 = vmatmul.bf16.gmra.mxu0 %v2956
        %v3021 = vpop.f32.mrf.mxu0
        %v3022 = vadd.f32 0.0, %v3021
        %v3023 = vpop.f32.mrf.mxu0
        %v3024 = vadd.f32 0.0, %v3023
        %3025 = vmatmul.bf16.gmra.mxu0 %v2959
        %v3026 = vpop.f32.mrf.mxu0
        %v3027 = vadd.f32 0.0, %v3026
        %v3028 = vpop.f32.mrf.mxu0
        %v3029 = vadd.f32 0.0, %v3028
        %3030 = vmatmul.bf16.gmra.mxu0 %v2962
        %v3031 = vpop.f32.mrf.mxu0
        %v3032 = vadd.f32 0.0, %v3031
        %v3033 = vpop.f32.mrf.mxu0
        %v3034 = vadd.f32 0.0, %v3033
        %3035 = vmatmul.bf16.gmra.mxu0 %v2965
        %v3036 = vpop.f32.mrf.mxu0
        %v3037 = vadd.f32 0.0, %v3036
        %v3038 = vpop.f32.mrf.mxu0
        %v3039 = vadd.f32 0.0, %v3038
        %3040 = vmatmul.bf16.gmra.mxu0 %v2968
        %v3041 = vpop.f32.mrf.mxu0
        %v3042 = vadd.f32 0.0, %v3041
        %v3043 = vpop.f32.mrf.mxu0
        %v3044 = vadd.f32 0.0, %v3043
        %3045 = vmatmul.bf16.gmra.mxu0 %v2971
        %v3046 = vpop.f32.mrf.mxu0
        %v3047 = vadd.f32 0.0, %v3046
        %v3048 = vpop.f32.mrf.mxu0
        %v3049 = vadd.f32 0.0, %v3048
        %3050 = vmatmul.bf16.gmra.mxu0 %v2974
        %v3051 = vpop.f32.mrf.mxu0
        %v3052 = vadd.f32 0.0, %v3051
        %v3053 = vpop.f32.mrf.mxu0
        %v3054 = vadd.f32 0.0, %v3053
        %3055 = vmatmul.bf16.gmra.mxu0 %v2977
        %v3056 = vpop.f32.mrf.mxu0
        %v3057 = vadd.f32 0.0, %v3056
        %v3058 = vpop.f32.mrf.mxu0
        %v3059 = vadd.f32 0.0, %v3058
        %3060 = vmatmul.bf16.gmra.mxu0 %v2980
        %v3061 = vpop.f32.mrf.mxu0
        %v3062 = vadd.f32 0.0, %v3061
        %v3063 = vpop.f32.mrf.mxu0
        %v3064 = vadd.f32 0.0, %v3063
        %3065 = vmatmul.bf16.gmra.mxu0 %v2983
        %v3066 = vpop.f32.mrf.mxu0
        %v3067 = vadd.f32 0.0, %v3066
        %v3068 = vpop.f32.mrf.mxu0
        %v3069 = vadd.f32 0.0, %v3068
        %3070 = vmatmul.bf16.gmra.mxu0 %v2986
        %v3071 = vpop.f32.mrf.mxu0
        %v3072 = vadd.f32 0.0, %v3071
        %v3073 = vpop.f32.mrf.mxu0
        %v3074 = vadd.f32 0.0, %v3073
        %3075 = vmatmul.bf16.gmra.mxu0 %v2989
        %v3076 = vpop.f32.mrf.mxu0
        %v3077 = vadd.f32 0.0, %v3076
        %v3078 = vpop.f32.mrf.mxu0
        %v3079 = vadd.f32 0.0, %v3078
        %3080 = vmatmul.bf16.gmra.mxu0 %v2992
        %v3081 = vpop.f32.mrf.mxu0
        %v3082 = vadd.f32 0.0, %v3081
        %v3083 = vpop.f32.mrf.mxu0
        %v3084 = vadd.f32 0.0, %v3083
        %3085 = vdwg.mxu0
        %v3086 = vadd.f32 %v2799, %v3007
        %v3087 = vadd.f32 %v2800, %v3009
        %v3088 = vadd.f32 %v2801, %v3012
        %v3089 = vadd.f32 %v2802, %v3014
        %v3090 = vadd.f32 %v2803, %v3017
        %v3091 = vadd.f32 %v2804, %v3019
        %v3092 = vadd.f32 %v2805, %v3022
        %v3093 = vadd.f32 %v2806, %v3024
        %v3094 = vadd.f32 %v2807, %v3027
        %v3095 = vadd.f32 %v2808, %v3029
        %v3096 = vadd.f32 %v2809, %v3032
        %v3097 = vadd.f32 %v2810, %v3034
        %v3098 = vadd.f32 %v2811, %v3037
        %v3099 = vadd.f32 %v2812, %v3039
        %v3100 = vadd.f32 %v2813, %v3042
        %v3101 = vadd.f32 %v2814, %v3044
        %v3102 = vadd.f32 %v2815, %v3047
        %v3103 = vadd.f32 %v2816, %v3049
        %v3104 = vadd.f32 %v2817, %v3052
        %v3105 = vadd.f32 %v2818, %v3054
        %v3106 = vadd.f32 %v2819, %v3057
        %v3107 = vadd.f32 %v2820, %v3059
        %v3108 = vadd.f32 %v2821, %v3062
        %v3109 = vadd.f32 %v2822, %v3064
        %v3110 = vadd.f32 %v2823, %v3067
        %v3111 = vadd.f32 %v2824, %v3069
        %v3112 = vadd.f32 %v2825, %v3072
        %v3113 = vadd.f32 %v2826, %v3074
        %v3114 = vadd.f32 %v2827, %v3077
        %v3115 = vadd.f32 %v2828, %v3079
        %v3116 = vadd.f32 %v2829, %v3082
        %v3117 = vadd.f32 %v2830, %v3084
        %v3118 = vld [vmem:[%s2831] sm:$0xf]
        %v3119 = vld [vmem:[%s2831 + $0x4] sm:$0xf]
        %v3120 = vld [vmem:[%s2831 + $0x8] sm:$0x1]
        %v3121 = vld [vmem:[%s2831 + $0xc] sm:$0xf]
        %v3122 = vld [vmem:[%s2831 + $0x10] sm:$0xf]
        %v3123 = vld [vmem:[%s2831 + $0x14] sm:$0x1]
        %v3124 = vld [vmem:[%s2831 + $0x18] sm:$0xf]
        %v3125 = vld [vmem:[%s2831 + $0x1c] sm:$0xf]
        %v3126 = vld [vmem:[%s2831 + $0x20] sm:$0x1]
        %v3127 = vld [vmem:[%s2831 + $0x24] sm:$0xf]
        %v3128 = vld [vmem:[%s2831 + $0x28] sm:$0xf]
        %v3129 = vld [vmem:[%s2831 + $0x2c] sm:$0x1]
        %v3130 = vld [vmem:[%s2831 + $0x30] sm:$0xf]
        %v3131 = vld [vmem:[%s2831 + $0x34] sm:$0xf]
        %v3132 = vld [vmem:[%s2831 + $0x38] sm:$0x1]
        %v3133 = vld [vmem:[%s2831 + $0x3c] sm:$0xf]
        %v3134 = vld [vmem:[%s2831 + $0x40] sm:$0xf]
        %v3135 = vld [vmem:[%s2831 + $0x44] sm:$0x1]
        %v3136 = vld [vmem:[%s2831 + $0x48] sm:$0xf]
        %v3137 = vld [vmem:[%s2831 + $0x4c] sm:$0xf]
        %v3138 = vld [vmem:[%s2831 + $0x50] sm:$0x1]
        %v3139 = vld [vmem:[%s2831 + $0x54] sm:$0xf]
        %v3140 = vld [vmem:[%s2831 + $0x58] sm:$0xf]
        %v3141 = vld [vmem:[%s2831 + $0x5c] sm:$0x1]
        %v3142 = vld [vmem:[%s2831 + $0x60] sm:$0xf]
        %v3143 = vld [vmem:[%s2831 + $0x64] sm:$0xf]
        %v3144 = vld [vmem:[%s2831 + $0x68] sm:$0x1]
        %v3145 = vld [vmem:[%s2831 + $0x6c] sm:$0xf]
        %v3146 = vld [vmem:[%s2831 + $0x70] sm:$0xf]
        %v3147 = vld [vmem:[%s2831 + $0x74] sm:$0x1]
        %v3148 = vld [vmem:[%s2831 + $0x78] sm:$0xf]
        %v3149 = vld [vmem:[%s2831 + $0x7c] sm:$0xf]
        %v3150 = vld [vmem:[%s2831 + $0x80] sm:$0x1]
        %v3151 = vld [vmem:[%s2831 + $0x84] sm:$0xf]
        %v3152 = vld [vmem:[%s2831 + $0x88] sm:$0xf]
        %v3153 = vld [vmem:[%s2831 + $0x8c] sm:$0x1]
        %v3154 = vld [vmem:[%s2831 + $0x90] sm:$0xf]
        %v3155 = vld [vmem:[%s2831 + $0x94] sm:$0xf]
        %v3156 = vld [vmem:[%s2831 + $0x98] sm:$0x1]
        %v3157 = vld [vmem:[%s2831 + $0x9c] sm:$0xf]
        %v3158 = vld [vmem:[%s2831 + $0xa0] sm:$0xf]
        %v3159 = vld [vmem:[%s2831 + $0xa4] sm:$0x1]
        %v3160 = vld [vmem:[%s2831 + $0xa8] sm:$0xf]
        %v3161 = vld [vmem:[%s2831 + $0xac] sm:$0xf]
        %v3162 = vld [vmem:[%s2831 + $0xb0] sm:$0x1]
        %v3163 = vld [vmem:[%s2831 + $0xb4] sm:$0xf]
        %v3164 = vld [vmem:[%s2831 + $0xb8] sm:$0xf]
        %v3165 = vld [vmem:[%s2831 + $0xbc] sm:$0x1]
        %v3167 = vshrl.u32 %v3118, 16
        %v3169 = vrot.slane %v3167, 4
        %v3170 = vshll.u32 %v3118, 16
        %v3172 = vrot.slane %v3170, 5
        %v3173 = vor.u32 %v3169, %v3172
        %v3174 = vrot.slane %v3173, 4
        %v3176 = vshll.u32 %v3119, 16
        %v3178 = vrot.slane %v3176, 5
        %v3179 = vsel %vm310, %v3174, %v3178
        %v3180 = vshrl.u32 %v3119, 16
        %v3182 = vrot.slane %v3180, 4
        %v3183 = vor.u32 %v3182, %v3178
        %v3184 = vrot.slane %v3183, 4
        %v3186 = vshll.u32 %v3120, 16
        %v3188 = vrot.slane %v3186, 5
        %v3189 = vsel %vm310, %v3184, %v3188
        %v3191 = vshrl.u32 %v3121, 16
        %v3193 = vrot.slane %v3191, 4
        %v3194 = vshll.u32 %v3121, 16
        %v3196 = vrot.slane %v3194, 5
        %v3197 = vor.u32 %v3193, %v3196
        %v3198 = vrot.slane %v3197, 4
        %v3200 = vshll.u32 %v3122, 16
        %v3202 = vrot.slane %v3200, 5
        %v3203 = vsel %vm310, %v3198, %v3202
        %v3204 = vshrl.u32 %v3122, 16
        %v3206 = vrot.slane %v3204, 4
        %v3207 = vor.u32 %v3206, %v3202
        %v3208 = vrot.slane %v3207, 4
        %v3210 = vshll.u32 %v3123, 16
        %v3212 = vrot.slane %v3210, 5
        %v3213 = vsel %vm310, %v3208, %v3212
        %v3215 = vshrl.u32 %v3124, 16
        %v3217 = vrot.slane %v3215, 4
        %v3218 = vshll.u32 %v3124, 16
        %v3220 = vrot.slane %v3218, 5
        %v3221 = vor.u32 %v3217, %v3220
        %v3222 = vrot.slane %v3221, 4
        %v3224 = vshll.u32 %v3125, 16
        %v3226 = vrot.slane %v3224, 5
        %v3227 = vsel %vm310, %v3222, %v3226
        %v3228 = vshrl.u32 %v3125, 16
        %v3230 = vrot.slane %v3228, 4
        %v3231 = vor.u32 %v3230, %v3226
        %v3232 = vrot.slane %v3231, 4
        %v3234 = vshll.u32 %v3126, 16
        %v3236 = vrot.slane %v3234, 5
        %v3237 = vsel %vm310, %v3232, %v3236
        %v3239 = vshrl.u32 %v3127, 16
        %v3241 = vrot.slane %v3239, 4
        %v3242 = vshll.u32 %v3127, 16
        %v3244 = vrot.slane %v3242, 5
        %v3245 = vor.u32 %v3241, %v3244
        %v3246 = vrot.slane %v3245, 4
        %v3248 = vshll.u32 %v3128, 16
        %v3250 = vrot.slane %v3248, 5
        %v3251 = vsel %vm310, %v3246, %v3250
        %v3252 = vshrl.u32 %v3128, 16
        %v3254 = vrot.slane %v3252, 4
        %v3255 = vor.u32 %v3254, %v3250
        %v3256 = vrot.slane %v3255, 4
        %v3258 = vshll.u32 %v3129, 16
        %v3260 = vrot.slane %v3258, 5
        %v3261 = vsel %vm310, %v3256, %v3260
        %v3263 = vshrl.u32 %v3130, 16
        %v3265 = vrot.slane %v3263, 4
        %v3266 = vshll.u32 %v3130, 16
        %v3268 = vrot.slane %v3266, 5
        %v3269 = vor.u32 %v3265, %v3268
        %v3270 = vrot.slane %v3269, 4
        %v3272 = vshll.u32 %v3131, 16
        %v3274 = vrot.slane %v3272, 5
        %v3275 = vsel %vm310, %v3270, %v3274
        %v3276 = vshrl.u32 %v3131, 16
        %v3278 = vrot.slane %v3276, 4
        %v3279 = vor.u32 %v3278, %v3274
        %v3280 = vrot.slane %v3279, 4
        %v3282 = vshll.u32 %v3132, 16
        %v3284 = vrot.slane %v3282, 5
        %v3285 = vsel %vm310, %v3280, %v3284
        %v3287 = vshrl.u32 %v3133, 16
        %v3289 = vrot.slane %v3287, 4
        %v3290 = vshll.u32 %v3133, 16
        %v3292 = vrot.slane %v3290, 5
        %v3293 = vor.u32 %v3289, %v3292
        %v3294 = vrot.slane %v3293, 4
        %v3296 = vshll.u32 %v3134, 16
        %v3298 = vrot.slane %v3296, 5
        %v3299 = vsel %vm310, %v3294, %v3298
        %v3300 = vshrl.u32 %v3134, 16
        %v3302 = vrot.slane %v3300, 4
        %v3303 = vor.u32 %v3302, %v3298
        %v3304 = vrot.slane %v3303, 4
        %v3306 = vshll.u32 %v3135, 16
        %v3308 = vrot.slane %v3306, 5
        %v3309 = vsel %vm310, %v3304, %v3308
        %v3311 = vshrl.u32 %v3136, 16
        %v3313 = vrot.slane %v3311, 4
        %v3314 = vshll.u32 %v3136, 16
        %v3316 = vrot.slane %v3314, 5
        %v3317 = vor.u32 %v3313, %v3316
        %v3318 = vrot.slane %v3317, 4
        %v3320 = vshll.u32 %v3137, 16
        %v3322 = vrot.slane %v3320, 5
        %v3323 = vsel %vm310, %v3318, %v3322
        %v3324 = vshrl.u32 %v3137, 16
        %v3326 = vrot.slane %v3324, 4
        %v3327 = vor.u32 %v3326, %v3322
        %v3328 = vrot.slane %v3327, 4
        %v3330 = vshll.u32 %v3138, 16
        %v3332 = vrot.slane %v3330, 5
        %v3333 = vsel %vm310, %v3328, %v3332
        %v3335 = vshrl.u32 %v3139, 16
        %v3337 = vrot.slane %v3335, 4
        %v3338 = vshll.u32 %v3139, 16
        %v3340 = vrot.slane %v3338, 5
        %v3341 = vor.u32 %v3337, %v3340
        %v3342 = vrot.slane %v3341, 4
        %v3344 = vshll.u32 %v3140, 16
        %v3346 = vrot.slane %v3344, 5
        %v3347 = vsel %vm310, %v3342, %v3346
        %v3348 = vshrl.u32 %v3140, 16
        %v3350 = vrot.slane %v3348, 4
        %v3351 = vor.u32 %v3350, %v3346
        %v3352 = vrot.slane %v3351, 4
        %v3354 = vshll.u32 %v3141, 16
        %v3356 = vrot.slane %v3354, 5
        %v3357 = vsel %vm310, %v3352, %v3356
        %v3359 = vshrl.u32 %v3142, 16
        %v3361 = vrot.slane %v3359, 4
        %v3362 = vshll.u32 %v3142, 16
        %v3364 = vrot.slane %v3362, 5
        %v3365 = vor.u32 %v3361, %v3364
        %v3366 = vrot.slane %v3365, 4
        %v3368 = vshll.u32 %v3143, 16
        %v3370 = vrot.slane %v3368, 5
        %v3371 = vsel %vm310, %v3366, %v3370
        %v3372 = vshrl.u32 %v3143, 16
        %v3374 = vrot.slane %v3372, 4
        %v3375 = vor.u32 %v3374, %v3370
        %v3376 = vrot.slane %v3375, 4
        %v3378 = vshll.u32 %v3144, 16
        %v3380 = vrot.slane %v3378, 5
        %v3381 = vsel %vm310, %v3376, %v3380
        %v3383 = vshrl.u32 %v3145, 16
        %v3385 = vrot.slane %v3383, 4
        %v3386 = vshll.u32 %v3145, 16
        %v3388 = vrot.slane %v3386, 5
        %v3389 = vor.u32 %v3385, %v3388
        %v3390 = vrot.slane %v3389, 4
        %v3392 = vshll.u32 %v3146, 16
        %v3394 = vrot.slane %v3392, 5
        %v3395 = vsel %vm310, %v3390, %v3394
        %v3396 = vshrl.u32 %v3146, 16
        %v3398 = vrot.slane %v3396, 4
        %v3399 = vor.u32 %v3398, %v3394
        %v3400 = vrot.slane %v3399, 4
        %v3402 = vshll.u32 %v3147, 16
        %v3404 = vrot.slane %v3402, 5
        %v3405 = vsel %vm310, %v3400, %v3404
        %v3407 = vshrl.u32 %v3148, 16
        %v3409 = vrot.slane %v3407, 4
        %v3410 = vshll.u32 %v3148, 16
        %v3412 = vrot.slane %v3410, 5
        %v3413 = vor.u32 %v3409, %v3412
        %v3414 = vrot.slane %v3413, 4
        %v3416 = vshll.u32 %v3149, 16
        %v3418 = vrot.slane %v3416, 5
        %v3419 = vsel %vm310, %v3414, %v3418
        %v3420 = vshrl.u32 %v3149, 16
        %v3422 = vrot.slane %v3420, 4
        %v3423 = vor.u32 %v3422, %v3418
        %v3424 = vrot.slane %v3423, 4
        %v3426 = vshll.u32 %v3150, 16
        %v3428 = vrot.slane %v3426, 5
        %v3429 = vsel %vm310, %v3424, %v3428
        %v3431 = vshrl.u32 %v3151, 16
        %v3433 = vrot.slane %v3431, 4
        %v3434 = vshll.u32 %v3151, 16
        %v3436 = vrot.slane %v3434, 5
        %v3437 = vor.u32 %v3433, %v3436
        %v3438 = vrot.slane %v3437, 4
        %v3440 = vshll.u32 %v3152, 16
        %v3442 = vrot.slane %v3440, 5
        %v3443 = vsel %vm310, %v3438, %v3442
        %v3444 = vshrl.u32 %v3152, 16
        %v3446 = vrot.slane %v3444, 4
        %v3447 = vor.u32 %v3446, %v3442
        %v3448 = vrot.slane %v3447, 4
        %v3450 = vshll.u32 %v3153, 16
        %v3452 = vrot.slane %v3450, 5
        %v3453 = vsel %vm310, %v3448, %v3452
        %v3455 = vshrl.u32 %v3154, 16
        %v3457 = vrot.slane %v3455, 4
        %v3458 = vshll.u32 %v3154, 16
        %v3460 = vrot.slane %v3458, 5
        %v3461 = vor.u32 %v3457, %v3460
        %v3462 = vrot.slane %v3461, 4
        %v3464 = vshll.u32 %v3155, 16
        %v3466 = vrot.slane %v3464, 5
        %v3467 = vsel %vm310, %v3462, %v3466
        %v3468 = vshrl.u32 %v3155, 16
        %v3470 = vrot.slane %v3468, 4
        %v3471 = vor.u32 %v3470, %v3466
        %v3472 = vrot.slane %v3471, 4
        %v3474 = vshll.u32 %v3156, 16
        %v3476 = vrot.slane %v3474, 5
        %v3477 = vsel %vm310, %v3472, %v3476
        %v3479 = vshrl.u32 %v3157, 16
        %v3481 = vrot.slane %v3479, 4
        %v3482 = vshll.u32 %v3157, 16
        %v3484 = vrot.slane %v3482, 5
        %v3485 = vor.u32 %v3481, %v3484
        %v3486 = vrot.slane %v3485, 4
        %v3488 = vshll.u32 %v3158, 16
        %v3490 = vrot.slane %v3488, 5
        %v3491 = vsel %vm310, %v3486, %v3490
        %v3492 = vshrl.u32 %v3158, 16
        %v3494 = vrot.slane %v3492, 4
        %v3495 = vor.u32 %v3494, %v3490
        %v3496 = vrot.slane %v3495, 4
        %v3498 = vshll.u32 %v3159, 16
        %v3500 = vrot.slane %v3498, 5
        %v3501 = vsel %vm310, %v3496, %v3500
        %v3503 = vshrl.u32 %v3160, 16
        %v3505 = vrot.slane %v3503, 4
        %v3506 = vshll.u32 %v3160, 16
        %v3508 = vrot.slane %v3506, 5
        %v3509 = vor.u32 %v3505, %v3508
        %v3510 = vrot.slane %v3509, 4
        %v3512 = vshll.u32 %v3161, 16
        %v3514 = vrot.slane %v3512, 5
        %v3515 = vsel %vm310, %v3510, %v3514
        %v3516 = vshrl.u32 %v3161, 16
        %v3518 = vrot.slane %v3516, 4
        %v3519 = vor.u32 %v3518, %v3514
        %v3520 = vrot.slane %v3519, 4
        %v3522 = vshll.u32 %v3162, 16
        %v3524 = vrot.slane %v3522, 5
        %v3525 = vsel %vm310, %v3520, %v3524
        %v3527 = vshrl.u32 %v3163, 16
        %v3529 = vrot.slane %v3527, 4
        %v3530 = vshll.u32 %v3163, 16
        %v3532 = vrot.slane %v3530, 5
        %v3533 = vor.u32 %v3529, %v3532
        %v3534 = vrot.slane %v3533, 4
        %v3536 = vshll.u32 %v3164, 16
        %v3538 = vrot.slane %v3536, 5
        %v3539 = vsel %vm310, %v3534, %v3538
        %v3540 = vshrl.u32 %v3164, 16
        %v3542 = vrot.slane %v3540, 4
        %v3543 = vor.u32 %v3542, %v3538
        %v3544 = vrot.slane %v3543, 4
        %v3546 = vshll.u32 %v3165, 16
        %v3548 = vrot.slane %v3546, 5
        %v3549 = vsel %vm310, %v3544, %v3548
        %s3550 = scalar_lea.vmem %s1, 14
        %v3551 = vld [vmem:[%s3550] sm:$0x3]
        %v3552 = vunpack.c.l.b16 %v3179
        %v3553 = vunpack.c.l.b16 %v3189
        %v3554 = vunpack.c.l.b16 %v3203
        %v3555 = vunpack.c.l.b16 %v3213
        %v3556 = vunpack.c.l.b16 %v3227
        %v3557 = vunpack.c.l.b16 %v3237
        %v3558 = vunpack.c.l.b16 %v3251
        %v3559 = vunpack.c.l.b16 %v3261
        %v3560 = vunpack.c.l.b16 %v3275
        %v3561 = vunpack.c.l.b16 %v3285
        %v3562 = vunpack.c.l.b16 %v3299
        %v3563 = vunpack.c.l.b16 %v3309
        %v3564 = vunpack.c.l.b16 %v3323
        %v3565 = vunpack.c.l.b16 %v3333
        %v3566 = vunpack.c.l.b16 %v3347
        %v3567 = vunpack.c.l.b16 %v3357
        %v3568 = vunpack.c.l.b16 %v3371
        %v3569 = vunpack.c.l.b16 %v3381
        %v3570 = vunpack.c.l.b16 %v3395
        %v3571 = vunpack.c.l.b16 %v3405
        %v3572 = vunpack.c.l.b16 %v3419
        %v3573 = vunpack.c.l.b16 %v3429
        %v3574 = vunpack.c.l.b16 %v3443
        %v3575 = vunpack.c.l.b16 %v3453
        %v3576 = vunpack.c.l.b16 %v3467
        %v3577 = vunpack.c.l.b16 %v3477
        %v3578 = vunpack.c.l.b16 %v3491
        %v3579 = vunpack.c.l.b16 %v3501
        %v3580 = vunpack.c.l.b16 %v3515
        %v3581 = vunpack.c.l.b16 %v3525
        %v3582 = vunpack.c.l.b16 %v3539
        %v3583 = vunpack.c.l.b16 %v3549
        %v3584 = vpack.c.b16 %v3553, %v3552
        %v3585 = vpack.c.b16 %v3555, %v3554
        %v3586 = vpack.c.b16 %v3557, %v3556
        %v3587 = vpack.c.b16 %v3559, %v3558
        %v3588 = vpack.c.b16 %v3561, %v3560
        %v3589 = vpack.c.b16 %v3563, %v3562
        %v3590 = vpack.c.b16 %v3565, %v3564
        %v3591 = vpack.c.b16 %v3567, %v3566
        %v3592 = vpack.c.b16 %v3569, %v3568
        %v3593 = vpack.c.b16 %v3571, %v3570
        %v3594 = vpack.c.b16 %v3573, %v3572
        %v3595 = vpack.c.b16 %v3575, %v3574
        %v3596 = vpack.c.b16 %v3577, %v3576
        %v3597 = vpack.c.b16 %v3579, %v3578
        %v3598 = vpack.c.b16 %v3581, %v3580
        %v3599 = vpack.c.b16 %v3583, %v3582
        %v3601 = vsel %vm745, %v3584, 0
        %v3604 = vsel %vm745, %v3585, 0
        %v3607 = vsel %vm745, %v3586, 0
        %v3610 = vsel %vm745, %v3587, 0
        %v3613 = vsel %vm745, %v3588, 0
        %v3616 = vsel %vm745, %v3589, 0
        %v3619 = vsel %vm745, %v3590, 0
        %v3622 = vsel %vm745, %v3591, 0
        %v3625 = vsel %vm745, %v3592, 0
        %v3628 = vsel %vm745, %v3593, 0
        %v3631 = vsel %vm745, %v3594, 0
        %v3634 = vsel %vm745, %v3595, 0
        %v3637 = vsel %vm745, %v3596, 0
        %v3640 = vsel %vm745, %v3597, 0
        %v3643 = vsel %vm745, %v3598, 0
        %v3646 = vsel %vm745, %v3599, 0
        %v3649 = vsel %vm794, %v3551, 0
        %3651 = vmatpush.bf16.msra.mxu0 0
        %3652 = vmatpush.bf16.msra.mxu0 0
        %3653 = vmatpush.bf16.msra.mxu0 0
        %3654 = vmatpush.bf16.msra.mxu0 0
        %3655 = vmatpush.bf16.msra.mxu0 0
        %3656 = vmatpush.bf16.msra.mxu0 0
        %3657 = vmatpush.bf16.msra.mxu0 0
        %3658 = vmatpush.bf16.msra.mxu0 %v3649
        %3659 = vmatmul.bf16.gmra.mxu0 %v3601
        %v3660 = vpop.f32.mrf.mxu0
        %v3661 = vadd.f32 0.0, %v3660
        %v3662 = vpop.f32.mrf.mxu0
        %v3663 = vadd.f32 0.0, %v3662
        %3664 = vmatmul.bf16.gmra.mxu0 %v3604
        %v3665 = vpop.f32.mrf.mxu0
        %v3666 = vadd.f32 0.0, %v3665
        %v3667 = vpop.f32.mrf.mxu0
        %v3668 = vadd.f32 0.0, %v3667
        %3669 = vmatmul.bf16.gmra.mxu0 %v3607
        %v3670 = vpop.f32.mrf.mxu0
        %v3671 = vadd.f32 0.0, %v3670
        %v3672 = vpop.f32.mrf.mxu0
        %v3673 = vadd.f32 0.0, %v3672
        %3674 = vmatmul.bf16.gmra.mxu0 %v3610
        %v3675 = vpop.f32.mrf.mxu0
        %v3676 = vadd.f32 0.0, %v3675
        %v3677 = vpop.f32.mrf.mxu0
        %v3678 = vadd.f32 0.0, %v3677
        %3679 = vmatmul.bf16.gmra.mxu0 %v3613
        %v3680 = vpop.f32.mrf.mxu0
        %v3681 = vadd.f32 0.0, %v3680
        %v3682 = vpop.f32.mrf.mxu0
        %v3683 = vadd.f32 0.0, %v3682
        %3684 = vmatmul.bf16.gmra.mxu0 %v3616
        %v3685 = vpop.f32.mrf.mxu0
        %v3686 = vadd.f32 0.0, %v3685
        %v3687 = vpop.f32.mrf.mxu0
        %v3688 = vadd.f32 0.0, %v3687
        %3689 = vmatmul.bf16.gmra.mxu0 %v3619
        %v3690 = vpop.f32.mrf.mxu0
        %v3691 = vadd.f32 0.0, %v3690
        %v3692 = vpop.f32.mrf.mxu0
        %v3693 = vadd.f32 0.0, %v3692
        %3694 = vmatmul.bf16.gmra.mxu0 %v3622
        %v3695 = vpop.f32.mrf.mxu0
        %v3696 = vadd.f32 0.0, %v3695
        %v3697 = vpop.f32.mrf.mxu0
        %v3698 = vadd.f32 0.0, %v3697
        %3699 = vmatmul.bf16.gmra.mxu0 %v3625
        %v3700 = vpop.f32.mrf.mxu0
        %v3701 = vadd.f32 0.0, %v3700
        %v3702 = vpop.f32.mrf.mxu0
        %v3703 = vadd.f32 0.0, %v3702
        %3704 = vmatmul.bf16.gmra.mxu0 %v3628
        %v3705 = vpop.f32.mrf.mxu0
        %v3706 = vadd.f32 0.0, %v3705
        %v3707 = vpop.f32.mrf.mxu0
        %v3708 = vadd.f32 0.0, %v3707
        %3709 = vmatmul.bf16.gmra.mxu0 %v3631
        %v3710 = vpop.f32.mrf.mxu0
        %v3711 = vadd.f32 0.0, %v3710
        %v3712 = vpop.f32.mrf.mxu0
        %v3713 = vadd.f32 0.0, %v3712
        %3714 = vmatmul.bf16.gmra.mxu0 %v3634
        %v3715 = vpop.f32.mrf.mxu0
        %v3716 = vadd.f32 0.0, %v3715
        %v3717 = vpop.f32.mrf.mxu0
        %v3718 = vadd.f32 0.0, %v3717
        %3719 = vmatmul.bf16.gmra.mxu0 %v3637
        %v3720 = vpop.f32.mrf.mxu0
        %v3721 = vadd.f32 0.0, %v3720
        %v3722 = vpop.f32.mrf.mxu0
        %v3723 = vadd.f32 0.0, %v3722
        %3724 = vmatmul.bf16.gmra.mxu0 %v3640
        %v3725 = vpop.f32.mrf.mxu0
        %v3726 = vadd.f32 0.0, %v3725
        %v3727 = vpop.f32.mrf.mxu0
        %v3728 = vadd.f32 0.0, %v3727
        %3729 = vmatmul.bf16.gmra.mxu0 %v3643
        %v3730 = vpop.f32.mrf.mxu0
        %v3731 = vadd.f32 0.0, %v3730
        %v3732 = vpop.f32.mrf.mxu0
        %v3733 = vadd.f32 0.0, %v3732
        %3734 = vmatmul.bf16.gmra.mxu0 %v3646
        %v3735 = vpop.f32.mrf.mxu0
        %v3736 = vadd.f32 0.0, %v3735
        %v3737 = vpop.f32.mrf.mxu0
        %v3738 = vadd.f32 0.0, %v3737
        %3739 = vdwg.mxu0
        %v3740 = vadd.f32 %v3086, %v3661
        %v3741 = vadd.f32 %v3087, %v3663
        %v3742 = vadd.f32 %v3088, %v3666
        %v3743 = vadd.f32 %v3089, %v3668
        %v3744 = vadd.f32 %v3090, %v3671
        %v3745 = vadd.f32 %v3091, %v3673
        %v3746 = vadd.f32 %v3092, %v3676
        %v3747 = vadd.f32 %v3093, %v3678
        %v3748 = vadd.f32 %v3094, %v3681
        %v3749 = vadd.f32 %v3095, %v3683
        %v3750 = vadd.f32 %v3096, %v3686
        %v3751 = vadd.f32 %v3097, %v3688
        %v3752 = vadd.f32 %v3098, %v3691
        %v3753 = vadd.f32 %v3099, %v3693
        %v3754 = vadd.f32 %v3100, %v3696
        %v3755 = vadd.f32 %v3101, %v3698
        %v3756 = vadd.f32 %v3102, %v3701
        %v3757 = vadd.f32 %v3103, %v3703
        %v3758 = vadd.f32 %v3104, %v3706
        %v3759 = vadd.f32 %v3105, %v3708
        %v3760 = vadd.f32 %v3106, %v3711
        %v3761 = vadd.f32 %v3107, %v3713
        %v3762 = vadd.f32 %v3108, %v3716
        %v3763 = vadd.f32 %v3109, %v3718
        %v3764 = vadd.f32 %v3110, %v3721
        %v3765 = vadd.f32 %v3111, %v3723
        %v3766 = vadd.f32 %v3112, %v3726
        %v3767 = vadd.f32 %v3113, %v3728
        %v3768 = vadd.f32 %v3114, %v3731
        %v3769 = vadd.f32 %v3115, %v3733
        %v3770 = vadd.f32 %v3116, %v3736
        %v3771 = vadd.f32 %v3117, %v3738
        %v3772 = vld [vmem:[%s2831] sm:$0xe]
        %v3773 = vld [vmem:[%s2831 + $0xc] sm:$0xe]
        %v3774 = vld [vmem:[%s2831 + $0x18] sm:$0xe]
        %v3775 = vld [vmem:[%s2831 + $0x24] sm:$0xe]
        %v3776 = vld [vmem:[%s2831 + $0x30] sm:$0xe]
        %v3777 = vld [vmem:[%s2831 + $0x3c] sm:$0xe]
        %v3778 = vld [vmem:[%s2831 + $0x48] sm:$0xe]
        %v3779 = vld [vmem:[%s2831 + $0x54] sm:$0xe]
        %v3780 = vld [vmem:[%s2831 + $0x60] sm:$0xe]
        %v3781 = vld [vmem:[%s2831 + $0x6c] sm:$0xe]
        %v3782 = vld [vmem:[%s2831 + $0x78] sm:$0xe]
        %v3783 = vld [vmem:[%s2831 + $0x84] sm:$0xe]
        %v3784 = vld [vmem:[%s2831 + $0x90] sm:$0xe]
        %v3785 = vld [vmem:[%s2831 + $0x9c] sm:$0xe]
        %v3786 = vld [vmem:[%s2831 + $0xa8] sm:$0xe]
        %v3787 = vld [vmem:[%s2831 + $0xb4] sm:$0xe]
        %v3836 = vrot.slane %v3772, 5
        %v3837 = vrot.slane %v3836, 4
        %v3838 = vrot.slane %v3119, 5
        %v3839 = vsel %vm1157, %v3837, %v3838
        %v3840 = vrot.slane %v3838, 4
        %v3841 = vrot.slane %v3120, 5
        %v3842 = vsel %vm1157, %v3840, %v3841
        %v3843 = vrot.slane %v3773, 5
        %v3844 = vrot.slane %v3843, 4
        %v3845 = vrot.slane %v3122, 5
        %v3846 = vsel %vm1157, %v3844, %v3845
        %v3847 = vrot.slane %v3845, 4
        %v3848 = vrot.slane %v3123, 5
        %v3849 = vsel %vm1157, %v3847, %v3848
        %v3850 = vrot.slane %v3774, 5
        %v3851 = vrot.slane %v3850, 4
        %v3852 = vrot.slane %v3125, 5
        %v3853 = vsel %vm1157, %v3851, %v3852
        %v3854 = vrot.slane %v3852, 4
        %v3855 = vrot.slane %v3126, 5
        %v3856 = vsel %vm1157, %v3854, %v3855
        %v3857 = vrot.slane %v3775, 5
        %v3858 = vrot.slane %v3857, 4
        %v3859 = vrot.slane %v3128, 5
        %v3860 = vsel %vm1157, %v3858, %v3859
        %v3861 = vrot.slane %v3859, 4
        %v3862 = vrot.slane %v3129, 5
        %v3863 = vsel %vm1157, %v3861, %v3862
        %v3864 = vrot.slane %v3776, 5
        %v3865 = vrot.slane %v3864, 4
        %v3866 = vrot.slane %v3131, 5
        %v3867 = vsel %vm1157, %v3865, %v3866
        %v3868 = vrot.slane %v3866, 4
        %v3869 = vrot.slane %v3132, 5
        %v3870 = vsel %vm1157, %v3868, %v3869
        %v3871 = vrot.slane %v3777, 5
        %v3872 = vrot.slane %v3871, 4
        %v3873 = vrot.slane %v3134, 5
        %v3874 = vsel %vm1157, %v3872, %v3873
        %v3875 = vrot.slane %v3873, 4
        %v3876 = vrot.slane %v3135, 5
        %v3877 = vsel %vm1157, %v3875, %v3876
        %v3878 = vrot.slane %v3778, 5
        %v3879 = vrot.slane %v3878, 4
        %v3880 = vrot.slane %v3137, 5
        %v3881 = vsel %vm1157, %v3879, %v3880
        %v3882 = vrot.slane %v3880, 4
        %v3883 = vrot.slane %v3138, 5
        %v3884 = vsel %vm1157, %v3882, %v3883
        %v3885 = vrot.slane %v3779, 5
        %v3886 = vrot.slane %v3885, 4
        %v3887 = vrot.slane %v3140, 5
        %v3888 = vsel %vm1157, %v3886, %v3887
        %v3889 = vrot.slane %v3887, 4
        %v3890 = vrot.slane %v3141, 5
        %v3891 = vsel %vm1157, %v3889, %v3890
        %v3892 = vrot.slane %v3780, 5
        %v3893 = vrot.slane %v3892, 4
        %v3894 = vrot.slane %v3143, 5
        %v3895 = vsel %vm1157, %v3893, %v3894
        %v3896 = vrot.slane %v3894, 4
        %v3897 = vrot.slane %v3144, 5
        %v3898 = vsel %vm1157, %v3896, %v3897
        %v3899 = vrot.slane %v3781, 5
        %v3900 = vrot.slane %v3899, 4
        %v3901 = vrot.slane %v3146, 5
        %v3902 = vsel %vm1157, %v3900, %v3901
        %v3903 = vrot.slane %v3901, 4
        %v3904 = vrot.slane %v3147, 5
        %v3905 = vsel %vm1157, %v3903, %v3904
        %v3906 = vrot.slane %v3782, 5
        %v3907 = vrot.slane %v3906, 4
        %v3908 = vrot.slane %v3149, 5
        %v3909 = vsel %vm1157, %v3907, %v3908
        %v3910 = vrot.slane %v3908, 4
        %v3911 = vrot.slane %v3150, 5
        %v3912 = vsel %vm1157, %v3910, %v3911
        %v3913 = vrot.slane %v3783, 5
        %v3914 = vrot.slane %v3913, 4
        %v3915 = vrot.slane %v3152, 5
        %v3916 = vsel %vm1157, %v3914, %v3915
        %v3917 = vrot.slane %v3915, 4
        %v3918 = vrot.slane %v3153, 5
        %v3919 = vsel %vm1157, %v3917, %v3918
        %v3920 = vrot.slane %v3784, 5
        %v3921 = vrot.slane %v3920, 4
        %v3922 = vrot.slane %v3155, 5
        %v3923 = vsel %vm1157, %v3921, %v3922
        %v3924 = vrot.slane %v3922, 4
        %v3925 = vrot.slane %v3156, 5
        %v3926 = vsel %vm1157, %v3924, %v3925
        %v3927 = vrot.slane %v3785, 5
        %v3928 = vrot.slane %v3927, 4
        %v3929 = vrot.slane %v3158, 5
        %v3930 = vsel %vm1157, %v3928, %v3929
        %v3931 = vrot.slane %v3929, 4
        %v3932 = vrot.slane %v3159, 5
        %v3933 = vsel %vm1157, %v3931, %v3932
        %v3934 = vrot.slane %v3786, 5
        %v3935 = vrot.slane %v3934, 4
        %v3936 = vrot.slane %v3161, 5
        %v3937 = vsel %vm1157, %v3935, %v3936
        %v3938 = vrot.slane %v3936, 4
        %v3939 = vrot.slane %v3162, 5
        %v3940 = vsel %vm1157, %v3938, %v3939
        %v3941 = vrot.slane %v3787, 5
        %v3942 = vrot.slane %v3941, 4
        %v3943 = vrot.slane %v3164, 5
        %v3944 = vsel %vm1157, %v3942, %v3943
        %v3945 = vrot.slane %v3943, 4
        %v3946 = vrot.slane %v3165, 5
        %v3947 = vsel %vm1157, %v3945, %v3946
        %s3948 = scalar_lea.vmem %s1, 16
        %v3949 = vld [vmem:[%s3948] sm:$0x3]
        %v3950 = vunpack.c.l.b16 %v3839
        %v3951 = vunpack.c.l.b16 %v3842
        %v3952 = vunpack.c.l.b16 %v3846
        %v3953 = vunpack.c.l.b16 %v3849
        %v3954 = vunpack.c.l.b16 %v3853
        %v3955 = vunpack.c.l.b16 %v3856
        %v3956 = vunpack.c.l.b16 %v3860
        %v3957 = vunpack.c.l.b16 %v3863
        %v3958 = vunpack.c.l.b16 %v3867
        %v3959 = vunpack.c.l.b16 %v3870
        %v3960 = vunpack.c.l.b16 %v3874
        %v3961 = vunpack.c.l.b16 %v3877
        %v3962 = vunpack.c.l.b16 %v3881
        %v3963 = vunpack.c.l.b16 %v3884
        %v3964 = vunpack.c.l.b16 %v3888
        %v3965 = vunpack.c.l.b16 %v3891
        %v3966 = vunpack.c.l.b16 %v3895
        %v3967 = vunpack.c.l.b16 %v3898
        %v3968 = vunpack.c.l.b16 %v3902
        %v3969 = vunpack.c.l.b16 %v3905
        %v3970 = vunpack.c.l.b16 %v3909
        %v3971 = vunpack.c.l.b16 %v3912
        %v3972 = vunpack.c.l.b16 %v3916
        %v3973 = vunpack.c.l.b16 %v3919
        %v3974 = vunpack.c.l.b16 %v3923
        %v3975 = vunpack.c.l.b16 %v3926
        %v3976 = vunpack.c.l.b16 %v3930
        %v3977 = vunpack.c.l.b16 %v3933
        %v3978 = vunpack.c.l.b16 %v3937
        %v3979 = vunpack.c.l.b16 %v3940
        %v3980 = vunpack.c.l.b16 %v3944
        %v3981 = vunpack.c.l.b16 %v3947
        %v3982 = vpack.c.b16 %v3951, %v3950
        %v3983 = vpack.c.b16 %v3953, %v3952
        %v3984 = vpack.c.b16 %v3955, %v3954
        %v3985 = vpack.c.b16 %v3957, %v3956
        %v3986 = vpack.c.b16 %v3959, %v3958
        %v3987 = vpack.c.b16 %v3961, %v3960
        %v3988 = vpack.c.b16 %v3963, %v3962
        %v3989 = vpack.c.b16 %v3965, %v3964
        %v3990 = vpack.c.b16 %v3967, %v3966
        %v3991 = vpack.c.b16 %v3969, %v3968
        %v3992 = vpack.c.b16 %v3971, %v3970
        %v3993 = vpack.c.b16 %v3973, %v3972
        %v3994 = vpack.c.b16 %v3975, %v3974
        %v3995 = vpack.c.b16 %v3977, %v3976
        %v3996 = vpack.c.b16 %v3979, %v3978
        %v3997 = vpack.c.b16 %v3981, %v3980
        %v3999 = vsel %vm745, %v3982, 0
        %v4002 = vsel %vm745, %v3983, 0
        %v4005 = vsel %vm745, %v3984, 0
        %v4008 = vsel %vm745, %v3985, 0
        %v4011 = vsel %vm745, %v3986, 0
        %v4014 = vsel %vm745, %v3987, 0
        %v4017 = vsel %vm745, %v3988, 0
        %v4020 = vsel %vm745, %v3989, 0
        %v4023 = vsel %vm745, %v3990, 0
        %v4026 = vsel %vm745, %v3991, 0
        %v4029 = vsel %vm745, %v3992, 0
        %v4032 = vsel %vm745, %v3993, 0
        %v4035 = vsel %vm745, %v3994, 0
        %v4038 = vsel %vm745, %v3995, 0
        %v4041 = vsel %vm745, %v3996, 0
        %v4044 = vsel %vm745, %v3997, 0
        %v4047 = vsel %vm794, %v3949, 0
        %4049 = vmatpush.bf16.msra.mxu0 0
        %4050 = vmatpush.bf16.msra.mxu0 0
        %4051 = vmatpush.bf16.msra.mxu0 0
        %4052 = vmatpush.bf16.msra.mxu0 0
        %4053 = vmatpush.bf16.msra.mxu0 0
        %4054 = vmatpush.bf16.msra.mxu0 0
        %4055 = vmatpush.bf16.msra.mxu0 0
        %4056 = vmatpush.bf16.msra.mxu0 %v4047
        %4057 = vmatmul.bf16.gmra.mxu0 %v3999
        %v4058 = vpop.f32.mrf.mxu0
        %v4059 = vadd.f32 0.0, %v4058
        %v4060 = vpop.f32.mrf.mxu0
        %v4061 = vadd.f32 0.0, %v4060
        %4062 = vmatmul.bf16.gmra.mxu0 %v4002
        %v4063 = vpop.f32.mrf.mxu0
        %v4064 = vadd.f32 0.0, %v4063
        %v4065 = vpop.f32.mrf.mxu0
        %v4066 = vadd.f32 0.0, %v4065
        %4067 = vmatmul.bf16.gmra.mxu0 %v4005
        %v4068 = vpop.f32.mrf.mxu0
        %v4069 = vadd.f32 0.0, %v4068
        %v4070 = vpop.f32.mrf.mxu0
        %v4071 = vadd.f32 0.0, %v4070
        %4072 = vmatmul.bf16.gmra.mxu0 %v4008
        %v4073 = vpop.f32.mrf.mxu0
        %v4074 = vadd.f32 0.0, %v4073
        %v4075 = vpop.f32.mrf.mxu0
        %v4076 = vadd.f32 0.0, %v4075
        %4077 = vmatmul.bf16.gmra.mxu0 %v4011
        %v4078 = vpop.f32.mrf.mxu0
        %v4079 = vadd.f32 0.0, %v4078
        %v4080 = vpop.f32.mrf.mxu0
        %v4081 = vadd.f32 0.0, %v4080
        %4082 = vmatmul.bf16.gmra.mxu0 %v4014
        %v4083 = vpop.f32.mrf.mxu0
        %v4084 = vadd.f32 0.0, %v4083
        %v4085 = vpop.f32.mrf.mxu0
        %v4086 = vadd.f32 0.0, %v4085
        %4087 = vmatmul.bf16.gmra.mxu0 %v4017
        %v4088 = vpop.f32.mrf.mxu0
        %v4089 = vadd.f32 0.0, %v4088
        %v4090 = vpop.f32.mrf.mxu0
        %v4091 = vadd.f32 0.0, %v4090
        %4092 = vmatmul.bf16.gmra.mxu0 %v4020
        %v4093 = vpop.f32.mrf.mxu0
        %v4094 = vadd.f32 0.0, %v4093
        %v4095 = vpop.f32.mrf.mxu0
        %v4096 = vadd.f32 0.0, %v4095
        %4097 = vmatmul.bf16.gmra.mxu0 %v4023
        %v4098 = vpop.f32.mrf.mxu0
        %v4099 = vadd.f32 0.0, %v4098
        %v4100 = vpop.f32.mrf.mxu0
        %v4101 = vadd.f32 0.0, %v4100
        %4102 = vmatmul.bf16.gmra.mxu0 %v4026
        %v4103 = vpop.f32.mrf.mxu0
        %v4104 = vadd.f32 0.0, %v4103
        %v4105 = vpop.f32.mrf.mxu0
        %v4106 = vadd.f32 0.0, %v4105
        %4107 = vmatmul.bf16.gmra.mxu0 %v4029
        %v4108 = vpop.f32.mrf.mxu0
        %v4109 = vadd.f32 0.0, %v4108
        %v4110 = vpop.f32.mrf.mxu0
        %v4111 = vadd.f32 0.0, %v4110
        %4112 = vmatmul.bf16.gmra.mxu0 %v4032
        %v4113 = vpop.f32.mrf.mxu0
        %v4114 = vadd.f32 0.0, %v4113
        %v4115 = vpop.f32.mrf.mxu0
        %v4116 = vadd.f32 0.0, %v4115
        %4117 = vmatmul.bf16.gmra.mxu0 %v4035
        %v4118 = vpop.f32.mrf.mxu0
        %v4119 = vadd.f32 0.0, %v4118
        %v4120 = vpop.f32.mrf.mxu0
        %v4121 = vadd.f32 0.0, %v4120
        %4122 = vmatmul.bf16.gmra.mxu0 %v4038
        %v4123 = vpop.f32.mrf.mxu0
        %v4124 = vadd.f32 0.0, %v4123
        %v4125 = vpop.f32.mrf.mxu0
        %v4126 = vadd.f32 0.0, %v4125
        %4127 = vmatmul.bf16.gmra.mxu0 %v4041
        %v4128 = vpop.f32.mrf.mxu0
        %v4129 = vadd.f32 0.0, %v4128
        %v4130 = vpop.f32.mrf.mxu0
        %v4131 = vadd.f32 0.0, %v4130
        %4132 = vmatmul.bf16.gmra.mxu0 %v4044
        %v4133 = vpop.f32.mrf.mxu0
        %v4134 = vadd.f32 0.0, %v4133
        %v4135 = vpop.f32.mrf.mxu0
        %v4136 = vadd.f32 0.0, %v4135
        %4137 = vdwg.mxu0
        %v4138 = vadd.f32 %v3740, %v4059
        %v4139 = vadd.f32 %v3741, %v4061
        %v4140 = vadd.f32 %v3742, %v4064
        %v4141 = vadd.f32 %v3743, %v4066
        %v4142 = vadd.f32 %v3744, %v4069
        %v4143 = vadd.f32 %v3745, %v4071
        %v4144 = vadd.f32 %v3746, %v4074
        %v4145 = vadd.f32 %v3747, %v4076
        %v4146 = vadd.f32 %v3748, %v4079
        %v4147 = vadd.f32 %v3749, %v4081
        %v4148 = vadd.f32 %v3750, %v4084
        %v4149 = vadd.f32 %v3751, %v4086
        %v4150 = vadd.f32 %v3752, %v4089
        %v4151 = vadd.f32 %v3753, %v4091
        %v4152 = vadd.f32 %v3754, %v4094
        %v4153 = vadd.f32 %v3755, %v4096
        %v4154 = vadd.f32 %v3756, %v4099
        %v4155 = vadd.f32 %v3757, %v4101
        %v4156 = vadd.f32 %v3758, %v4104
        %v4157 = vadd.f32 %v3759, %v4106
        %v4158 = vadd.f32 %v3760, %v4109
        %v4159 = vadd.f32 %v3761, %v4111
        %v4160 = vadd.f32 %v3762, %v4114
        %v4161 = vadd.f32 %v3763, %v4116
        %v4162 = vadd.f32 %v3764, %v4119
        %v4163 = vadd.f32 %v3765, %v4121
        %v4164 = vadd.f32 %v3766, %v4124
        %v4165 = vadd.f32 %v3767, %v4126
        %v4166 = vadd.f32 %v3768, %v4129
        %v4167 = vadd.f32 %v3769, %v4131
        %v4168 = vadd.f32 %v3770, %v4134
        %v4169 = vadd.f32 %v3771, %v4136
        %v4170 = vld [vmem:[%s2] sm:$0x1]
        %v4172 = vperm.slane %v4170, 0
        %v4174 = vadd.f32 %v4138, %v4172
        %v4175 = vadd.f32 %v4139, %v4172
        %v4176 = vadd.f32 %v4140, %v4172
        %v4177 = vadd.f32 %v4141, %v4172
        %v4178 = vadd.f32 %v4142, %v4172
        %v4179 = vadd.f32 %v4143, %v4172
        %v4180 = vadd.f32 %v4144, %v4172
        %v4181 = vadd.f32 %v4145, %v4172
        %v4182 = vadd.f32 %v4146, %v4172
        %v4183 = vadd.f32 %v4147, %v4172
        %v4184 = vadd.f32 %v4148, %v4172
        %v4185 = vadd.f32 %v4149, %v4172
        %v4186 = vadd.f32 %v4150, %v4172
        %v4187 = vadd.f32 %v4151, %v4172
        %v4188 = vadd.f32 %v4152, %v4172
        %v4189 = vadd.f32 %v4153, %v4172
        %v4190 = vadd.f32 %v4154, %v4172
        %v4191 = vadd.f32 %v4155, %v4172
        %v4192 = vadd.f32 %v4156, %v4172
        %v4193 = vadd.f32 %v4157, %v4172
        %v4194 = vadd.f32 %v4158, %v4172
        %v4195 = vadd.f32 %v4159, %v4172
        %v4196 = vadd.f32 %v4160, %v4172
        %v4197 = vadd.f32 %v4161, %v4172
        %v4198 = vadd.f32 %v4162, %v4172
        %v4199 = vadd.f32 %v4163, %v4172
        %v4200 = vadd.f32 %v4164, %v4172
        %v4201 = vadd.f32 %v4165, %v4172
        %v4202 = vadd.f32 %v4166, %v4172
        %v4203 = vadd.f32 %v4167, %v4172
        %v4204 = vadd.f32 %v4168, %v4172
        %v4205 = vadd.f32 %v4169, %v4172
        %v4206 = vmax.f32 %v4174, 0.0
        %v4207 = vmax.f32 %v4175, 0.0
        %v4208 = vmax.f32 %v4176, 0.0
        %v4209 = vmax.f32 %v4177, 0.0
        %v4210 = vmax.f32 %v4178, 0.0
        %v4211 = vmax.f32 %v4179, 0.0
        %v4212 = vmax.f32 %v4180, 0.0
        %v4213 = vmax.f32 %v4181, 0.0
        %v4214 = vmax.f32 %v4182, 0.0
        %v4215 = vmax.f32 %v4183, 0.0
        %v4216 = vmax.f32 %v4184, 0.0
        %v4217 = vmax.f32 %v4185, 0.0
        %v4218 = vmax.f32 %v4186, 0.0
        %v4219 = vmax.f32 %v4187, 0.0
        %v4220 = vmax.f32 %v4188, 0.0
        %v4221 = vmax.f32 %v4189, 0.0
        %v4222 = vmax.f32 %v4190, 0.0
        %v4223 = vmax.f32 %v4191, 0.0
        %v4224 = vmax.f32 %v4192, 0.0
        %v4225 = vmax.f32 %v4193, 0.0
        %v4226 = vmax.f32 %v4194, 0.0
        %v4227 = vmax.f32 %v4195, 0.0
        %v4228 = vmax.f32 %v4196, 0.0
        %v4229 = vmax.f32 %v4197, 0.0
        %v4230 = vmax.f32 %v4198, 0.0
        %v4231 = vmax.f32 %v4199, 0.0
        %v4232 = vmax.f32 %v4200, 0.0
        %v4233 = vmax.f32 %v4201, 0.0
        %v4234 = vmax.f32 %v4202, 0.0
        %v4235 = vmax.f32 %v4203, 0.0
        %v4236 = vmax.f32 %v4204, 0.0
        %v4237 = vmax.f32 %v4205, 0.0
        %v4238 = vadd.f32 %v4206, %v4207
        %v4239 = vadd.f32 %v4238, %v4208
        %v4240 = vadd.f32 %v4239, %v4209
        %v4241 = vadd.f32 %v4240, %v4210
        %v4242 = vadd.f32 %v4241, %v4211
        %v4243 = vadd.f32 %v4242, %v4212
        %v4244 = vadd.f32 %v4243, %v4213
        %v4245 = vadd.f32 %v4244, %v4214
        %v4246 = vadd.f32 %v4245, %v4215
        %v4247 = vadd.f32 %v4246, %v4216
        %v4248 = vadd.f32 %v4247, %v4217
        %v4249 = vadd.f32 %v4248, %v4218
        %v4250 = vadd.f32 %v4249, %v4219
        %v4251 = vadd.f32 %v4250, %v4220
        %v4252 = vadd.f32 %v4251, %v4221
        %v4253 = vadd.f32 %v4252, %v4222
        %v4254 = vadd.f32 %v4253, %v4223
        %v4255 = vadd.f32 %v4254, %v4224
        %v4256 = vadd.f32 %v4255, %v4225
        %v4257 = vadd.f32 %v4256, %v4226
        %v4258 = vadd.f32 %v4257, %v4227
        %v4259 = vadd.f32 %v4258, %v4228
        %v4260 = vadd.f32 %v4259, %v4229
        %v4261 = vadd.f32 %v4260, %v4230
        %v4262 = vadd.f32 %v4261, %v4231
        %v4263 = vadd.f32 %v4262, %v4232
        %v4264 = vadd.f32 %v4263, %v4233
        %v4265 = vadd.f32 %v4264, %v4234
        %v4266 = vadd.f32 %v4265, %v4235
        %v4267 = vadd.f32 %v4266, %v4236
        %v4268 = vadd.f32 %v4267, %v4237
        %v4269 = vrot.slane %v4268, 4
        %v4270 = vadd.f32 %v4268, %v4269
        %v4271 = vrot.slane %v4270, 2
        %v4272 = vadd.f32 %v4270, %v4271
        %v4273 = vrot.slane %v4272, 1
        %v4274 = vadd.f32 %v4272, %v4273
        %v4275 = vmul.f32 %v4274, 0.00390625
        %4276 = vst [vmem:[%s257] sm:$0x1] %v4275
        %v4277 = vpack.c.bf16 %v4275, %v4275
        %v4278 = vld [vmem:[%s3] sm:$0xf]
        %v4279 = vld [vmem:[%s3 + $0x4] sm:$0xf]
        %v4280 = vld [vmem:[%s3 + $0x8] sm:$0xf]
        %v4281 = vld [vmem:[%s3 + $0xc] sm:$0xf]
        %v4282 = vld [vmem:[%s3 + $0x10] sm:$0xf]
        %v4283 = vld [vmem:[%s3 + $0x14] sm:$0xf]
        %v4284 = vld [vmem:[%s3 + $0x18] sm:$0xf]
        %v4285 = vld [vmem:[%s3 + $0x1c] sm:$0xf]
        %v4286 = vld [vmem:[%s3 + $0x20] sm:$0xf]
        %v4287 = vld [vmem:[%s3 + $0x24] sm:$0xf]
        %v4288 = vld [vmem:[%s3 + $0x28] sm:$0xf]
        %v4289 = vld [vmem:[%s3 + $0x2c] sm:$0xf]
        %v4290 = vld [vmem:[%s3 + $0x30] sm:$0xf]
        %v4291 = vld [vmem:[%s3 + $0x34] sm:$0xf]
        %v4292 = vld [vmem:[%s3 + $0x38] sm:$0xf]
        %v4293 = vld [vmem:[%s3 + $0x3c] sm:$0xf]
        %v4294 = vld [vmem:[%s4] sm:$0x1]
        %v4311 = vunpack.c.l.b16 %v4278
        %v4312 = vunpack.c.l.b16 %v4279
        %v4313 = vunpack.c.l.b16 %v4280
        %v4314 = vunpack.c.l.b16 %v4281
        %v4315 = vunpack.c.l.b16 %v4282
        %v4316 = vunpack.c.l.b16 %v4283
        %v4317 = vunpack.c.l.b16 %v4284
        %v4318 = vunpack.c.l.b16 %v4285
        %v4319 = vunpack.c.l.b16 %v4286
        %v4320 = vunpack.c.l.b16 %v4287
        %v4321 = vunpack.c.l.b16 %v4288
        %v4322 = vunpack.c.l.b16 %v4289
        %v4323 = vunpack.c.l.b16 %v4290
        %v4324 = vunpack.c.l.b16 %v4291
        %v4325 = vunpack.c.l.b16 %v4292
        %v4326 = vunpack.c.l.b16 %v4293
        %v4327 = vpack.c.b16 %v4312, %v4311
        %v4328 = vpack.c.b16 %v4314, %v4313
        %v4329 = vpack.c.b16 %v4316, %v4315
        %v4330 = vpack.c.b16 %v4318, %v4317
        %v4331 = vpack.c.b16 %v4320, %v4319
        %v4332 = vpack.c.b16 %v4322, %v4321
        %v4333 = vpack.c.b16 %v4324, %v4323
        %v4334 = vpack.c.b16 %v4326, %v4325
        %4343 = vmatpush.bf16.msra.mxu0 %v4334
        %4344 = vmatpush.bf16.msra.mxu0 %v4333
        %4345 = vmatpush.bf16.msra.mxu0 %v4332
        %4346 = vmatpush.bf16.msra.mxu0 %v4331
        %4347 = vmatpush.bf16.msra.mxu0 %v4330
        %4348 = vmatpush.bf16.msra.mxu0 %v4329
        %4349 = vmatpush.bf16.msra.mxu0 %v4328
        %4350 = vmatpush.bf16.msra.mxu0 %v4327
        %4351 = vmatmul.bf16.gmra.mxu0 %v4277
        %v4352 = vpop.f32.mrf.mxu0
        %v4353 = vadd.f32 %v4294, %v4352
        %v4354 = vpop.f32.mrf.mxu0
        %4355 = vdwg.mxu0
        %4356 = vst [vmem:[%s244] sm:$0x1] %v4353
        %s4357 = sand.u32 %s139, 1
        %s4358 = scalar_lea.sflag [#allocation3], %s4357
        %s4359 = sand.u32 %s139, 1
        %s4360 = scalar_lea.vmem [#allocation2], %s4359
        %p4361 = scmp.lt.s32.totalorder %s21, 1
        %s4362 = scalar_select %p4361, %s21, 1
        %s4363 = scalar_lea.vmem %s6, %s4362
        // Predicated region
        $region41: #{_backbone_forward_impl.1} parent=39 // pred_check
          %p4364 = pneg %p149
        $region42: #{_backbone_forward_impl.1} parent=39 // pred_check_branch
          %4366 = sbr.rel (%p4364) target = $region44
        $region43: #{_backbone_forward_impl.1} parent=39 // pred_region
          %4368 = vsyncadd %s4358, 0
          %s4369 = scalar_lea.hbm %s5, %s21
          %s4371 = sshll.u32 %s4360, 4
          %s4372 = int_to_ptr.vmem [resolvable:$true] %s4371
          %s4373 = sshll.u32 %s4369, 4
          %s4374 = int_to_ptr.hbm [resolvable:$true] %s4373
          %4376 = dma.vmem_to_hbm [thread:$0]  %s4372, 16, %s4374, %s4358
        $region44: #{_backbone_forward_impl.1} parent=39 // pred_fallthru
          _
        // Predicated region
        $region45: #{_backbone_forward_impl.1} parent=39 // pred_check
          %p4377 = pneg %p175
        $region46: #{_backbone_forward_impl.1} parent=39 // pred_check_branch
          %4379 = sbr.rel (%p4377) target = $region48
        $region47: #{_backbone_forward_impl.1} parent=39 // pred_region
          _
        $region48: #{_backbone_forward_impl.1} parent=39 // pred_fallthru
          _
      $region40: #{_backbone_forward_impl.1} parent=5 // pred_fallthru
        _
      %p4380 = scmp.le.s32.totalorder 2, %s16
      // Predicated region
      $region49: #{_backbone_forward_impl.1} parent=5 // pred_check
        %p4381 = pneg %p4380
      $region50: #{_backbone_forward_impl.1} parent=5 // pred_check_branch
        %4383 = sbr.rel (%p4381) target = $region52
      $region51: #{_backbone_forward_impl.1} parent=5 // pred_region
        %s4384 = ssub.s32 %s16, 2
        // Predicated region
        $region53: #{_backbone_forward_impl.1} parent=51 // pred_check
          %p4385 = pneg %p155
        $region54: #{_backbone_forward_impl.1} parent=51 // pred_check_branch
          %4387 = sbr.rel (%p4385) target = $region56
        $region55: #{_backbone_forward_impl.1} parent=51 // pred_region
          %s4388 = sand.u32 %s140, 1
          %s4389 = scalar_lea.sflag [#allocation3], %s4388
          %s4390 = sand.u32 %s140, 1
          %s4391 = scalar_lea.vmem [#allocation2], %s4390
          %4393 = dma.done %s4389, 16
        $region56: #{_backbone_forward_impl.1} parent=51 // pred_fallthru
          _
        // Predicated region
        $region57: #{_backbone_forward_impl.1} parent=51 // pred_check
          %p4394 = pneg %p181
        $region58: #{_backbone_forward_impl.1} parent=51 // pred_check_branch
          %4396 = sbr.rel (%p4394) target = $region60
        $region59: #{_backbone_forward_impl.1} parent=51 // pred_region
          %p4397 = scmp.lt.s32.totalorder %s22, 1
          %s4398 = scalar_select %p4397, %s22, 1
          %s4399 = scalar_lea.vmem %s6, %s4398
        $region60: #{_backbone_forward_impl.1} parent=51 // pred_fallthru
          _
      $region52: #{_backbone_forward_impl.1} parent=5 // pred_fallthru
        _
    $region6: #{_backbone_forward_impl.1} parent=1 // loop_footer
      %s20 = sadd.s32 1, %s16
    $region7: #{_backbone_forward_impl.1} parent=1 // loop_footer_branch
      %15 = sbr.rel target = $region3
    $region8: #{_backbone_forward_impl.1} parent=1 // loop_exit
      _
    %4400 = vsyncpa [#allocation3], 1
    %s4401 = scalar_lea.sflag [#allocation3], 1
    %4402 = vsyncpa %s4401, 1

</llo_original>
